<compile_context>
chip_gen: v6e
topology: v6e:2x2x1
jax: 0.10.0
libtpu: 0.0.40
codegen_flags: <defaults>
</compile_context>

<pallas_src>
import functools

import jax
import jax.numpy as jnp
from jax import lax
from jax.experimental import pallas as pl
from jax.experimental.pallas import tpu as pltpu

_PREC = lax.Precision.HIGHEST
_SIGN_FIX = 0x7FFFFFFF  # xor mask mapping f32 bits -> order-preserving int32 key


def _mha_topk_kernel(x_ref, wqkv_ref, bqkv_ref, qmask_ref, m_qk_ref,
                     seg_kg_ref, seg_vg_ref, w_eff_ref, bo_ref, out_ref,
                     *, S, H, D, TOPK):
    HD = H * D
    N = H * S

    x = x_ref[0]                                                     # (S, Din)

    # ---- fused Q/K/V projection: one MXU pass, 3*HD (=96 here) lanes -------
    qkv = jnp.dot(x, wqkv_ref[...], preferred_element_type=jnp.float32,
                  precision=_PREC) + bqkv_ref[...]                   # (S, 3*HD)

    # ---- head-major row tiling (row n = h*S + s holds qkv[s]) --------------
    # Pure sublane concat; everything below stays at the packed 3*HD lane
    # width, so no per-head / per-q/k/v lane slices are needed.
    t = jnp.concatenate([qkv] * H, axis=0)                           # (N, 3*HD)

    # ---- cross-head scores, fully vectorized --------------------------------
    # a:      keep only the Q lanes of the row's own head h = n // S
    # q_rep:  tile that D-vector across every K lane-block (constant matmul)
    # scores: segmented lane reduction over each K block  (constant matmul)
    a = t * qmask_ref[...]                                           # (N, 3*HD)
    q_rep = jnp.dot(a, m_qk_ref[...], preferred_element_type=jnp.float32,
                    precision=_PREC)                                 # (N, 3*HD)
    scale = jnp.float32(1.0 / (D ** 0.5))
    scores = jnp.dot(q_rep * t, seg_kg_ref[...],
                     preferred_element_type=jnp.float32,
                     precision=_PREC) * scale                        # (N, H)

    m = jnp.max(scores, axis=-1, keepdims=True)                      # (N, 1)
    e = jnp.exp(scores - m)                                          # (N, H)
    p = e / jnp.sum(e, axis=-1, keepdims=True)                       # exact divide

    # ---- attention-weighted sum + output projection, fused ------------------
    # p broadcast onto the V lane-blocks (constant matmul), elementwise with V;
    # the segmented d-reduction is folded into w_eff (= seg_d @ wo), so the
    # (N, D) sub-128-lane "attended" intermediate never materializes.
    p_rep = jnp.dot(p, seg_vg_ref[...], preferred_element_type=jnp.float32,
                    precision=_PREC)                                 # (N, 3*HD)
    out = jnp.dot(p_rep * t, w_eff_ref[...],
                  preferred_element_type=jnp.float32,
                  precision=_PREC) + bo_ref[...]                     # (N, HD)

    # ---- top-k values per column, all heads at once --------------------------
    row_ids = lax.broadcasted_iota(jnp.int32, (N, HD), 0)
    row_bits = max(1, (N - 1).bit_length())
    cols = []
    if row_bits <= 8:
        # Packed sortable key: value bits (order-preserving int32 map) in the
        # high bits, inverted row id in the low bits.  Keys are unique per
        # column, so each iteration is ONE sublane max + one select (instead
        # of max -> first-occurrence-min -> mask).  Reported values lose the
        # low `row_bits` mantissa bits (<= 2^-18 relative error at N = 32).
        bits = pltpu.bitcast(out, jnp.int32)
        key = jnp.where(bits >= 0, bits, bits ^ jnp.int32(_SIGN_FIX))
        low = jnp.int32((1 << row_bits) - 1)
        packed = (key & ~low) | (jnp.int32(N - 1) - row_ids)
        sentinel = jnp.int32(jnp.iinfo(jnp.int32).min)
        for _ in range(TOPK):                                        # static, small
            pmax = jnp.max(packed, axis=0, keepdims=True)            # (1, HD)
            cols.append(pmax)
            packed = jnp.where(packed == pmax, sentinel, packed)
        ptop = jnp.concatenate(cols, axis=1) & ~low                  # (1, TOPK*HD)
        btop = jnp.where(ptop >= 0, ptop, ptop ^ jnp.int32(_SIGN_FIX))
        topk_vals = pltpu.bitcast(btop, jnp.float32)
    else:
        # Exact fallback for large N: max + first-occurrence mask per iteration.
        vals = out
        for _ in range(TOPK):
            cur = jnp.max(vals, axis=0, keepdims=True)               # (1, HD)
            cols.append(cur)
            first = jnp.min(jnp.where(vals == cur, row_ids, N), axis=0,
                            keepdims=True)
            vals = jnp.where(row_ids == first, -jnp.inf, vals)
        topk_vals = jnp.concatenate(cols, axis=1)                    # (1, TOPK*HD)

    # Lane-dense store: (1, 1, TOPK*HD)  (= 128 lanes for the default sizes).
    out_ref[...] = topk_vals.reshape(1, 1, TOPK * HD)


def _build_constants(S, H, D):
    """Tiny 0/1 f32 matrices feeding the in-kernel segment matmuls (built once
    in the wrapper so the kernel prologue has no iota/compare/convert chain)."""
    HD, W, N = H * D, 3 * H * D, H * S
    f32 = jnp.float32
    n = jnp.arange(N)[:, None]
    i = jnp.arange(W)[:, None]
    j = jnp.arange(W)[None, :]
    g_row = jnp.arange(H)[:, None]
    g_col = jnp.arange(H)[None, :]
    # qmask[n, j]  = 1 iff j is a Q lane of head (n // S)
    qmask = ((j < HD) & ((j // D) == (n // S))).astype(f32)             # (N, W)
    # m_qk[i, j]   = 1 iff Q lane i and K lane j carry the same feature d
    m_qk = ((i < HD) & (j >= HD) & (j < 2 * HD)
            & ((i % D) == (j % D))).astype(f32)                         # (W, W)
    # seg_kg[i, g] = 1 iff K lane i belongs to head g   (lane-block reduce)
    seg_kg = ((i >= HD) & (i < 2 * HD)
              & (((i - HD) // D) == g_col)).astype(f32)                 # (W, H)
    # seg_vg[g, j] = 1 iff V lane j belongs to head g   (lane-block broadcast)
    seg_vg = ((j >= 2 * HD)
              & (((j - 2 * HD) // D) == g_row)).astype(f32)             # (H, W)
    return qmask, m_qk, seg_kg, seg_vg


def multihead_attention_topk_batched(xs, params, *, num_heads, output_dim, top_k):
    """xs: (B, S, Din).  Returns (B, H*top_k, D).  Grid over B ("parallel")."""
    B, S, Din = xs.shape
    top_k = S if S < top_k else top_k
    H, D = num_heads, output_dim
    HD = H * D

    # Pack Q/K/V weights & biases and precompute the constant matrices once.
    wqkv = jnp.concatenate([params["wq"], params["wk"], params["wv"]], axis=1)
    bqkv = jnp.concatenate([params["bq"], params["bk"], params["bv"]], axis=1)
    qmask, m_qk, seg_kg, seg_vg = _build_constants(S, H, D)
    # w_eff[2*HD + g*D + d, c] = wo[d, c]  (folds the per-head d-reduction of
    # the attention output into the output-projection weight).
    w_eff = jnp.concatenate(
        [jnp.zeros((2 * HD, HD), jnp.float32), jnp.tile(params["wo"], (H, 1))],
        axis=0)

    kernel = functools.partial(_mha_topk_kernel, S=S, H=H, D=D, TOPK=top_k)

    def _full(arr):  # whole (tiny) array resident in VMEM, same block for all b
        return pl.BlockSpec(arr.shape, lambda b: (0,) * arr.ndim)

    weights = (wqkv, bqkv, qmask, m_qk, seg_kg, seg_vg, w_eff, params["bo"])
    out = pl.pallas_call(
        kernel,
        out_shape=jax.ShapeDtypeStruct((B, 1, top_k * HD), jnp.float32),
        grid=(B,),
        in_specs=[pl.BlockSpec((1, S, Din), lambda b: (b, 0, 0))]
                 + [_full(w) for w in weights],
        out_specs=pl.BlockSpec((1, 1, top_k * HD), lambda b: (b, 0, 0)),
        compiler_params=pltpu.CompilerParams(
            dimension_semantics=("parallel",)),  # shards batch over both TCs on v7x
    )(xs, *weights)

    # (B, 1, top_k*HD) -> (B, top_k, H, D) -> (B, H, top_k, D) -> (B, H*top_k, D)
    return (out.reshape(B, top_k, H, D)
               .transpose(0, 2, 1, 3)
               .reshape(B, H * top_k, D))


def multihead_attention_topk(x, params, *, num_heads, output_dim, top_k):
    """Module-faithful entry: x is a single (seq_len, input_dim) sequence."""
    return multihead_attention_topk_batched(
        x[None], params, num_heads=num_heads, output_dim=output_dim,
        top_k=top_k)[0]


def reference_jax(x, params, *, num_heads, output_dim, top_k):
    """Plain-JAX reproduction of the PyTorch forward (for checking)."""
    S, _ = x.shape
    top_k = S if S < top_k else top_k
    H, D = num_heads, output_dim
    q = (x @ params["wq"] + params["bq"]).reshape(S, H, D)
    k = (x @ params["wk"] + params["bk"]).reshape(S, H, D)
    v = (x @ params["wv"] + params["bv"]).reshape(S, H, D)
    scores = jnp.einsum("shd,sgd->shg", q, k) / (D ** 0.5)
    p = jax.nn.softmax(scores, axis=-1)
    att = jnp.einsum("shg,sgd->shd", p, v)
    attended = jnp.transpose(att, (1, 0, 2)).reshape(H * S, D)
    out = attended @ params["wo"] + params["bo"]
    outs = []
    for i in range(H):
        head = out[:, i * D:(i + 1) * D]
        outs.append(-jnp.sort(-head, axis=0)[:top_k])                # values only
    return jnp.concatenate(outs, axis=0)


def init_params(key, input_dim, output_dim, num_heads):
    out_feat = output_dim * num_heads
    keys = jax.random.split(key, 8)

    def lin(kw, kb, fan_in, fan_out):
        bound = 1.0 / (fan_in ** 0.5)
        w = jax.random.uniform(kw, (fan_in, fan_out), jnp.float32, -bound, bound)
        b = jax.random.uniform(kb, (1, fan_out), jnp.float32, -bound, bound)
        return w, b

    wq, bq = lin(keys[0], keys[1], input_dim, out_feat)
    wk, bk = lin(keys[2], keys[3], input_dim, out_feat)
    wv, bv = lin(keys[4], keys[5], input_dim, out_feat)
    wo, bo = lin(keys[6], keys[7], output_dim, out_feat)
    return dict(wq=wq, bq=bq, wk=wk, bk=bk, wv=wv, bv=bv, wo=wo, bo=bo)


if __name__ == "__main__":
    jax.config.update("jax_default_matmul_precision", "highest")

    seq_len, input_dim = 8, 16
    output_dim, num_heads, top_k = 8, 4, 4

    key = jax.random.PRNGKey(0)
    kx, kp, kb = jax.random.split(key, 3)
    x = jax.random.normal(kx, (seq_len, input_dim), jnp.float32)
    params = init_params(kp, input_dim, output_dim, num_heads)

    # --- module-faithful single-sequence call -------------------------------
    out = multihead_attention_topk(
        x, params, num_heads=num_heads, output_dim=output_dim, top_k=top_k)
    out = jax.block_until_ready(out)

    ref = reference_jax(
        x, params, num_heads=num_heads, output_dim=output_dim, top_k=top_k)
    ref = jax.block_until_ready(ref)

    assert out.shape == (num_heads * min(top_k, seq_len), output_dim), out.shape
    assert jnp.allclose(out, ref, atol=1e-3, rtol=1e-3), \
        float(jnp.max(jnp.abs(out - ref)))

    # --- batched call: grid over sequences, "parallel" batch axis -----------
    batch = 4
    xb = jax.random.normal(kb, (batch, seq_len, input_dim), jnp.float32)
    outb = jax.block_until_ready(multihead_attention_topk_batched(
        xb, params, num_heads=num_heads, output_dim=output_dim, top_k=top_k))
    for b in range(batch):
        refb = reference_jax(
            xb[b], params, num_heads=num_heads, output_dim=output_dim, top_k=top_k)
        assert jnp.allclose(outb[b], refb, atol=1e-3, rtol=1e-3), \
            (b, float(jnp.max(jnp.abs(outb[b] - refb))))

    print("KERNEL_OK")
</pallas_src>

<mosaic_0001>
module attributes {stable_mosaic.version = 11 : i64} {
  func.func @_mha_topk_kernel(%arg0: i32, %arg1: memref<1x8x16xf32, #tpu.memory_space<vmem>>, %arg2: memref<16x96xf32, #tpu.memory_space<vmem>>, %arg3: memref<1x96xf32, #tpu.memory_space<vmem>>, %arg4: memref<32x96xf32, #tpu.memory_space<vmem>>, %arg5: memref<96x96xf32, #tpu.memory_space<vmem>>, %arg6: memref<96x4xf32, #tpu.memory_space<vmem>>, %arg7: memref<4x96xf32, #tpu.memory_space<vmem>>, %arg8: memref<96x32xf32, #tpu.memory_space<vmem>>, %arg9: memref<1x32xf32, #tpu.memory_space<vmem>>, %arg10: memref<1x1x128xf32, #tpu.memory_space<vmem>>) attributes {dimension_semantics = [#tpu.dimension_semantics<parallel>], iteration_bounds = array<i64: 1>, scalar_prefetch = 0 : i64, scratch_operands = 0 : i64, tpu.core_type = #tpu.core_type<tc>, window_params = [{transform_indices = @transform_0, window_bounds = array<i64: 1, 8, 16>}, {pipeline_mode = #tpu.pipeline_mode<synchronous>, transform_indices = @transform_1, window_bounds = array<i64: 16, 96>}, {pipeline_mode = #tpu.pipeline_mode<synchronous>, transform_indices = @transform_2, window_bounds = array<i64: 1, 96>}, {pipeline_mode = #tpu.pipeline_mode<synchronous>, transform_indices = @transform_3, window_bounds = array<i64: 32, 96>}, {pipeline_mode = #tpu.pipeline_mode<synchronous>, transform_indices = @transform_4, window_bounds = array<i64: 96, 96>}, {pipeline_mode = #tpu.pipeline_mode<synchronous>, transform_indices = @transform_5, window_bounds = array<i64: 96, 4>}, {pipeline_mode = #tpu.pipeline_mode<synchronous>, transform_indices = @transform_6, window_bounds = array<i64: 4, 96>}, {pipeline_mode = #tpu.pipeline_mode<synchronous>, transform_indices = @transform_7, window_bounds = array<i64: 96, 32>}, {pipeline_mode = #tpu.pipeline_mode<synchronous>, transform_indices = @transform_8, window_bounds = array<i64: 1, 32>}, {transform_indices = @transform_9, window_bounds = array<i64: 1, 1, 128>}]} {
    %c0 = arith.constant 0 : index
    %c0_0 = arith.constant 0 : index
    %c0_1 = arith.constant 0 : index
    %0 = vector.load %arg1[%c0, %c0_0, %c0_1] : memref<1x8x16xf32, #tpu.memory_space<vmem>>, vector<1x8x16xf32>
    %1 = vector.shape_cast %0 : vector<1x8x16xf32> to vector<8x16xf32>
    %c0_2 = arith.constant 0 : index
    %c0_3 = arith.constant 0 : index
    %2 = vector.load %arg2[%c0_2, %c0_3] : memref<16x96xf32, #tpu.memory_space<vmem>>, vector<16x96xf32>
    %cst = arith.constant dense<0.000000e+00> : vector<8x96xf32>
    %3 = tpu.matmul %1, %2, %cst {dimension_numbers = #tpu.dot_dimension_numbers<[1], [0], [0], [1], [0, 0, 1, 1], [], []>, precision = #tpu.contract_precision<fp32>} : vector<8x16xf32>, vector<16x96xf32>, vector<8x96xf32> -> vector<8x96xf32>
    %c0_4 = arith.constant 0 : index
    %c0_5 = arith.constant 0 : index
    %4 = vector.load %arg3[%c0_4, %c0_5] : memref<1x96xf32, #tpu.memory_space<vmem>>, vector<1x96xf32>
    %5 = vector.broadcast %4 : vector<1x96xf32> to vector<8x96xf32>
    %6 = arith.addf %3, %5 : vector<8x96xf32>
    %7 = tpu.concatenate %6, %6, %6, %6 in 0 : vector<8x96xf32>, vector<8x96xf32>, vector<8x96xf32>, vector<8x96xf32> -> vector<32x96xf32>
    %c0_6 = arith.constant 0 : index
    %c0_7 = arith.constant 0 : index
    %8 = vector.load %arg4[%c0_6, %c0_7] : memref<32x96xf32, #tpu.memory_space<vmem>>, vector<32x96xf32>
    %9 = arith.mulf %7, %8 : vector<32x96xf32>
    %c0_8 = arith.constant 0 : index
    %c0_9 = arith.constant 0 : index
    %10 = vector.load %arg5[%c0_8, %c0_9] : memref<96x96xf32, #tpu.memory_space<vmem>>, vector<96x96xf32>
    %cst_10 = arith.constant dense<0.000000e+00> : vector<32x96xf32>
    %11 = tpu.matmul %9, %10, %cst_10 {dimension_numbers = #tpu.dot_dimension_numbers<[1], [0], [0], [1], [0, 0, 1, 1], [], []>, precision = #tpu.contract_precision<fp32>} : vector<32x96xf32>, vector<96x96xf32>, vector<32x96xf32> -> vector<32x96xf32>
    %12 = arith.mulf %11, %7 : vector<32x96xf32>
    %c0_11 = arith.constant 0 : index
    %c0_12 = arith.constant 0 : index
    %13 = vector.load %arg6[%c0_11, %c0_12] : memref<96x4xf32, #tpu.memory_space<vmem>>, vector<96x4xf32>
    %cst_13 = arith.constant dense<0.000000e+00> : vector<32x4xf32>
    %14 = tpu.matmul %12, %13, %cst_13 {dimension_numbers = #tpu.dot_dimension_numbers<[1], [0], [0], [1], [0, 0, 1, 1], [], []>, precision = #tpu.contract_precision<fp32>} : vector<32x96xf32>, vector<96x4xf32>, vector<32x4xf32> -> vector<32x4xf32>
    %cst_14 = arith.constant 0.353553385 : f32
    %15 = vector.broadcast %cst_14 : f32 to vector<32x4xf32>
    %16 = arith.mulf %14, %15 : vector<32x4xf32>
    %cst_15 = arith.constant dense<0xFF800000> : vector<32xf32>
    %17 = vector.multi_reduction <maximumf>, %16, %cst_15 [1] : vector<32x4xf32> to vector<32xf32>
    %18 = vector.shape_cast %17 : vector<32xf32> to vector<32x1xf32>
    %19 = vector.broadcast %18 : vector<32x1xf32> to vector<32x4xf32>
    %20 = arith.subf %16, %19 : vector<32x4xf32>
    %21 = math.exp %20 : vector<32x4xf32>
    %cst_16 = arith.constant dense<0.000000e+00> : vector<32xf32>
    %22 = vector.multi_reduction <add>, %21, %cst_16 [1] : vector<32x4xf32> to vector<32xf32>
    %23 = vector.shape_cast %22 : vector<32xf32> to vector<32x1xf32>
    %24 = vector.broadcast %23 : vector<32x1xf32> to vector<32x4xf32>
    %25 = arith.divf %21, %24 : vector<32x4xf32>
    %c0_17 = arith.constant 0 : index
    %c0_18 = arith.constant 0 : index
    %26 = vector.load %arg7[%c0_17, %c0_18] : memref<4x96xf32, #tpu.memory_space<vmem>>, vector<4x96xf32>
    %cst_19 = arith.constant dense<0.000000e+00> : vector<32x96xf32>
    %27 = tpu.matmul %25, %26, %cst_19 {dimension_numbers = #tpu.dot_dimension_numbers<[1], [0], [0], [1], [0, 0, 1, 1], [], []>, precision = #tpu.contract_precision<fp32>} : vector<32x4xf32>, vector<4x96xf32>, vector<32x96xf32> -> vector<32x96xf32>
    %28 = arith.mulf %27, %7 : vector<32x96xf32>
    %c0_20 = arith.constant 0 : index
    %c0_21 = arith.constant 0 : index
    %29 = vector.load %arg8[%c0_20, %c0_21] : memref<96x32xf32, #tpu.memory_space<vmem>>, vector<96x32xf32>
    %cst_22 = arith.constant dense<0.000000e+00> : vector<32x32xf32>
    %30 = tpu.matmul %28, %29, %cst_22 {dimension_numbers = #tpu.dot_dimension_numbers<[1], [0], [0], [1], [0, 0, 1, 1], [], []>, precision = #tpu.contract_precision<fp32>} : vector<32x96xf32>, vector<96x32xf32>, vector<32x32xf32> -> vector<32x32xf32>
    %c0_23 = arith.constant 0 : index
    %c0_24 = arith.constant 0 : index
    %31 = vector.load %arg9[%c0_23, %c0_24] : memref<1x32xf32, #tpu.memory_space<vmem>>, vector<1x32xf32>
    %32 = vector.broadcast %31 : vector<1x32xf32> to vector<32x32xf32>
    %33 = arith.addf %30, %32 : vector<32x32xf32>
    %34 = tpu.iota {dimensions = array<i32: 0>} : vector<32x32xi32>
    %35 = tpu.bitcast %33 : vector<32x32xf32> -> vector<32x32xi32>
    %c0_i32 = arith.constant 0 : i32
    %36 = vector.broadcast %c0_i32 : i32 to vector<32x32xi32>
    %37 = arith.cmpi sge, %35, %36 : vector<32x32xi32>
    %c2147483647_i32 = arith.constant 2147483647 : i32
    %38 = vector.broadcast %c2147483647_i32 : i32 to vector<32x32xi32>
    %39 = arith.xori %35, %38 : vector<32x32xi32>
    %40 = arith.select %37, %35, %39 : vector<32x32xi1>, vector<32x32xi32>
    %c31_i32 = arith.constant 31 : i32
    %c-1_i32 = arith.constant -1 : i32
    %41 = arith.xori %c31_i32, %c-1_i32 : i32
    %42 = vector.broadcast %41 : i32 to vector<32x32xi32>
    %43 = arith.andi %40, %42 : vector<32x32xi32>
    %c31_i32_25 = arith.constant 31 : i32
    %44 = vector.broadcast %c31_i32_25 : i32 to vector<32x32xi32>
    %45 = arith.subi %44, %34 : vector<32x32xi32>
    %46 = arith.ori %43, %45 : vector<32x32xi32>
    %cst_26 = arith.constant dense<-2147483648> : vector<32xi32>
    %47 = vector.multi_reduction <maxsi>, %46, %cst_26 [0] : vector<32x32xi32> to vector<32xi32>
    %48 = vector.shape_cast %47 : vector<32xi32> to vector<1x32xi32>
    %49 = vector.broadcast %48 : vector<1x32xi32> to vector<32x32xi32>
    %50 = arith.cmpi eq, %46, %49 : vector<32x32xi32>
    %c-2147483648_i32 = arith.constant -2147483648 : i32
    %51 = vector.broadcast %c-2147483648_i32 : i32 to vector<32x32xi32>
    %52 = arith.select %50, %51, %46 : vector<32x32xi1>, vector<32x32xi32>
    %cst_27 = arith.constant dense<-2147483648> : vector<32xi32>
    %53 = vector.multi_reduction <maxsi>, %52, %cst_27 [0] : vector<32x32xi32> to vector<32xi32>
    %54 = vector.shape_cast %53 : vector<32xi32> to vector<1x32xi32>
    %55 = vector.broadcast %54 : vector<1x32xi32> to vector<32x32xi32>
    %56 = arith.cmpi eq, %52, %55 : vector<32x32xi32>
    %c-2147483648_i32_28 = arith.constant -2147483648 : i32
    %57 = vector.broadcast %c-2147483648_i32_28 : i32 to vector<32x32xi32>
    %58 = arith.select %56, %57, %52 : vector<32x32xi1>, vector<32x32xi32>
    %cst_29 = arith.constant dense<-2147483648> : vector<32xi32>
    %59 = vector.multi_reduction <maxsi>, %58, %cst_29 [0] : vector<32x32xi32> to vector<32xi32>
    %60 = vector.shape_cast %59 : vector<32xi32> to vector<1x32xi32>
    %61 = vector.broadcast %60 : vector<1x32xi32> to vector<32x32xi32>
    %62 = arith.cmpi eq, %58, %61 : vector<32x32xi32>
    %c-2147483648_i32_30 = arith.constant -2147483648 : i32
    %63 = vector.broadcast %c-2147483648_i32_30 : i32 to vector<32x32xi32>
    %64 = arith.select %62, %63, %58 : vector<32x32xi1>, vector<32x32xi32>
    %cst_31 = arith.constant dense<-2147483648> : vector<32xi32>
    %65 = vector.multi_reduction <maxsi>, %64, %cst_31 [0] : vector<32x32xi32> to vector<32xi32>
    %66 = vector.shape_cast %65 : vector<32xi32> to vector<1x32xi32>
    %67 = tpu.concatenate %48, %54, %60, %66 in 1 : vector<1x32xi32>, vector<1x32xi32>, vector<1x32xi32>, vector<1x32xi32> -> vector<1x128xi32>
    %c31_i32_32 = arith.constant 31 : i32
    %c-1_i32_33 = arith.constant -1 : i32
    %68 = arith.xori %c31_i32_32, %c-1_i32_33 : i32
    %69 = vector.broadcast %68 : i32 to vector<1x128xi32>
    %70 = arith.andi %67, %69 : vector<1x128xi32>
    %c0_i32_34 = arith.constant 0 : i32
    %71 = vector.broadcast %c0_i32_34 : i32 to vector<1x128xi32>
    %72 = arith.cmpi sge, %70, %71 : vector<1x128xi32>
    %c2147483647_i32_35 = arith.constant 2147483647 : i32
    %73 = vector.broadcast %c2147483647_i32_35 : i32 to vector<1x128xi32>
    %74 = arith.xori %70, %73 : vector<1x128xi32>
    %75 = arith.select %72, %70, %74 : vector<1x128xi1>, vector<1x128xi32>
    %76 = tpu.bitcast %75 : vector<1x128xi32> -> vector<1x128xf32>
    %77 = vector.shape_cast %76 : vector<1x128xf32> to vector<1x1x128xf32>
    %c0_36 = arith.constant 0 : index
    %c0_37 = arith.constant 0 : index
    %c0_38 = arith.constant 0 : index
    %78 = vector.load %arg10[%c0_36, %c0_37, %c0_38] : memref<1x1x128xf32, #tpu.memory_space<vmem>>, vector<1x1x128xf32>
    tpu.vector_store %arg10[%c0_36, %c0_37, %c0_38], %77 {strides = array<i32>} : memref<1x1x128xf32, #tpu.memory_space<vmem>>, vector<1x1x128xf32>,
    return
  }
  func.func @transform_0(%arg0: i32) -> (i32, i32, i32) {
    %c0_i32 = arith.constant 0 : i32
    %c0_i32_0 = arith.constant 0 : i32
    %c0_i32_1 = arith.constant 0 : i32
    return %arg0, %c0_i32, %c0_i32_0 : i32, i32, i32
  }
  func.func @transform_1(%arg0: i32) -> (i32, i32) {
    %c0_i32 = arith.constant 0 : i32
    %c0_i32_0 = arith.constant 0 : i32
    %c0_i32_1 = arith.constant 0 : i32
    return %c0_i32, %c0_i32_0 : i32, i32
  }
  func.func @transform_2(%arg0: i32) -> (i32, i32) {
    %c0_i32 = arith.constant 0 : i32
    %c0_i32_0 = arith.constant 0 : i32
    %c0_i32_1 = arith.constant 0 : i32
    return %c0_i32, %c0_i32_0 : i32, i32
  }
  func.func @transform_3(%arg0: i32) -> (i32, i32) {
    %c0_i32 = arith.constant 0 : i32
    %c0_i32_0 = arith.constant 0 : i32
    %c0_i32_1 = arith.constant 0 : i32
    return %c0_i32, %c0_i32_0 : i32, i32
  }
  func.func @transform_4(%arg0: i32) -> (i32, i32) {
    %c0_i32 = arith.constant 0 : i32
    %c0_i32_0 = arith.constant 0 : i32
    %c0_i32_1 = arith.constant 0 : i32
    return %c0_i32, %c0_i32_0 : i32, i32
  }
  func.func @transform_5(%arg0: i32) -> (i32, i32) {
    %c0_i32 = arith.constant 0 : i32
    %c0_i32_0 = arith.constant 0 : i32
    %c0_i32_1 = arith.constant 0 : i32
    return %c0_i32, %c0_i32_0 : i32, i32
  }
  func.func @transform_6(%arg0: i32) -> (i32, i32) {
    %c0_i32 = arith.constant 0 : i32
    %c0_i32_0 = arith.constant 0 : i32
    %c0_i32_1 = arith.constant 0 : i32
    return %c0_i32, %c0_i32_0 : i32, i32
  }
  func.func @transform_7(%arg0: i32) -> (i32, i32) {
    %c0_i32 = arith.constant 0 : i32
    %c0_i32_0 = arith.constant 0 : i32
    %c0_i32_1 = arith.constant 0 : i32
    return %c0_i32, %c0_i32_0 : i32, i32
  }
  func.func @transform_8(%arg0: i32) -> (i32, i32) {
    %c0_i32 = arith.constant 0 : i32
    %c0_i32_0 = arith.constant 0 : i32
    %c0_i32_1 = arith.constant 0 : i32
    return %c0_i32, %c0_i32_0 : i32, i32
  }
  func.func @transform_9(%arg0: i32) -> (i32, i32, i32) {
    %c0_i32 = arith.constant 0 : i32
    %c0_i32_0 = arith.constant 0 : i32
    %c0_i32_1 = arith.constant 0 : i32
    return %arg0, %c0_i32, %c0_i32_0 : i32, i32, i32
  }
}

</mosaic_0001>

<llo_original>
// kernel: tpu_custom_call.1
$region0: #{tpu_custom_call.1}
  #allocation0 [shape = 'u32[]', space=smem, size = 0x4, offset = 0x4, fixed_abs, tag = 'smem constant byte address 0x4 - core index']
  #allocation1 [shape = 'u32[144,128]{1,0:T(1,128)}', space=vmem, size = 0x12000, scoped, tag = 'internal scratch']
  %s0 = inlined_call_operand.vmem [shape: f32[1,8,16], index: 0, kind: input, shape index: {}]
  %s1 = inlined_call_operand.vmem [shape: f32[16,96], index: 1, kind: input, shape index: {}]
  %s2 = inlined_call_operand.vmem [shape: f32[1,96], index: 2, kind: input, shape index: {}]
  %s3 = inlined_call_operand.vmem [shape: f32[32,96], index: 3, kind: input, shape index: {}]
  %s4 = inlined_call_operand.vmem [shape: f32[96,96], index: 4, kind: input, shape index: {}]
  %s5 = inlined_call_operand.vmem [shape: f32[96,4], index: 5, kind: input, shape index: {}]
  %s6 = inlined_call_operand.vmem [shape: f32[4,96], index: 6, kind: input, shape index: {}]
  %s7 = inlined_call_operand.vmem [shape: f32[96,32], index: 7, kind: input, shape index: {}]
  %s8 = inlined_call_operand.vmem [shape: f32[1,32], index: 8, kind: input, shape index: {}]
  %s9 = inlined_call_operand.hbm [shape: f32[1,1,128], index: 9, kind: output, shape index: {}]
  %s10 = sld [smem:[#allocation0]]
  $region46: #{tpu_custom_call.1} parent=0
    _
  %s12 = ssub.s32 1, %s10
  %s13 = scalar_select 0, %s12, %s10
  $region1: #{tpu_custom_call.1} parent=0
    #allocation2 [shape = 'u8[512]{0}', space=vmem, size = 0x400, scoped, tag = 'output window, operand 0, single buffered']
    #allocation3 [shape = 's32[1]{0}', space=sflag, size = 0x4, scoped, tag = 'scoped memory for tpu_custom_call.1']
    %14 = vsyncpa [#allocation3], 0
    // Predicated region
    $region2: #{tpu_custom_call.1} parent=1 // pred_check
      _
    $region3: #{tpu_custom_call.1} parent=1 // pred_check_branch
      %16 = sbr.rel (0) target = $region5
    $region4: #{tpu_custom_call.1} parent=1 // pred_region
      _
    $region5: #{tpu_custom_call.1} parent=1 // pred_fallthru
      _
    // Predicated region
    $region6: #{tpu_custom_call.1} parent=1 // pred_check
      _
    $region7: #{tpu_custom_call.1} parent=1 // pred_check_branch
      %18 = sbr.rel (0) target = $region9
    $region8: #{tpu_custom_call.1} parent=1 // pred_region
      _
    $region9: #{tpu_custom_call.1} parent=1 // pred_fallthru
      _
    // Predicated region
    $region10: #{tpu_custom_call.1} parent=1 // pred_check
      _
    $region11: #{tpu_custom_call.1} parent=1 // pred_check_branch
      %20 = sbr.rel (0) target = $region13
    $region12: #{tpu_custom_call.1} parent=1 // pred_region
      _
    $region13: #{tpu_custom_call.1} parent=1 // pred_fallthru
      _
    // Predicated region
    $region14: #{tpu_custom_call.1} parent=1 // pred_check
      _
    $region15: #{tpu_custom_call.1} parent=1 // pred_check_branch
      %22 = sbr.rel (0) target = $region17
    $region16: #{tpu_custom_call.1} parent=1 // pred_region
      _
    $region17: #{tpu_custom_call.1} parent=1 // pred_fallthru
      _
    // Predicated region
    $region18: #{tpu_custom_call.1} parent=1 // pred_check
      _
    $region19: #{tpu_custom_call.1} parent=1 // pred_check_branch
      %24 = sbr.rel (0) target = $region21
    $region20: #{tpu_custom_call.1} parent=1 // pred_region
      _
    $region21: #{tpu_custom_call.1} parent=1 // pred_fallthru
      _
    // Predicated region
    $region22: #{tpu_custom_call.1} parent=1 // pred_check
      _
    $region23: #{tpu_custom_call.1} parent=1 // pred_check_branch
      %26 = sbr.rel (0) target = $region25
    $region24: #{tpu_custom_call.1} parent=1 // pred_region
      _
    $region25: #{tpu_custom_call.1} parent=1 // pred_fallthru
      _
    // Predicated region
    $region26: #{tpu_custom_call.1} parent=1 // pred_check
      _
    $region27: #{tpu_custom_call.1} parent=1 // pred_check_branch
      %28 = sbr.rel (0) target = $region29
    $region28: #{tpu_custom_call.1} parent=1 // pred_region
      _
    $region29: #{tpu_custom_call.1} parent=1 // pred_fallthru
      _
    // Predicated region
    $region30: #{tpu_custom_call.1} parent=1 // pred_check
      _
    $region31: #{tpu_custom_call.1} parent=1 // pred_check_branch
      %30 = sbr.rel (0) target = $region33
    $region32: #{tpu_custom_call.1} parent=1 // pred_region
      _
    $region33: #{tpu_custom_call.1} parent=1 // pred_fallthru
      _
    // Predicated region
    $region34: #{tpu_custom_call.1} parent=1 // pred_check
      _
    $region35: #{tpu_custom_call.1} parent=1 // pred_check_branch
      %32 = sbr.rel (0) target = $region37
    $region36: #{tpu_custom_call.1} parent=1 // pred_region
      _
    $region37: #{tpu_custom_call.1} parent=1 // pred_fallthru
      _
    %v33 = vld [vmem:[%s0] sm:$0xff]
    %v34 = vld [vmem:[%s1] sm:$0xff]
    %v35 = vld [vmem:[%s1 + $0x8] sm:$0xff]
    %v36 = vld [vmem:[%s2] sm:$0x1]
    %v38 = vlaneseq
    %v39 = vshrl.u32 %v38, 7
    %v40 = vsub.s32 0, %v39
    %v41 = vrot.slane %v36, %v40
    %vm43 = vcmask 130048
    %v45 = vsel %vm43, %v33, 0
    %47 = vmatprep.subr.mxu0 0.0
    %48 = vmatpush1.msra.mxu0 0.0
    %49 = vmatprep.subr.mxu0 0.0
    %50 = vmatpush1.msra.mxu0 0.0
    %51 = vmatprep.subr.mxu0 0.0
    %52 = vmatpush1.msra.mxu0 0.0
    %53 = vmatprep.subr.mxu0 0.0
    %54 = vmatpush1.msra.mxu0 0.0
    %55 = vmatprep.subr.mxu0 0.0
    %56 = vmatpush1.msra.mxu0 0.0
    %57 = vmatprep.subr.mxu0 0.0
    %58 = vmatpush1.msra.mxu0 0.0
    %59 = vmatprep.subr.mxu0 0.0
    %60 = vmatpush1.msra.mxu0 0.0
    %61 = vmatprep.subr.mxu0 0.0
    %62 = vmatpush1.msra.mxu0 0.0
    %63 = vmatprep.subr.mxu0 0.0
    %64 = vmatpush1.msra.mxu0 0.0
    %65 = vmatprep.subr.mxu0 0.0
    %66 = vmatpush1.msra.mxu0 0.0
    %67 = vmatprep.subr.mxu0 0.0
    %68 = vmatpush1.msra.mxu0 0.0
    %69 = vmatprep.subr.mxu0 0.0
    %70 = vmatpush1.msra.mxu0 0.0
    %71 = vmatprep.subr.mxu0 0.0
    %72 = vmatpush1.msra.mxu0 0.0
    %73 = vmatprep.subr.mxu0 0.0
    %74 = vmatpush1.msra.mxu0 0.0
    %75 = vmatprep.subr.mxu0 0.0
    %v76 = vand.u32 %v35, 4294901760
    %77 = vmatpush1.msra.mxu0 %v76
    %78 = vmatprep.subr.mxu0 0.0
    %v79 = vand.u32 %v34, 4294901760
    %80 = vmatpush1.msra.mxu0 %v79
    %81 = vmatprep.subr.mxu0 0.0
    %82 = vmatpush2.msra.mxu0 0.0
    %83 = vmatprep.subr.mxu0 0.0
    %84 = vmatpush2.msra.mxu0 0.0
    %85 = vmatprep.subr.mxu0 0.0
    %86 = vmatpush2.msra.mxu0 0.0
    %87 = vmatprep.subr.mxu0 0.0
    %88 = vmatpush2.msra.mxu0 0.0
    %89 = vmatprep.subr.mxu0 0.0
    %90 = vmatpush2.msra.mxu0 0.0
    %91 = vmatprep.subr.mxu0 0.0
    %92 = vmatpush2.msra.mxu0 0.0
    %93 = vmatprep.subr.mxu0 0.0
    %94 = vmatpush2.msra.mxu0 0.0
    %95 = vmatprep.subr.mxu0 0.0
    %96 = vmatpush2.msra.mxu0 0.0
    %97 = vmatprep.subr.mxu0 0.0
    %98 = vmatpush2.msra.mxu0 0.0
    %99 = vmatprep.subr.mxu0 0.0
    %100 = vmatpush2.msra.mxu0 0.0
    %101 = vmatprep.subr.mxu0 0.0
    %102 = vmatpush2.msra.mxu0 0.0
    %103 = vmatprep.subr.mxu0 0.0
    %104 = vmatpush2.msra.mxu0 0.0
    %105 = vmatprep.subr.mxu0 0.0
    %106 = vmatpush2.msra.mxu0 0.0
    %107 = vmatprep.subr.mxu0 0.0
    %108 = vmatpush2.msra.mxu0 0.0
    %109 = vmatprep.subr.mxu0 0.0
    %110 = vmatpush2.msra.mxu0 0.0
    %111 = vmatprep.subr.mxu0 0.0
    %112 = vmatpush2.msra.mxu0 0.0
    %113 = vmatprep.mubr.f32.mxu0 0.0
    %v114 = vand.u32 %v45, 4294901760
    %v115 = vsub.f32 %v45, %v114
    %v116 = vand.u32 %v115, 4294901760
    %v117 = vsub.f32 %v115, %v116
    %v118 = vand.u32 %v117, 4294901760
    %119 = vmatmul.mubr.f32.gmra.mxu0 %v118
    %v120 = vpop.f32.mrf.mxu0
    %v121 = vadd.f32 %v41, %v120
    %v122 = vpop.f32.mrf.mxu0
    %123 = vdwg.mxu0
    %124 = vmatprep.subr.mxu0 0.0
    %125 = vmatpush1.msra.mxu0 0.0
    %126 = vmatprep.subr.mxu0 0.0
    %127 = vmatpush1.msra.mxu0 0.0
    %128 = vmatprep.subr.mxu0 0.0
    %129 = vmatpush1.msra.mxu0 0.0
    %130 = vmatprep.subr.mxu0 0.0
    %131 = vmatpush1.msra.mxu0 0.0
    %132 = vmatprep.subr.mxu0 0.0
    %133 = vmatpush1.msra.mxu0 0.0
    %134 = vmatprep.subr.mxu0 0.0
    %135 = vmatpush1.msra.mxu0 0.0
    %136 = vmatprep.subr.mxu0 0.0
    %137 = vmatpush1.msra.mxu0 0.0
    %138 = vmatprep.subr.mxu0 0.0
    %139 = vmatpush1.msra.mxu0 0.0
    %140 = vmatprep.subr.mxu0 0.0
    %141 = vmatpush1.msra.mxu0 0.0
    %142 = vmatprep.subr.mxu0 0.0
    %143 = vmatpush1.msra.mxu0 0.0
    %144 = vmatprep.subr.mxu0 0.0
    %145 = vmatpush1.msra.mxu0 0.0
    %146 = vmatprep.subr.mxu0 0.0
    %147 = vmatpush1.msra.mxu0 0.0
    %148 = vmatprep.subr.mxu0 0.0
    %149 = vmatpush1.msra.mxu0 0.0
    %150 = vmatprep.subr.mxu0 0.0
    %151 = vmatpush1.msra.mxu0 0.0
    %152 = vmatprep.subr.mxu0 0.0
    %v153 = vand.u32 %v35, 4294901760
    %v154 = vsub.f32 %v35, %v153
    %v155 = vand.u32 %v154, 4294901760
    %v156 = vsub.f32 %v154, %v155
    %v157 = vand.u32 %v156, 4294901760
    %158 = vmatpush1.msra.mxu0 %v157
    %159 = vmatprep.subr.mxu0 0.0
    %v160 = vand.u32 %v34, 4294901760
    %v161 = vsub.f32 %v34, %v160
    %v162 = vand.u32 %v161, 4294901760
    %v163 = vsub.f32 %v161, %v162
    %v164 = vand.u32 %v163, 4294901760
    %165 = vmatpush1.msra.mxu0 %v164
    %166 = vmatprep.subr.mxu0 0.0
    %167 = vmatpush2.msra.mxu0 0.0
    %168 = vmatprep.subr.mxu0 0.0
    %169 = vmatpush2.msra.mxu0 0.0
    %170 = vmatprep.subr.mxu0 0.0
    %171 = vmatpush2.msra.mxu0 0.0
    %172 = vmatprep.subr.mxu0 0.0
    %173 = vmatpush2.msra.mxu0 0.0
    %174 = vmatprep.subr.mxu0 0.0
    %175 = vmatpush2.msra.mxu0 0.0
    %176 = vmatprep.subr.mxu0 0.0
    %177 = vmatpush2.msra.mxu0 0.0
    %178 = vmatprep.subr.mxu0 0.0
    %179 = vmatpush2.msra.mxu0 0.0
    %180 = vmatprep.subr.mxu0 0.0
    %181 = vmatpush2.msra.mxu0 0.0
    %182 = vmatprep.subr.mxu0 0.0
    %183 = vmatpush2.msra.mxu0 0.0
    %184 = vmatprep.subr.mxu0 0.0
    %185 = vmatpush2.msra.mxu0 0.0
    %186 = vmatprep.subr.mxu0 0.0
    %187 = vmatpush2.msra.mxu0 0.0
    %188 = vmatprep.subr.mxu0 0.0
    %189 = vmatpush2.msra.mxu0 0.0
    %190 = vmatprep.subr.mxu0 0.0
    %191 = vmatpush2.msra.mxu0 0.0
    %192 = vmatprep.subr.mxu0 0.0
    %193 = vmatpush2.msra.mxu0 0.0
    %194 = vmatprep.subr.mxu0 0.0
    %195 = vmatpush2.msra.mxu0 0.0
    %196 = vmatprep.subr.mxu0 0.0
    %197 = vmatpush2.msra.mxu0 0.0
    %198 = vmatprep.mubr.f32.mxu0 0.0
    %v199 = vand.u32 %v45, 4294901760
    %200 = vmatmul.mubr.f32.gmra.mxu0 %v199
    %v201 = vpop.f32.mrf.mxu0
    %v202 = vadd.f32 %v121, %v201
    %v203 = vpop.f32.mrf.mxu0
    %204 = vdwg.mxu0
    %205 = vmatprep.subr.mxu0 0.0
    %206 = vmatpush1.msra.mxu0 0.0
    %207 = vmatprep.subr.mxu0 0.0
    %208 = vmatpush1.msra.mxu0 0.0
    %209 = vmatprep.subr.mxu0 0.0
    %210 = vmatpush1.msra.mxu0 0.0
    %211 = vmatprep.subr.mxu0 0.0
    %212 = vmatpush1.msra.mxu0 0.0
    %213 = vmatprep.subr.mxu0 0.0
    %214 = vmatpush1.msra.mxu0 0.0
    %215 = vmatprep.subr.mxu0 0.0
    %216 = vmatpush1.msra.mxu0 0.0
    %217 = vmatprep.subr.mxu0 0.0
    %218 = vmatpush1.msra.mxu0 0.0
    %219 = vmatprep.subr.mxu0 0.0
    %220 = vmatpush1.msra.mxu0 0.0
    %221 = vmatprep.subr.mxu0 0.0
    %222 = vmatpush1.msra.mxu0 0.0
    %223 = vmatprep.subr.mxu0 0.0
    %224 = vmatpush1.msra.mxu0 0.0
    %225 = vmatprep.subr.mxu0 0.0
    %226 = vmatpush1.msra.mxu0 0.0
    %227 = vmatprep.subr.mxu0 0.0
    %228 = vmatpush1.msra.mxu0 0.0
    %229 = vmatprep.subr.mxu0 0.0
    %230 = vmatpush1.msra.mxu0 0.0
    %231 = vmatprep.subr.mxu0 0.0
    %232 = vmatpush1.msra.mxu0 0.0
    %233 = vmatprep.subr.mxu0 0.0
    %v234 = vand.u32 %v35, 4294901760
    %v235 = vsub.f32 %v35, %v234
    %236 = vmatpush1.msra.mxu0 %v235
    %237 = vmatprep.subr.mxu0 0.0
    %v238 = vand.u32 %v34, 4294901760
    %v239 = vsub.f32 %v34, %v238
    %240 = vmatpush1.msra.mxu0 %v239
    %241 = vmatprep.subr.mxu0 0.0
    %242 = vmatpush2.msra.mxu0 0.0
    %243 = vmatprep.subr.mxu0 0.0
    %244 = vmatpush2.msra.mxu0 0.0
    %245 = vmatprep.subr.mxu0 0.0
    %246 = vmatpush2.msra.mxu0 0.0
    %247 = vmatprep.subr.mxu0 0.0
    %248 = vmatpush2.msra.mxu0 0.0
    %249 = vmatprep.subr.mxu0 0.0
    %250 = vmatpush2.msra.mxu0 0.0
    %251 = vmatprep.subr.mxu0 0.0
    %252 = vmatpush2.msra.mxu0 0.0
    %253 = vmatprep.subr.mxu0 0.0
    %254 = vmatpush2.msra.mxu0 0.0
    %255 = vmatprep.subr.mxu0 0.0
    %256 = vmatpush2.msra.mxu0 0.0
    %257 = vmatprep.subr.mxu0 0.0
    %258 = vmatpush2.msra.mxu0 0.0
    %259 = vmatprep.subr.mxu0 0.0
    %260 = vmatpush2.msra.mxu0 0.0
    %261 = vmatprep.subr.mxu0 0.0
    %262 = vmatpush2.msra.mxu0 0.0
    %263 = vmatprep.subr.mxu0 0.0
    %264 = vmatpush2.msra.mxu0 0.0
    %265 = vmatprep.subr.mxu0 0.0
    %266 = vmatpush2.msra.mxu0 0.0
    %267 = vmatprep.subr.mxu0 0.0
    %268 = vmatpush2.msra.mxu0 0.0
    %269 = vmatprep.subr.mxu0 0.0
    %270 = vmatpush2.msra.mxu0 0.0
    %271 = vmatprep.subr.mxu0 0.0
    %272 = vmatpush2.msra.mxu0 0.0
    %273 = vmatprep.mubr.f32.mxu0 0.0
    %v274 = vand.u32 %v45, 4294901760
    %v275 = vsub.f32 %v45, %v274
    %276 = vmatmul.mubr.f32.gmra.mxu0 %v275
    %v277 = vpop.f32.mrf.mxu0
    %v278 = vadd.f32 %v202, %v277
    %v279 = vpop.f32.mrf.mxu0
    %280 = vdwg.mxu0
    %281 = vmatprep.subr.mxu0 0.0
    %282 = vmatpush1.msra.mxu0 0.0
    %283 = vmatprep.subr.mxu0 0.0
    %284 = vmatpush1.msra.mxu0 0.0
    %285 = vmatprep.subr.mxu0 0.0
    %286 = vmatpush1.msra.mxu0 0.0
    %287 = vmatprep.subr.mxu0 0.0
    %288 = vmatpush1.msra.mxu0 0.0
    %289 = vmatprep.subr.mxu0 0.0
    %290 = vmatpush1.msra.mxu0 0.0
    %291 = vmatprep.subr.mxu0 0.0
    %292 = vmatpush1.msra.mxu0 0.0
    %293 = vmatprep.subr.mxu0 0.0
    %294 = vmatpush1.msra.mxu0 0.0
    %295 = vmatprep.subr.mxu0 0.0
    %296 = vmatpush1.msra.mxu0 0.0
    %297 = vmatprep.subr.mxu0 0.0
    %298 = vmatpush1.msra.mxu0 0.0
    %299 = vmatprep.subr.mxu0 0.0
    %300 = vmatpush1.msra.mxu0 0.0
    %301 = vmatprep.subr.mxu0 0.0
    %302 = vmatpush1.msra.mxu0 0.0
    %303 = vmatprep.subr.mxu0 0.0
    %304 = vmatpush1.msra.mxu0 0.0
    %305 = vmatprep.subr.mxu0 0.0
    %306 = vmatpush1.msra.mxu0 0.0
    %307 = vmatprep.subr.mxu0 0.0
    %308 = vmatpush1.msra.mxu0 0.0
    %309 = vmatprep.subr.mxu0 0.0
    %v310 = vand.u32 %v35, 4294901760
    %311 = vmatpush1.msra.mxu0 %v310
    %312 = vmatprep.subr.mxu0 0.0
    %v313 = vand.u32 %v34, 4294901760
    %314 = vmatpush1.msra.mxu0 %v313
    %315 = vmatprep.subr.mxu0 0.0
    %316 = vmatpush2.msra.mxu0 0.0
    %317 = vmatprep.subr.mxu0 0.0
    %318 = vmatpush2.msra.mxu0 0.0
    %319 = vmatprep.subr.mxu0 0.0
    %320 = vmatpush2.msra.mxu0 0.0
    %321 = vmatprep.subr.mxu0 0.0
    %322 = vmatpush2.msra.mxu0 0.0
    %323 = vmatprep.subr.mxu0 0.0
    %324 = vmatpush2.msra.mxu0 0.0
    %325 = vmatprep.subr.mxu0 0.0
    %326 = vmatpush2.msra.mxu0 0.0
    %327 = vmatprep.subr.mxu0 0.0
    %328 = vmatpush2.msra.mxu0 0.0
    %329 = vmatprep.subr.mxu0 0.0
    %330 = vmatpush2.msra.mxu0 0.0
    %331 = vmatprep.subr.mxu0 0.0
    %332 = vmatpush2.msra.mxu0 0.0
    %333 = vmatprep.subr.mxu0 0.0
    %334 = vmatpush2.msra.mxu0 0.0
    %335 = vmatprep.subr.mxu0 0.0
    %336 = vmatpush2.msra.mxu0 0.0
    %337 = vmatprep.subr.mxu0 0.0
    %338 = vmatpush2.msra.mxu0 0.0
    %339 = vmatprep.subr.mxu0 0.0
    %340 = vmatpush2.msra.mxu0 0.0
    %341 = vmatprep.subr.mxu0 0.0
    %342 = vmatpush2.msra.mxu0 0.0
    %343 = vmatprep.subr.mxu0 0.0
    %344 = vmatpush2.msra.mxu0 0.0
    %345 = vmatprep.subr.mxu0 0.0
    %346 = vmatpush2.msra.mxu0 0.0
    %347 = vmatprep.mubr.f32.mxu0 0.0
    %v348 = vand.u32 %v45, 4294901760
    %v349 = vsub.f32 %v45, %v348
    %v350 = vand.u32 %v349, 4294901760
    %351 = vmatmul.mubr.f32.gmra.mxu0 %v350
    %v352 = vpop.f32.mrf.mxu0
    %v353 = vadd.f32 %v278, %v352
    %v354 = vpop.f32.mrf.mxu0
    %355 = vdwg.mxu0
    %356 = vmatprep.subr.mxu0 0.0
    %357 = vmatpush1.msra.mxu0 0.0
    %358 = vmatprep.subr.mxu0 0.0
    %359 = vmatpush1.msra.mxu0 0.0
    %360 = vmatprep.subr.mxu0 0.0
    %361 = vmatpush1.msra.mxu0 0.0
    %362 = vmatprep.subr.mxu0 0.0
    %363 = vmatpush1.msra.mxu0 0.0
    %364 = vmatprep.subr.mxu0 0.0
    %365 = vmatpush1.msra.mxu0 0.0
    %366 = vmatprep.subr.mxu0 0.0
    %367 = vmatpush1.msra.mxu0 0.0
    %368 = vmatprep.subr.mxu0 0.0
    %369 = vmatpush1.msra.mxu0 0.0
    %370 = vmatprep.subr.mxu0 0.0
    %371 = vmatpush1.msra.mxu0 0.0
    %372 = vmatprep.subr.mxu0 0.0
    %373 = vmatpush1.msra.mxu0 0.0
    %374 = vmatprep.subr.mxu0 0.0
    %375 = vmatpush1.msra.mxu0 0.0
    %376 = vmatprep.subr.mxu0 0.0
    %377 = vmatpush1.msra.mxu0 0.0
    %378 = vmatprep.subr.mxu0 0.0
    %379 = vmatpush1.msra.mxu0 0.0
    %380 = vmatprep.subr.mxu0 0.0
    %381 = vmatpush1.msra.mxu0 0.0
    %382 = vmatprep.subr.mxu0 0.0
    %383 = vmatpush1.msra.mxu0 0.0
    %384 = vmatprep.subr.mxu0 0.0
    %v385 = vand.u32 %v35, 4294901760
    %v386 = vsub.f32 %v35, %v385
    %v387 = vand.u32 %v386, 4294901760
    %388 = vmatpush1.msra.mxu0 %v387
    %389 = vmatprep.subr.mxu0 0.0
    %v390 = vand.u32 %v34, 4294901760
    %v391 = vsub.f32 %v34, %v390
    %v392 = vand.u32 %v391, 4294901760
    %393 = vmatpush1.msra.mxu0 %v392
    %394 = vmatprep.subr.mxu0 0.0
    %395 = vmatpush2.msra.mxu0 0.0
    %396 = vmatprep.subr.mxu0 0.0
    %397 = vmatpush2.msra.mxu0 0.0
    %398 = vmatprep.subr.mxu0 0.0
    %399 = vmatpush2.msra.mxu0 0.0
    %400 = vmatprep.subr.mxu0 0.0
    %401 = vmatpush2.msra.mxu0 0.0
    %402 = vmatprep.subr.mxu0 0.0
    %403 = vmatpush2.msra.mxu0 0.0
    %404 = vmatprep.subr.mxu0 0.0
    %405 = vmatpush2.msra.mxu0 0.0
    %406 = vmatprep.subr.mxu0 0.0
    %407 = vmatpush2.msra.mxu0 0.0
    %408 = vmatprep.subr.mxu0 0.0
    %409 = vmatpush2.msra.mxu0 0.0
    %410 = vmatprep.subr.mxu0 0.0
    %411 = vmatpush2.msra.mxu0 0.0
    %412 = vmatprep.subr.mxu0 0.0
    %413 = vmatpush2.msra.mxu0 0.0
    %414 = vmatprep.subr.mxu0 0.0
    %415 = vmatpush2.msra.mxu0 0.0
    %416 = vmatprep.subr.mxu0 0.0
    %417 = vmatpush2.msra.mxu0 0.0
    %418 = vmatprep.subr.mxu0 0.0
    %419 = vmatpush2.msra.mxu0 0.0
    %420 = vmatprep.subr.mxu0 0.0
    %421 = vmatpush2.msra.mxu0 0.0
    %422 = vmatprep.subr.mxu0 0.0
    %423 = vmatpush2.msra.mxu0 0.0
    %424 = vmatprep.subr.mxu0 0.0
    %425 = vmatpush2.msra.mxu0 0.0
    %426 = vmatprep.mubr.f32.mxu0 0.0
    %v427 = vand.u32 %v45, 4294901760
    %428 = vmatmul.mubr.f32.gmra.mxu0 %v427
    %v429 = vpop.f32.mrf.mxu0
    %v430 = vadd.f32 %v353, %v429
    %v431 = vpop.f32.mrf.mxu0
    %432 = vdwg.mxu0
    %433 = vmatprep.subr.mxu0 0.0
    %434 = vmatpush1.msra.mxu0 0.0
    %435 = vmatprep.subr.mxu0 0.0
    %436 = vmatpush1.msra.mxu0 0.0
    %437 = vmatprep.subr.mxu0 0.0
    %438 = vmatpush1.msra.mxu0 0.0
    %439 = vmatprep.subr.mxu0 0.0
    %440 = vmatpush1.msra.mxu0 0.0
    %441 = vmatprep.subr.mxu0 0.0
    %442 = vmatpush1.msra.mxu0 0.0
    %443 = vmatprep.subr.mxu0 0.0
    %444 = vmatpush1.msra.mxu0 0.0
    %445 = vmatprep.subr.mxu0 0.0
    %446 = vmatpush1.msra.mxu0 0.0
    %447 = vmatprep.subr.mxu0 0.0
    %448 = vmatpush1.msra.mxu0 0.0
    %449 = vmatprep.subr.mxu0 0.0
    %450 = vmatpush1.msra.mxu0 0.0
    %451 = vmatprep.subr.mxu0 0.0
    %452 = vmatpush1.msra.mxu0 0.0
    %453 = vmatprep.subr.mxu0 0.0
    %454 = vmatpush1.msra.mxu0 0.0
    %455 = vmatprep.subr.mxu0 0.0
    %456 = vmatpush1.msra.mxu0 0.0
    %457 = vmatprep.subr.mxu0 0.0
    %458 = vmatpush1.msra.mxu0 0.0
    %459 = vmatprep.subr.mxu0 0.0
    %460 = vmatpush1.msra.mxu0 0.0
    %461 = vmatprep.subr.mxu0 0.0
    %v462 = vand.u32 %v35, 4294901760
    %463 = vmatpush1.msra.mxu0 %v462
    %464 = vmatprep.subr.mxu0 0.0
    %v465 = vand.u32 %v34, 4294901760
    %466 = vmatpush1.msra.mxu0 %v465
    %467 = vmatprep.subr.mxu0 0.0
    %468 = vmatpush2.msra.mxu0 0.0
    %469 = vmatprep.subr.mxu0 0.0
    %470 = vmatpush2.msra.mxu0 0.0
    %471 = vmatprep.subr.mxu0 0.0
    %472 = vmatpush2.msra.mxu0 0.0
    %473 = vmatprep.subr.mxu0 0.0
    %474 = vmatpush2.msra.mxu0 0.0
    %475 = vmatprep.subr.mxu0 0.0
    %476 = vmatpush2.msra.mxu0 0.0
    %477 = vmatprep.subr.mxu0 0.0
    %478 = vmatpush2.msra.mxu0 0.0
    %479 = vmatprep.subr.mxu0 0.0
    %480 = vmatpush2.msra.mxu0 0.0
    %481 = vmatprep.subr.mxu0 0.0
    %482 = vmatpush2.msra.mxu0 0.0
    %483 = vmatprep.subr.mxu0 0.0
    %484 = vmatpush2.msra.mxu0 0.0
    %485 = vmatprep.subr.mxu0 0.0
    %486 = vmatpush2.msra.mxu0 0.0
    %487 = vmatprep.subr.mxu0 0.0
    %488 = vmatpush2.msra.mxu0 0.0
    %489 = vmatprep.subr.mxu0 0.0
    %490 = vmatpush2.msra.mxu0 0.0
    %491 = vmatprep.subr.mxu0 0.0
    %492 = vmatpush2.msra.mxu0 0.0
    %493 = vmatprep.subr.mxu0 0.0
    %494 = vmatpush2.msra.mxu0 0.0
    %495 = vmatprep.subr.mxu0 0.0
    %496 = vmatpush2.msra.mxu0 0.0
    %497 = vmatprep.subr.mxu0 0.0
    %498 = vmatpush2.msra.mxu0 0.0
    %499 = vmatprep.mubr.f32.mxu0 0.0
    %v500 = vand.u32 %v45, 4294901760
    %501 = vmatmul.mubr.f32.gmra.mxu0 %v500
    %v502 = vpop.f32.mrf.mxu0
    %v503 = vadd.f32 %v430, %v502
    %v504 = vpop.f32.mrf.mxu0
    %505 = vdwg.mxu0
    %v506 = vld [vmem:[%s3] sm:$0xff]
    %v507 = vld [vmem:[%s3 + $0x8] sm:$0xff]
    %v508 = vld [vmem:[%s3 + $0x10] sm:$0xff]
    %v509 = vld [vmem:[%s3 + $0x18] sm:$0xff]
    %v510 = vmul.f32 %v503, %v506
    %v511 = vmul.f32 %v503, %v507
    %v512 = vmul.f32 %v503, %v508
    %v513 = vmul.f32 %v503, %v509
    %v514 = vld [vmem:[%s4] sm:$0xff]
    %v515 = vld [vmem:[%s4 + $0x8] sm:$0xff]
    %v516 = vld [vmem:[%s4 + $0x10] sm:$0xff]
    %v517 = vld [vmem:[%s4 + $0x18] sm:$0xff]
    %v518 = vld [vmem:[%s4 + $0x20] sm:$0xff]
    %v519 = vld [vmem:[%s4 + $0x28] sm:$0xff]
    %v520 = vld [vmem:[%s4 + $0x30] sm:$0xff]
    %v521 = vld [vmem:[%s4 + $0x38] sm:$0xff]
    %v522 = vld [vmem:[%s4 + $0x40] sm:$0xff]
    %v523 = vld [vmem:[%s4 + $0x48] sm:$0xff]
    %v524 = vld [vmem:[%s4 + $0x50] sm:$0xff]
    %v525 = vld [vmem:[%s4 + $0x58] sm:$0xff]
    %vm526 = vcmask 785408
    %v528 = vsel %vm526, %v510, 0
    %v531 = vsel %vm526, %v511, 0
    %v534 = vsel %vm526, %v512, 0
    %v537 = vsel %vm526, %v513, 0
    %539 = vmatprep.subr.mxu0 0.0
    %540 = vmatpush1.msra.mxu0 0.0
    %541 = vmatprep.subr.mxu0 0.0
    %542 = vmatpush1.msra.mxu0 0.0
    %543 = vmatprep.subr.mxu0 0.0
    %544 = vmatpush1.msra.mxu0 0.0
    %545 = vmatprep.subr.mxu0 0.0
    %546 = vmatpush1.msra.mxu0 0.0
    %547 = vmatprep.subr.mxu0 0.0
    %v548 = vand.u32 %v525, 4294901760
    %549 = vmatpush1.msra.mxu0 %v548
    %550 = vmatprep.subr.mxu0 0.0
    %v551 = vand.u32 %v524, 4294901760
    %552 = vmatpush1.msra.mxu0 %v551
    %553 = vmatprep.subr.mxu0 0.0
    %v554 = vand.u32 %v523, 4294901760
    %555 = vmatpush1.msra.mxu0 %v554
    %556 = vmatprep.subr.mxu0 0.0
    %v557 = vand.u32 %v522, 4294901760
    %558 = vmatpush1.msra.mxu0 %v557
    %559 = vmatprep.subr.mxu0 0.0
    %v560 = vand.u32 %v521, 4294901760
    %561 = vmatpush1.msra.mxu0 %v560
    %562 = vmatprep.subr.mxu0 0.0
    %v563 = vand.u32 %v520, 4294901760
    %564 = vmatpush1.msra.mxu0 %v563
    %565 = vmatprep.subr.mxu0 0.0
    %v566 = vand.u32 %v519, 4294901760
    %567 = vmatpush1.msra.mxu0 %v566
    %568 = vmatprep.subr.mxu0 0.0
    %v569 = vand.u32 %v518, 4294901760
    %570 = vmatpush1.msra.mxu0 %v569
    %571 = vmatprep.subr.mxu0 0.0
    %v572 = vand.u32 %v517, 4294901760
    %573 = vmatpush1.msra.mxu0 %v572
    %574 = vmatprep.subr.mxu0 0.0
    %v575 = vand.u32 %v516, 4294901760
    %576 = vmatpush1.msra.mxu0 %v575
    %577 = vmatprep.subr.mxu0 0.0
    %v578 = vand.u32 %v515, 4294901760
    %579 = vmatpush1.msra.mxu0 %v578
    %580 = vmatprep.subr.mxu0 0.0
    %v581 = vand.u32 %v514, 4294901760
    %582 = vmatpush1.msra.mxu0 %v581
    %583 = vmatprep.subr.mxu0 0.0
    %584 = vmatpush2.msra.mxu0 0.0
    %585 = vmatprep.subr.mxu0 0.0
    %586 = vmatpush2.msra.mxu0 0.0
    %587 = vmatprep.subr.mxu0 0.0
    %588 = vmatpush2.msra.mxu0 0.0
    %589 = vmatprep.subr.mxu0 0.0
    %590 = vmatpush2.msra.mxu0 0.0
    %591 = vmatprep.subr.mxu0 0.0
    %592 = vmatpush2.msra.mxu0 0.0
    %593 = vmatprep.subr.mxu0 0.0
    %594 = vmatpush2.msra.mxu0 0.0
    %595 = vmatprep.subr.mxu0 0.0
    %596 = vmatpush2.msra.mxu0 0.0
    %597 = vmatprep.subr.mxu0 0.0
    %598 = vmatpush2.msra.mxu0 0.0
    %599 = vmatprep.subr.mxu0 0.0
    %600 = vmatpush2.msra.mxu0 0.0
    %601 = vmatprep.subr.mxu0 0.0
    %602 = vmatpush2.msra.mxu0 0.0
    %603 = vmatprep.subr.mxu0 0.0
    %604 = vmatpush2.msra.mxu0 0.0
    %605 = vmatprep.subr.mxu0 0.0
    %606 = vmatpush2.msra.mxu0 0.0
    %607 = vmatprep.subr.mxu0 0.0
    %608 = vmatpush2.msra.mxu0 0.0
    %609 = vmatprep.subr.mxu0 0.0
    %610 = vmatpush2.msra.mxu0 0.0
    %611 = vmatprep.subr.mxu0 0.0
    %612 = vmatpush2.msra.mxu0 0.0
    %613 = vmatprep.subr.mxu0 0.0
    %614 = vmatpush2.msra.mxu0 0.0
    %615 = vmatprep.mubr.f32.mxu0 0.0
    %v616 = vand.u32 %v528, 4294901760
    %v617 = vsub.f32 %v528, %v616
    %v618 = vand.u32 %v617, 4294901760
    %v619 = vsub.f32 %v617, %v618
    %v620 = vand.u32 %v619, 4294901760
    %621 = vmatmul.mubr.f32.gmra.mxu0 %v620
    %v622 = vpop.f32.mrf.mxu0
    %v623 = vadd.f32 0.0, %v622
    %v624 = vpop.f32.mrf.mxu0
    %625 = vmatprep.mubr.f32.mxu0 0.0
    %v626 = vand.u32 %v531, 4294901760
    %v627 = vsub.f32 %v531, %v626
    %v628 = vand.u32 %v627, 4294901760
    %v629 = vsub.f32 %v627, %v628
    %v630 = vand.u32 %v629, 4294901760
    %631 = vmatmul.mubr.f32.gmra.mxu0 %v630
    %v632 = vpop.f32.mrf.mxu0
    %v633 = vadd.f32 0.0, %v632
    %v634 = vpop.f32.mrf.mxu0
    %635 = vmatprep.mubr.f32.mxu0 0.0
    %v636 = vand.u32 %v534, 4294901760
    %v637 = vsub.f32 %v534, %v636
    %v638 = vand.u32 %v637, 4294901760
    %v639 = vsub.f32 %v637, %v638
    %v640 = vand.u32 %v639, 4294901760
    %641 = vmatmul.mubr.f32.gmra.mxu0 %v640
    %v642 = vpop.f32.mrf.mxu0
    %v643 = vadd.f32 0.0, %v642
    %v644 = vpop.f32.mrf.mxu0
    %645 = vmatprep.mubr.f32.mxu0 0.0
    %v646 = vand.u32 %v537, 4294901760
    %v647 = vsub.f32 %v537, %v646
    %v648 = vand.u32 %v647, 4294901760
    %v649 = vsub.f32 %v647, %v648
    %v650 = vand.u32 %v649, 4294901760
    %651 = vmatmul.mubr.f32.gmra.mxu0 %v650
    %v652 = vpop.f32.mrf.mxu0
    %v653 = vadd.f32 0.0, %v652
    %v654 = vpop.f32.mrf.mxu0
    %655 = vdwg.mxu0
    %656 = vmatprep.subr.mxu0 0.0
    %657 = vmatpush1.msra.mxu0 0.0
    %658 = vmatprep.subr.mxu0 0.0
    %659 = vmatpush1.msra.mxu0 0.0
    %660 = vmatprep.subr.mxu0 0.0
    %661 = vmatpush1.msra.mxu0 0.0
    %662 = vmatprep.subr.mxu0 0.0
    %663 = vmatpush1.msra.mxu0 0.0
    %664 = vmatprep.subr.mxu0 0.0
    %v665 = vand.u32 %v525, 4294901760
    %v666 = vsub.f32 %v525, %v665
    %v667 = vand.u32 %v666, 4294901760
    %v668 = vsub.f32 %v666, %v667
    %v669 = vand.u32 %v668, 4294901760
    %670 = vmatpush1.msra.mxu0 %v669
    %671 = vmatprep.subr.mxu0 0.0
    %v672 = vand.u32 %v524, 4294901760
    %v673 = vsub.f32 %v524, %v672
    %v674 = vand.u32 %v673, 4294901760
    %v675 = vsub.f32 %v673, %v674
    %v676 = vand.u32 %v675, 4294901760
    %677 = vmatpush1.msra.mxu0 %v676
    %678 = vmatprep.subr.mxu0 0.0
    %v679 = vand.u32 %v523, 4294901760
    %v680 = vsub.f32 %v523, %v679
    %v681 = vand.u32 %v680, 4294901760
    %v682 = vsub.f32 %v680, %v681
    %v683 = vand.u32 %v682, 4294901760
    %684 = vmatpush1.msra.mxu0 %v683
    %685 = vmatprep.subr.mxu0 0.0
    %v686 = vand.u32 %v522, 4294901760
    %v687 = vsub.f32 %v522, %v686
    %v688 = vand.u32 %v687, 4294901760
    %v689 = vsub.f32 %v687, %v688
    %v690 = vand.u32 %v689, 4294901760
    %691 = vmatpush1.msra.mxu0 %v690
    %692 = vmatprep.subr.mxu0 0.0
    %v693 = vand.u32 %v521, 4294901760
    %v694 = vsub.f32 %v521, %v693
    %v695 = vand.u32 %v694, 4294901760
    %v696 = vsub.f32 %v694, %v695
    %v697 = vand.u32 %v696, 4294901760
    %698 = vmatpush1.msra.mxu0 %v697
    %699 = vmatprep.subr.mxu0 0.0
    %v700 = vand.u32 %v520, 4294901760
    %v701 = vsub.f32 %v520, %v700
    %v702 = vand.u32 %v701, 4294901760
    %v703 = vsub.f32 %v701, %v702
    %v704 = vand.u32 %v703, 4294901760
    %705 = vmatpush1.msra.mxu0 %v704
    %706 = vmatprep.subr.mxu0 0.0
    %v707 = vand.u32 %v519, 4294901760
    %v708 = vsub.f32 %v519, %v707
    %v709 = vand.u32 %v708, 4294901760
    %v710 = vsub.f32 %v708, %v709
    %v711 = vand.u32 %v710, 4294901760
    %712 = vmatpush1.msra.mxu0 %v711
    %713 = vmatprep.subr.mxu0 0.0
    %v714 = vand.u32 %v518, 4294901760
    %v715 = vsub.f32 %v518, %v714
    %v716 = vand.u32 %v715, 4294901760
    %v717 = vsub.f32 %v715, %v716
    %v718 = vand.u32 %v717, 4294901760
    %719 = vmatpush1.msra.mxu0 %v718
    %720 = vmatprep.subr.mxu0 0.0
    %v721 = vand.u32 %v517, 4294901760
    %v722 = vsub.f32 %v517, %v721
    %v723 = vand.u32 %v722, 4294901760
    %v724 = vsub.f32 %v722, %v723
    %v725 = vand.u32 %v724, 4294901760
    %726 = vmatpush1.msra.mxu0 %v725
    %727 = vmatprep.subr.mxu0 0.0
    %v728 = vand.u32 %v516, 4294901760
    %v729 = vsub.f32 %v516, %v728
    %v730 = vand.u32 %v729, 4294901760
    %v731 = vsub.f32 %v729, %v730
    %v732 = vand.u32 %v731, 4294901760
    %733 = vmatpush1.msra.mxu0 %v732
    %734 = vmatprep.subr.mxu0 0.0
    %v735 = vand.u32 %v515, 4294901760
    %v736 = vsub.f32 %v515, %v735
    %v737 = vand.u32 %v736, 4294901760
    %v738 = vsub.f32 %v736, %v737
    %v739 = vand.u32 %v738, 4294901760
    %740 = vmatpush1.msra.mxu0 %v739
    %741 = vmatprep.subr.mxu0 0.0
    %v742 = vand.u32 %v514, 4294901760
    %v743 = vsub.f32 %v514, %v742
    %v744 = vand.u32 %v743, 4294901760
    %v745 = vsub.f32 %v743, %v744
    %v746 = vand.u32 %v745, 4294901760
    %747 = vmatpush1.msra.mxu0 %v746
    %748 = vmatprep.subr.mxu0 0.0
    %749 = vmatpush2.msra.mxu0 0.0
    %750 = vmatprep.subr.mxu0 0.0
    %751 = vmatpush2.msra.mxu0 0.0
    %752 = vmatprep.subr.mxu0 0.0
    %753 = vmatpush2.msra.mxu0 0.0
    %754 = vmatprep.subr.mxu0 0.0
    %755 = vmatpush2.msra.mxu0 0.0
    %756 = vmatprep.subr.mxu0 0.0
    %757 = vmatpush2.msra.mxu0 0.0
    %758 = vmatprep.subr.mxu0 0.0
    %759 = vmatpush2.msra.mxu0 0.0
    %760 = vmatprep.subr.mxu0 0.0
    %761 = vmatpush2.msra.mxu0 0.0
    %762 = vmatprep.subr.mxu0 0.0
    %763 = vmatpush2.msra.mxu0 0.0
    %764 = vmatprep.subr.mxu0 0.0
    %765 = vmatpush2.msra.mxu0 0.0
    %766 = vmatprep.subr.mxu0 0.0
    %767 = vmatpush2.msra.mxu0 0.0
    %768 = vmatprep.subr.mxu0 0.0
    %769 = vmatpush2.msra.mxu0 0.0
    %770 = vmatprep.subr.mxu0 0.0
    %771 = vmatpush2.msra.mxu0 0.0
    %772 = vmatprep.subr.mxu0 0.0
    %773 = vmatpush2.msra.mxu0 0.0
    %774 = vmatprep.subr.mxu0 0.0
    %775 = vmatpush2.msra.mxu0 0.0
    %776 = vmatprep.subr.mxu0 0.0
    %777 = vmatpush2.msra.mxu0 0.0
    %778 = vmatprep.subr.mxu0 0.0
    %779 = vmatpush2.msra.mxu0 0.0
    %780 = vmatprep.mubr.f32.mxu0 0.0
    %v781 = vand.u32 %v528, 4294901760
    %782 = vmatmul.mubr.f32.gmra.mxu0 %v781
    %v783 = vpop.f32.mrf.mxu0
    %v784 = vadd.f32 %v623, %v783
    %v785 = vpop.f32.mrf.mxu0
    %786 = vmatprep.mubr.f32.mxu0 0.0
    %v787 = vand.u32 %v531, 4294901760
    %788 = vmatmul.mubr.f32.gmra.mxu0 %v787
    %v789 = vpop.f32.mrf.mxu0
    %v790 = vadd.f32 %v633, %v789
    %v791 = vpop.f32.mrf.mxu0
    %792 = vmatprep.mubr.f32.mxu0 0.0
    %v793 = vand.u32 %v534, 4294901760
    %794 = vmatmul.mubr.f32.gmra.mxu0 %v793
    %v795 = vpop.f32.mrf.mxu0
    %v796 = vadd.f32 %v643, %v795
    %v797 = vpop.f32.mrf.mxu0
    %798 = vmatprep.mubr.f32.mxu0 0.0
    %v799 = vand.u32 %v537, 4294901760
    %800 = vmatmul.mubr.f32.gmra.mxu0 %v799
    %v801 = vpop.f32.mrf.mxu0
    %v802 = vadd.f32 %v653, %v801
    %v803 = vpop.f32.mrf.mxu0
    %804 = vdwg.mxu0
    %805 = vmatprep.subr.mxu0 0.0
    %806 = vmatpush1.msra.mxu0 0.0
    %807 = vmatprep.subr.mxu0 0.0
    %808 = vmatpush1.msra.mxu0 0.0
    %809 = vmatprep.subr.mxu0 0.0
    %810 = vmatpush1.msra.mxu0 0.0
    %811 = vmatprep.subr.mxu0 0.0
    %812 = vmatpush1.msra.mxu0 0.0
    %813 = vmatprep.subr.mxu0 0.0
    %v814 = vand.u32 %v525, 4294901760
    %v815 = vsub.f32 %v525, %v814
    %816 = vmatpush1.msra.mxu0 %v815
    %817 = vmatprep.subr.mxu0 0.0
    %v818 = vand.u32 %v524, 4294901760
    %v819 = vsub.f32 %v524, %v818
    %820 = vmatpush1.msra.mxu0 %v819
    %821 = vmatprep.subr.mxu0 0.0
    %v822 = vand.u32 %v523, 4294901760
    %v823 = vsub.f32 %v523, %v822
    %824 = vmatpush1.msra.mxu0 %v823
    %825 = vmatprep.subr.mxu0 0.0
    %v826 = vand.u32 %v522, 4294901760
    %v827 = vsub.f32 %v522, %v826
    %828 = vmatpush1.msra.mxu0 %v827
    %829 = vmatprep.subr.mxu0 0.0
    %v830 = vand.u32 %v521, 4294901760
    %v831 = vsub.f32 %v521, %v830
    %832 = vmatpush1.msra.mxu0 %v831
    %833 = vmatprep.subr.mxu0 0.0
    %v834 = vand.u32 %v520, 4294901760
    %v835 = vsub.f32 %v520, %v834
    %836 = vmatpush1.msra.mxu0 %v835
    %837 = vmatprep.subr.mxu0 0.0
    %v838 = vand.u32 %v519, 4294901760
    %v839 = vsub.f32 %v519, %v838
    %840 = vmatpush1.msra.mxu0 %v839
    %841 = vmatprep.subr.mxu0 0.0
    %v842 = vand.u32 %v518, 4294901760
    %v843 = vsub.f32 %v518, %v842
    %844 = vmatpush1.msra.mxu0 %v843
    %845 = vmatprep.subr.mxu0 0.0
    %v846 = vand.u32 %v517, 4294901760
    %v847 = vsub.f32 %v517, %v846
    %848 = vmatpush1.msra.mxu0 %v847
    %849 = vmatprep.subr.mxu0 0.0
    %v850 = vand.u32 %v516, 4294901760
    %v851 = vsub.f32 %v516, %v850
    %852 = vmatpush1.msra.mxu0 %v851
    %853 = vmatprep.subr.mxu0 0.0
    %v854 = vand.u32 %v515, 4294901760
    %v855 = vsub.f32 %v515, %v854
    %856 = vmatpush1.msra.mxu0 %v855
    %857 = vmatprep.subr.mxu0 0.0
    %v858 = vand.u32 %v514, 4294901760
    %v859 = vsub.f32 %v514, %v858
    %860 = vmatpush1.msra.mxu0 %v859
    %861 = vmatprep.subr.mxu0 0.0
    %862 = vmatpush2.msra.mxu0 0.0
    %863 = vmatprep.subr.mxu0 0.0
    %864 = vmatpush2.msra.mxu0 0.0
    %865 = vmatprep.subr.mxu0 0.0
    %866 = vmatpush2.msra.mxu0 0.0
    %867 = vmatprep.subr.mxu0 0.0
    %868 = vmatpush2.msra.mxu0 0.0
    %869 = vmatprep.subr.mxu0 0.0
    %870 = vmatpush2.msra.mxu0 0.0
    %871 = vmatprep.subr.mxu0 0.0
    %872 = vmatpush2.msra.mxu0 0.0
    %873 = vmatprep.subr.mxu0 0.0
    %874 = vmatpush2.msra.mxu0 0.0
    %875 = vmatprep.subr.mxu0 0.0
    %876 = vmatpush2.msra.mxu0 0.0
    %877 = vmatprep.subr.mxu0 0.0
    %878 = vmatpush2.msra.mxu0 0.0
    %879 = vmatprep.subr.mxu0 0.0
    %880 = vmatpush2.msra.mxu0 0.0
    %881 = vmatprep.subr.mxu0 0.0
    %882 = vmatpush2.msra.mxu0 0.0
    %883 = vmatprep.subr.mxu0 0.0
    %884 = vmatpush2.msra.mxu0 0.0
    %885 = vmatprep.subr.mxu0 0.0
    %886 = vmatpush2.msra.mxu0 0.0
    %887 = vmatprep.subr.mxu0 0.0
    %888 = vmatpush2.msra.mxu0 0.0
    %889 = vmatprep.subr.mxu0 0.0
    %890 = vmatpush2.msra.mxu0 0.0
    %891 = vmatprep.subr.mxu0 0.0
    %892 = vmatpush2.msra.mxu0 0.0
    %893 = vmatprep.mubr.f32.mxu0 0.0
    %v894 = vand.u32 %v528, 4294901760
    %v895 = vsub.f32 %v528, %v894
    %896 = vmatmul.mubr.f32.gmra.mxu0 %v895
    %v897 = vpop.f32.mrf.mxu0
    %v898 = vadd.f32 %v784, %v897
    %v899 = vpop.f32.mrf.mxu0
    %900 = vmatprep.mubr.f32.mxu0 0.0
    %v901 = vand.u32 %v531, 4294901760
    %v902 = vsub.f32 %v531, %v901
    %903 = vmatmul.mubr.f32.gmra.mxu0 %v902
    %v904 = vpop.f32.mrf.mxu0
    %v905 = vadd.f32 %v790, %v904
    %v906 = vpop.f32.mrf.mxu0
    %907 = vmatprep.mubr.f32.mxu0 0.0
    %v908 = vand.u32 %v534, 4294901760
    %v909 = vsub.f32 %v534, %v908
    %910 = vmatmul.mubr.f32.gmra.mxu0 %v909
    %v911 = vpop.f32.mrf.mxu0
    %v912 = vadd.f32 %v796, %v911
    %v913 = vpop.f32.mrf.mxu0
    %914 = vmatprep.mubr.f32.mxu0 0.0
    %v915 = vand.u32 %v537, 4294901760
    %v916 = vsub.f32 %v537, %v915
    %917 = vmatmul.mubr.f32.gmra.mxu0 %v916
    %v918 = vpop.f32.mrf.mxu0
    %v919 = vadd.f32 %v802, %v918
    %v920 = vpop.f32.mrf.mxu0
    %921 = vdwg.mxu0
    %922 = vmatprep.subr.mxu0 0.0
    %923 = vmatpush1.msra.mxu0 0.0
    %924 = vmatprep.subr.mxu0 0.0
    %925 = vmatpush1.msra.mxu0 0.0
    %926 = vmatprep.subr.mxu0 0.0
    %927 = vmatpush1.msra.mxu0 0.0
    %928 = vmatprep.subr.mxu0 0.0
    %929 = vmatpush1.msra.mxu0 0.0
    %930 = vmatprep.subr.mxu0 0.0
    %v931 = vand.u32 %v525, 4294901760
    %932 = vmatpush1.msra.mxu0 %v931
    %933 = vmatprep.subr.mxu0 0.0
    %v934 = vand.u32 %v524, 4294901760
    %935 = vmatpush1.msra.mxu0 %v934
    %936 = vmatprep.subr.mxu0 0.0
    %v937 = vand.u32 %v523, 4294901760
    %938 = vmatpush1.msra.mxu0 %v937
    %939 = vmatprep.subr.mxu0 0.0
    %v940 = vand.u32 %v522, 4294901760
    %941 = vmatpush1.msra.mxu0 %v940
    %942 = vmatprep.subr.mxu0 0.0
    %v943 = vand.u32 %v521, 4294901760
    %944 = vmatpush1.msra.mxu0 %v943
    %945 = vmatprep.subr.mxu0 0.0
    %v946 = vand.u32 %v520, 4294901760
    %947 = vmatpush1.msra.mxu0 %v946
    %948 = vmatprep.subr.mxu0 0.0
    %v949 = vand.u32 %v519, 4294901760
    %950 = vmatpush1.msra.mxu0 %v949
    %951 = vmatprep.subr.mxu0 0.0
    %v952 = vand.u32 %v518, 4294901760
    %953 = vmatpush1.msra.mxu0 %v952
    %954 = vmatprep.subr.mxu0 0.0
    %v955 = vand.u32 %v517, 4294901760
    %956 = vmatpush1.msra.mxu0 %v955
    %957 = vmatprep.subr.mxu0 0.0
    %v958 = vand.u32 %v516, 4294901760
    %959 = vmatpush1.msra.mxu0 %v958
    %960 = vmatprep.subr.mxu0 0.0
    %v961 = vand.u32 %v515, 4294901760
    %962 = vmatpush1.msra.mxu0 %v961
    %963 = vmatprep.subr.mxu0 0.0
    %v964 = vand.u32 %v514, 4294901760
    %965 = vmatpush1.msra.mxu0 %v964
    %966 = vmatprep.subr.mxu0 0.0
    %967 = vmatpush2.msra.mxu0 0.0
    %968 = vmatprep.subr.mxu0 0.0
    %969 = vmatpush2.msra.mxu0 0.0
    %970 = vmatprep.subr.mxu0 0.0
    %971 = vmatpush2.msra.mxu0 0.0
    %972 = vmatprep.subr.mxu0 0.0
    %973 = vmatpush2.msra.mxu0 0.0
    %974 = vmatprep.subr.mxu0 0.0
    %975 = vmatpush2.msra.mxu0 0.0
    %976 = vmatprep.subr.mxu0 0.0
    %977 = vmatpush2.msra.mxu0 0.0
    %978 = vmatprep.subr.mxu0 0.0
    %979 = vmatpush2.msra.mxu0 0.0
    %980 = vmatprep.subr.mxu0 0.0
    %981 = vmatpush2.msra.mxu0 0.0
    %982 = vmatprep.subr.mxu0 0.0
    %983 = vmatpush2.msra.mxu0 0.0
    %984 = vmatprep.subr.mxu0 0.0
    %985 = vmatpush2.msra.mxu0 0.0
    %986 = vmatprep.subr.mxu0 0.0
    %987 = vmatpush2.msra.mxu0 0.0
    %988 = vmatprep.subr.mxu0 0.0
    %989 = vmatpush2.msra.mxu0 0.0
    %990 = vmatprep.subr.mxu0 0.0
    %991 = vmatpush2.msra.mxu0 0.0
    %992 = vmatprep.subr.mxu0 0.0
    %993 = vmatpush2.msra.mxu0 0.0
    %994 = vmatprep.subr.mxu0 0.0
    %995 = vmatpush2.msra.mxu0 0.0
    %996 = vmatprep.subr.mxu0 0.0
    %997 = vmatpush2.msra.mxu0 0.0
    %998 = vmatprep.mubr.f32.mxu0 0.0
    %v999 = vand.u32 %v528, 4294901760
    %v1000 = vsub.f32 %v528, %v999
    %v1001 = vand.u32 %v1000, 4294901760
    %1002 = vmatmul.mubr.f32.gmra.mxu0 %v1001
    %v1003 = vpop.f32.mrf.mxu0
    %v1004 = vadd.f32 %v898, %v1003
    %v1005 = vpop.f32.mrf.mxu0
    %1006 = vmatprep.mubr.f32.mxu0 0.0
    %v1007 = vand.u32 %v531, 4294901760
    %v1008 = vsub.f32 %v531, %v1007
    %v1009 = vand.u32 %v1008, 4294901760
    %1010 = vmatmul.mubr.f32.gmra.mxu0 %v1009
    %v1011 = vpop.f32.mrf.mxu0
    %v1012 = vadd.f32 %v905, %v1011
    %v1013 = vpop.f32.mrf.mxu0
    %1014 = vmatprep.mubr.f32.mxu0 0.0
    %v1015 = vand.u32 %v534, 4294901760
    %v1016 = vsub.f32 %v534, %v1015
    %v1017 = vand.u32 %v1016, 4294901760
    %1018 = vmatmul.mubr.f32.gmra.mxu0 %v1017
    %v1019 = vpop.f32.mrf.mxu0
    %v1020 = vadd.f32 %v912, %v1019
    %v1021 = vpop.f32.mrf.mxu0
    %1022 = vmatprep.mubr.f32.mxu0 0.0
    %v1023 = vand.u32 %v537, 4294901760
    %v1024 = vsub.f32 %v537, %v1023
    %v1025 = vand.u32 %v1024, 4294901760
    %1026 = vmatmul.mubr.f32.gmra.mxu0 %v1025
    %v1027 = vpop.f32.mrf.mxu0
    %v1028 = vadd.f32 %v919, %v1027
    %v1029 = vpop.f32.mrf.mxu0
    %1030 = vdwg.mxu0
    %1031 = vmatprep.subr.mxu0 0.0
    %1032 = vmatpush1.msra.mxu0 0.0
    %1033 = vmatprep.subr.mxu0 0.0
    %1034 = vmatpush1.msra.mxu0 0.0
    %1035 = vmatprep.subr.mxu0 0.0
    %1036 = vmatpush1.msra.mxu0 0.0
    %1037 = vmatprep.subr.mxu0 0.0
    %1038 = vmatpush1.msra.mxu0 0.0
    %1039 = vmatprep.subr.mxu0 0.0
    %v1040 = vand.u32 %v525, 4294901760
    %v1041 = vsub.f32 %v525, %v1040
    %v1042 = vand.u32 %v1041, 4294901760
    %1043 = vmatpush1.msra.mxu0 %v1042
    %1044 = vmatprep.subr.mxu0 0.0
    %v1045 = vand.u32 %v524, 4294901760
    %v1046 = vsub.f32 %v524, %v1045
    %v1047 = vand.u32 %v1046, 4294901760
    %1048 = vmatpush1.msra.mxu0 %v1047
    %1049 = vmatprep.subr.mxu0 0.0
    %v1050 = vand.u32 %v523, 4294901760
    %v1051 = vsub.f32 %v523, %v1050
    %v1052 = vand.u32 %v1051, 4294901760
    %1053 = vmatpush1.msra.mxu0 %v1052
    %1054 = vmatprep.subr.mxu0 0.0
    %v1055 = vand.u32 %v522, 4294901760
    %v1056 = vsub.f32 %v522, %v1055
    %v1057 = vand.u32 %v1056, 4294901760
    %1058 = vmatpush1.msra.mxu0 %v1057
    %1059 = vmatprep.subr.mxu0 0.0
    %v1060 = vand.u32 %v521, 4294901760
    %v1061 = vsub.f32 %v521, %v1060
    %v1062 = vand.u32 %v1061, 4294901760
    %1063 = vmatpush1.msra.mxu0 %v1062
    %1064 = vmatprep.subr.mxu0 0.0
    %v1065 = vand.u32 %v520, 4294901760
    %v1066 = vsub.f32 %v520, %v1065
    %v1067 = vand.u32 %v1066, 4294901760
    %1068 = vmatpush1.msra.mxu0 %v1067
    %1069 = vmatprep.subr.mxu0 0.0
    %v1070 = vand.u32 %v519, 4294901760
    %v1071 = vsub.f32 %v519, %v1070
    %v1072 = vand.u32 %v1071, 4294901760
    %1073 = vmatpush1.msra.mxu0 %v1072
    %1074 = vmatprep.subr.mxu0 0.0
    %v1075 = vand.u32 %v518, 4294901760
    %v1076 = vsub.f32 %v518, %v1075
    %v1077 = vand.u32 %v1076, 4294901760
    %1078 = vmatpush1.msra.mxu0 %v1077
    %1079 = vmatprep.subr.mxu0 0.0
    %v1080 = vand.u32 %v517, 4294901760
    %v1081 = vsub.f32 %v517, %v1080
    %v1082 = vand.u32 %v1081, 4294901760
    %1083 = vmatpush1.msra.mxu0 %v1082
    %1084 = vmatprep.subr.mxu0 0.0
    %v1085 = vand.u32 %v516, 4294901760
    %v1086 = vsub.f32 %v516, %v1085
    %v1087 = vand.u32 %v1086, 4294901760
    %1088 = vmatpush1.msra.mxu0 %v1087
    %1089 = vmatprep.subr.mxu0 0.0
    %v1090 = vand.u32 %v515, 4294901760
    %v1091 = vsub.f32 %v515, %v1090
    %v1092 = vand.u32 %v1091, 4294901760
    %1093 = vmatpush1.msra.mxu0 %v1092
    %1094 = vmatprep.subr.mxu0 0.0
    %v1095 = vand.u32 %v514, 4294901760
    %v1096 = vsub.f32 %v514, %v1095
    %v1097 = vand.u32 %v1096, 4294901760
    %1098 = vmatpush1.msra.mxu0 %v1097
    %1099 = vmatprep.subr.mxu0 0.0
    %1100 = vmatpush2.msra.mxu0 0.0
    %1101 = vmatprep.subr.mxu0 0.0
    %1102 = vmatpush2.msra.mxu0 0.0
    %1103 = vmatprep.subr.mxu0 0.0
    %1104 = vmatpush2.msra.mxu0 0.0
    %1105 = vmatprep.subr.mxu0 0.0
    %1106 = vmatpush2.msra.mxu0 0.0
    %1107 = vmatprep.subr.mxu0 0.0
    %1108 = vmatpush2.msra.mxu0 0.0
    %1109 = vmatprep.subr.mxu0 0.0
    %1110 = vmatpush2.msra.mxu0 0.0
    %1111 = vmatprep.subr.mxu0 0.0
    %1112 = vmatpush2.msra.mxu0 0.0
    %1113 = vmatprep.subr.mxu0 0.0
    %1114 = vmatpush2.msra.mxu0 0.0
    %1115 = vmatprep.subr.mxu0 0.0
    %1116 = vmatpush2.msra.mxu0 0.0
    %1117 = vmatprep.subr.mxu0 0.0
    %1118 = vmatpush2.msra.mxu0 0.0
    %1119 = vmatprep.subr.mxu0 0.0
    %1120 = vmatpush2.msra.mxu0 0.0
    %1121 = vmatprep.subr.mxu0 0.0
    %1122 = vmatpush2.msra.mxu0 0.0
    %1123 = vmatprep.subr.mxu0 0.0
    %1124 = vmatpush2.msra.mxu0 0.0
    %1125 = vmatprep.subr.mxu0 0.0
    %1126 = vmatpush2.msra.mxu0 0.0
    %1127 = vmatprep.subr.mxu0 0.0
    %1128 = vmatpush2.msra.mxu0 0.0
    %1129 = vmatprep.subr.mxu0 0.0
    %1130 = vmatpush2.msra.mxu0 0.0
    %1131 = vmatprep.mubr.f32.mxu0 0.0
    %v1132 = vand.u32 %v528, 4294901760
    %1133 = vmatmul.mubr.f32.gmra.mxu0 %v1132
    %v1134 = vpop.f32.mrf.mxu0
    %v1135 = vadd.f32 %v1004, %v1134
    %v1136 = vpop.f32.mrf.mxu0
    %1137 = vmatprep.mubr.f32.mxu0 0.0
    %v1138 = vand.u32 %v531, 4294901760
    %1139 = vmatmul.mubr.f32.gmra.mxu0 %v1138
    %v1140 = vpop.f32.mrf.mxu0
    %v1141 = vadd.f32 %v1012, %v1140
    %v1142 = vpop.f32.mrf.mxu0
    %1143 = vmatprep.mubr.f32.mxu0 0.0
    %v1144 = vand.u32 %v534, 4294901760
    %1145 = vmatmul.mubr.f32.gmra.mxu0 %v1144
    %v1146 = vpop.f32.mrf.mxu0
    %v1147 = vadd.f32 %v1020, %v1146
    %v1148 = vpop.f32.mrf.mxu0
    %1149 = vmatprep.mubr.f32.mxu0 0.0
    %v1150 = vand.u32 %v537, 4294901760
    %1151 = vmatmul.mubr.f32.gmra.mxu0 %v1150
    %v1152 = vpop.f32.mrf.mxu0
    %v1153 = vadd.f32 %v1028, %v1152
    %v1154 = vpop.f32.mrf.mxu0
    %1155 = vdwg.mxu0
    %1156 = vmatprep.subr.mxu0 0.0
    %1157 = vmatpush1.msra.mxu0 0.0
    %1158 = vmatprep.subr.mxu0 0.0
    %1159 = vmatpush1.msra.mxu0 0.0
    %1160 = vmatprep.subr.mxu0 0.0
    %1161 = vmatpush1.msra.mxu0 0.0
    %1162 = vmatprep.subr.mxu0 0.0
    %1163 = vmatpush1.msra.mxu0 0.0
    %1164 = vmatprep.subr.mxu0 0.0
    %v1165 = vand.u32 %v525, 4294901760
    %1166 = vmatpush1.msra.mxu0 %v1165
    %1167 = vmatprep.subr.mxu0 0.0
    %v1168 = vand.u32 %v524, 4294901760
    %1169 = vmatpush1.msra.mxu0 %v1168
    %1170 = vmatprep.subr.mxu0 0.0
    %v1171 = vand.u32 %v523, 4294901760
    %1172 = vmatpush1.msra.mxu0 %v1171
    %1173 = vmatprep.subr.mxu0 0.0
    %v1174 = vand.u32 %v522, 4294901760
    %1175 = vmatpush1.msra.mxu0 %v1174
    %1176 = vmatprep.subr.mxu0 0.0
    %v1177 = vand.u32 %v521, 4294901760
    %1178 = vmatpush1.msra.mxu0 %v1177
    %1179 = vmatprep.subr.mxu0 0.0
    %v1180 = vand.u32 %v520, 4294901760
    %1181 = vmatpush1.msra.mxu0 %v1180
    %1182 = vmatprep.subr.mxu0 0.0
    %v1183 = vand.u32 %v519, 4294901760
    %1184 = vmatpush1.msra.mxu0 %v1183
    %1185 = vmatprep.subr.mxu0 0.0
    %v1186 = vand.u32 %v518, 4294901760
    %1187 = vmatpush1.msra.mxu0 %v1186
    %1188 = vmatprep.subr.mxu0 0.0
    %v1189 = vand.u32 %v517, 4294901760
    %1190 = vmatpush1.msra.mxu0 %v1189
    %1191 = vmatprep.subr.mxu0 0.0
    %v1192 = vand.u32 %v516, 4294901760
    %1193 = vmatpush1.msra.mxu0 %v1192
    %1194 = vmatprep.subr.mxu0 0.0
    %v1195 = vand.u32 %v515, 4294901760
    %1196 = vmatpush1.msra.mxu0 %v1195
    %1197 = vmatprep.subr.mxu0 0.0
    %v1198 = vand.u32 %v514, 4294901760
    %1199 = vmatpush1.msra.mxu0 %v1198
    %1200 = vmatprep.subr.mxu0 0.0
    %1201 = vmatpush2.msra.mxu0 0.0
    %1202 = vmatprep.subr.mxu0 0.0
    %1203 = vmatpush2.msra.mxu0 0.0
    %1204 = vmatprep.subr.mxu0 0.0
    %1205 = vmatpush2.msra.mxu0 0.0
    %1206 = vmatprep.subr.mxu0 0.0
    %1207 = vmatpush2.msra.mxu0 0.0
    %1208 = vmatprep.subr.mxu0 0.0
    %1209 = vmatpush2.msra.mxu0 0.0
    %1210 = vmatprep.subr.mxu0 0.0
    %1211 = vmatpush2.msra.mxu0 0.0
    %1212 = vmatprep.subr.mxu0 0.0
    %1213 = vmatpush2.msra.mxu0 0.0
    %1214 = vmatprep.subr.mxu0 0.0
    %1215 = vmatpush2.msra.mxu0 0.0
    %1216 = vmatprep.subr.mxu0 0.0
    %1217 = vmatpush2.msra.mxu0 0.0
    %1218 = vmatprep.subr.mxu0 0.0
    %1219 = vmatpush2.msra.mxu0 0.0
    %1220 = vmatprep.subr.mxu0 0.0
    %1221 = vmatpush2.msra.mxu0 0.0
    %1222 = vmatprep.subr.mxu0 0.0
    %1223 = vmatpush2.msra.mxu0 0.0
    %1224 = vmatprep.subr.mxu0 0.0
    %1225 = vmatpush2.msra.mxu0 0.0
    %1226 = vmatprep.subr.mxu0 0.0
    %1227 = vmatpush2.msra.mxu0 0.0
    %1228 = vmatprep.subr.mxu0 0.0
    %1229 = vmatpush2.msra.mxu0 0.0
    %1230 = vmatprep.subr.mxu0 0.0
    %1231 = vmatpush2.msra.mxu0 0.0
    %1232 = vmatprep.mubr.f32.mxu0 0.0
    %v1233 = vand.u32 %v528, 4294901760
    %1234 = vmatmul.mubr.f32.gmra.mxu0 %v1233
    %v1235 = vpop.f32.mrf.mxu0
    %v1236 = vadd.f32 %v1135, %v1235
    %v1237 = vpop.f32.mrf.mxu0
    %1238 = vmatprep.mubr.f32.mxu0 0.0
    %v1239 = vand.u32 %v531, 4294901760
    %1240 = vmatmul.mubr.f32.gmra.mxu0 %v1239
    %v1241 = vpop.f32.mrf.mxu0
    %v1242 = vadd.f32 %v1141, %v1241
    %v1243 = vpop.f32.mrf.mxu0
    %1244 = vmatprep.mubr.f32.mxu0 0.0
    %v1245 = vand.u32 %v534, 4294901760
    %1246 = vmatmul.mubr.f32.gmra.mxu0 %v1245
    %v1247 = vpop.f32.mrf.mxu0
    %v1248 = vadd.f32 %v1147, %v1247
    %v1249 = vpop.f32.mrf.mxu0
    %1250 = vmatprep.mubr.f32.mxu0 0.0
    %v1251 = vand.u32 %v537, 4294901760
    %1252 = vmatmul.mubr.f32.gmra.mxu0 %v1251
    %v1253 = vpop.f32.mrf.mxu0
    %v1254 = vadd.f32 %v1153, %v1253
    %v1255 = vpop.f32.mrf.mxu0
    %1256 = vdwg.mxu0
    %v1257 = vmul.f32 %v1236, %v503
    %v1258 = vmul.f32 %v1242, %v503
    %v1259 = vmul.f32 %v1248, %v503
    %v1260 = vmul.f32 %v1254, %v503
    %v1261 = vld [vmem:[%s5] sm:$0xff]
    %v1262 = vld [vmem:[%s5 + $0x8] sm:$0xff]
    %v1263 = vld [vmem:[%s5 + $0x10] sm:$0xff]
    %v1264 = vld [vmem:[%s5 + $0x18] sm:$0xff]
    %v1265 = vld [vmem:[%s5 + $0x20] sm:$0xff]
    %v1266 = vld [vmem:[%s5 + $0x28] sm:$0xff]
    %v1267 = vld [vmem:[%s5 + $0x30] sm:$0xff]
    %v1268 = vld [vmem:[%s5 + $0x38] sm:$0xff]
    %v1269 = vld [vmem:[%s5 + $0x40] sm:$0xff]
    %v1270 = vld [vmem:[%s5 + $0x48] sm:$0xff]
    %v1271 = vld [vmem:[%s5 + $0x50] sm:$0xff]
    %v1272 = vld [vmem:[%s5 + $0x58] sm:$0xff]
    %v1274 = vsel %vm526, %v1257, 0
    %v1277 = vsel %vm526, %v1258, 0
    %v1280 = vsel %vm526, %v1259, 0
    %v1283 = vsel %vm526, %v1260, 0
    %1285 = vmatprep.subr.mxu0 0.0
    %1286 = vmatpush1.msra.mxu0 0.0
    %1287 = vmatprep.subr.mxu0 0.0
    %1288 = vmatpush1.msra.mxu0 0.0
    %1289 = vmatprep.subr.mxu0 0.0
    %1290 = vmatpush1.msra.mxu0 0.0
    %1291 = vmatprep.subr.mxu0 0.0
    %1292 = vmatpush1.msra.mxu0 0.0
    %1293 = vmatprep.subr.mxu0 0.0
    %v1294 = vand.u32 %v1272, 4294901760
    %1295 = vmatpush1.msra.mxu0 %v1294
    %1296 = vmatprep.subr.mxu0 0.0
    %v1297 = vand.u32 %v1271, 4294901760
    %1298 = vmatpush1.msra.mxu0 %v1297
    %1299 = vmatprep.subr.mxu0 0.0
    %v1300 = vand.u32 %v1270, 4294901760
    %1301 = vmatpush1.msra.mxu0 %v1300
    %1302 = vmatprep.subr.mxu0 0.0
    %v1303 = vand.u32 %v1269, 4294901760
    %1304 = vmatpush1.msra.mxu0 %v1303
    %1305 = vmatprep.subr.mxu0 0.0
    %v1306 = vand.u32 %v1268, 4294901760
    %1307 = vmatpush1.msra.mxu0 %v1306
    %1308 = vmatprep.subr.mxu0 0.0
    %v1309 = vand.u32 %v1267, 4294901760
    %1310 = vmatpush1.msra.mxu0 %v1309
    %1311 = vmatprep.subr.mxu0 0.0
    %v1312 = vand.u32 %v1266, 4294901760
    %1313 = vmatpush1.msra.mxu0 %v1312
    %1314 = vmatprep.subr.mxu0 0.0
    %v1315 = vand.u32 %v1265, 4294901760
    %1316 = vmatpush1.msra.mxu0 %v1315
    %1317 = vmatprep.subr.mxu0 0.0
    %v1318 = vand.u32 %v1264, 4294901760
    %1319 = vmatpush1.msra.mxu0 %v1318
    %1320 = vmatprep.subr.mxu0 0.0
    %v1321 = vand.u32 %v1263, 4294901760
    %1322 = vmatpush1.msra.mxu0 %v1321
    %1323 = vmatprep.subr.mxu0 0.0
    %v1324 = vand.u32 %v1262, 4294901760
    %1325 = vmatpush1.msra.mxu0 %v1324
    %1326 = vmatprep.subr.mxu0 0.0
    %v1327 = vand.u32 %v1261, 4294901760
    %1328 = vmatpush1.msra.mxu0 %v1327
    %1329 = vmatprep.subr.mxu0 0.0
    %1330 = vmatpush2.msra.mxu0 0.0
    %1331 = vmatprep.subr.mxu0 0.0
    %1332 = vmatpush2.msra.mxu0 0.0
    %1333 = vmatprep.subr.mxu0 0.0
    %1334 = vmatpush2.msra.mxu0 0.0
    %1335 = vmatprep.subr.mxu0 0.0
    %1336 = vmatpush2.msra.mxu0 0.0
    %1337 = vmatprep.subr.mxu0 0.0
    %1338 = vmatpush2.msra.mxu0 0.0
    %1339 = vmatprep.subr.mxu0 0.0
    %1340 = vmatpush2.msra.mxu0 0.0
    %1341 = vmatprep.subr.mxu0 0.0
    %1342 = vmatpush2.msra.mxu0 0.0
    %1343 = vmatprep.subr.mxu0 0.0
    %1344 = vmatpush2.msra.mxu0 0.0
    %1345 = vmatprep.subr.mxu0 0.0
    %1346 = vmatpush2.msra.mxu0 0.0
    %1347 = vmatprep.subr.mxu0 0.0
    %1348 = vmatpush2.msra.mxu0 0.0
    %1349 = vmatprep.subr.mxu0 0.0
    %1350 = vmatpush2.msra.mxu0 0.0
    %1351 = vmatprep.subr.mxu0 0.0
    %1352 = vmatpush2.msra.mxu0 0.0
    %1353 = vmatprep.subr.mxu0 0.0
    %1354 = vmatpush2.msra.mxu0 0.0
    %1355 = vmatprep.subr.mxu0 0.0
    %1356 = vmatpush2.msra.mxu0 0.0
    %1357 = vmatprep.subr.mxu0 0.0
    %1358 = vmatpush2.msra.mxu0 0.0
    %1359 = vmatprep.subr.mxu0 0.0
    %1360 = vmatpush2.msra.mxu0 0.0
    %1361 = vmatprep.mubr.f32.mxu0 0.0
    %v1362 = vand.u32 %v1274, 4294901760
    %v1363 = vsub.f32 %v1274, %v1362
    %v1364 = vand.u32 %v1363, 4294901760
    %v1365 = vsub.f32 %v1363, %v1364
    %v1366 = vand.u32 %v1365, 4294901760
    %1367 = vmatmul.mubr.f32.gmra.mxu0 %v1366
    %v1368 = vpop.f32.mrf.mxu0
    %v1369 = vadd.f32 0.0, %v1368
    %v1370 = vpop.f32.mrf.mxu0
    %1371 = vmatprep.mubr.f32.mxu0 0.0
    %v1372 = vand.u32 %v1277, 4294901760
    %v1373 = vsub.f32 %v1277, %v1372
    %v1374 = vand.u32 %v1373, 4294901760
    %v1375 = vsub.f32 %v1373, %v1374
    %v1376 = vand.u32 %v1375, 4294901760
    %1377 = vmatmul.mubr.f32.gmra.mxu0 %v1376
    %v1378 = vpop.f32.mrf.mxu0
    %v1379 = vadd.f32 0.0, %v1378
    %v1380 = vpop.f32.mrf.mxu0
    %1381 = vmatprep.mubr.f32.mxu0 0.0
    %v1382 = vand.u32 %v1280, 4294901760
    %v1383 = vsub.f32 %v1280, %v1382
    %v1384 = vand.u32 %v1383, 4294901760
    %v1385 = vsub.f32 %v1383, %v1384
    %v1386 = vand.u32 %v1385, 4294901760
    %1387 = vmatmul.mubr.f32.gmra.mxu0 %v1386
    %v1388 = vpop.f32.mrf.mxu0
    %v1389 = vadd.f32 0.0, %v1388
    %v1390 = vpop.f32.mrf.mxu0
    %1391 = vmatprep.mubr.f32.mxu0 0.0
    %v1392 = vand.u32 %v1283, 4294901760
    %v1393 = vsub.f32 %v1283, %v1392
    %v1394 = vand.u32 %v1393, 4294901760
    %v1395 = vsub.f32 %v1393, %v1394
    %v1396 = vand.u32 %v1395, 4294901760
    %1397 = vmatmul.mubr.f32.gmra.mxu0 %v1396
    %v1398 = vpop.f32.mrf.mxu0
    %v1399 = vadd.f32 0.0, %v1398
    %v1400 = vpop.f32.mrf.mxu0
    %1401 = vdwg.mxu0
    %1402 = vmatprep.subr.mxu0 0.0
    %1403 = vmatpush1.msra.mxu0 0.0
    %1404 = vmatprep.subr.mxu0 0.0
    %1405 = vmatpush1.msra.mxu0 0.0
    %1406 = vmatprep.subr.mxu0 0.0
    %1407 = vmatpush1.msra.mxu0 0.0
    %1408 = vmatprep.subr.mxu0 0.0
    %1409 = vmatpush1.msra.mxu0 0.0
    %1410 = vmatprep.subr.mxu0 0.0
    %v1411 = vand.u32 %v1272, 4294901760
    %v1412 = vsub.f32 %v1272, %v1411
    %v1413 = vand.u32 %v1412, 4294901760
    %v1414 = vsub.f32 %v1412, %v1413
    %v1415 = vand.u32 %v1414, 4294901760
    %1416 = vmatpush1.msra.mxu0 %v1415
    %1417 = vmatprep.subr.mxu0 0.0
    %v1418 = vand.u32 %v1271, 4294901760
    %v1419 = vsub.f32 %v1271, %v1418
    %v1420 = vand.u32 %v1419, 4294901760
    %v1421 = vsub.f32 %v1419, %v1420
    %v1422 = vand.u32 %v1421, 4294901760
    %1423 = vmatpush1.msra.mxu0 %v1422
    %1424 = vmatprep.subr.mxu0 0.0
    %v1425 = vand.u32 %v1270, 4294901760
    %v1426 = vsub.f32 %v1270, %v1425
    %v1427 = vand.u32 %v1426, 4294901760
    %v1428 = vsub.f32 %v1426, %v1427
    %v1429 = vand.u32 %v1428, 4294901760
    %1430 = vmatpush1.msra.mxu0 %v1429
    %1431 = vmatprep.subr.mxu0 0.0
    %v1432 = vand.u32 %v1269, 4294901760
    %v1433 = vsub.f32 %v1269, %v1432
    %v1434 = vand.u32 %v1433, 4294901760
    %v1435 = vsub.f32 %v1433, %v1434
    %v1436 = vand.u32 %v1435, 4294901760
    %1437 = vmatpush1.msra.mxu0 %v1436
    %1438 = vmatprep.subr.mxu0 0.0
    %v1439 = vand.u32 %v1268, 4294901760
    %v1440 = vsub.f32 %v1268, %v1439
    %v1441 = vand.u32 %v1440, 4294901760
    %v1442 = vsub.f32 %v1440, %v1441
    %v1443 = vand.u32 %v1442, 4294901760
    %1444 = vmatpush1.msra.mxu0 %v1443
    %1445 = vmatprep.subr.mxu0 0.0
    %v1446 = vand.u32 %v1267, 4294901760
    %v1447 = vsub.f32 %v1267, %v1446
    %v1448 = vand.u32 %v1447, 4294901760
    %v1449 = vsub.f32 %v1447, %v1448
    %v1450 = vand.u32 %v1449, 4294901760
    %1451 = vmatpush1.msra.mxu0 %v1450
    %1452 = vmatprep.subr.mxu0 0.0
    %v1453 = vand.u32 %v1266, 4294901760
    %v1454 = vsub.f32 %v1266, %v1453
    %v1455 = vand.u32 %v1454, 4294901760
    %v1456 = vsub.f32 %v1454, %v1455
    %v1457 = vand.u32 %v1456, 4294901760
    %1458 = vmatpush1.msra.mxu0 %v1457
    %1459 = vmatprep.subr.mxu0 0.0
    %v1460 = vand.u32 %v1265, 4294901760
    %v1461 = vsub.f32 %v1265, %v1460
    %v1462 = vand.u32 %v1461, 4294901760
    %v1463 = vsub.f32 %v1461, %v1462
    %v1464 = vand.u32 %v1463, 4294901760
    %1465 = vmatpush1.msra.mxu0 %v1464
    %1466 = vmatprep.subr.mxu0 0.0
    %v1467 = vand.u32 %v1264, 4294901760
    %v1468 = vsub.f32 %v1264, %v1467
    %v1469 = vand.u32 %v1468, 4294901760
    %v1470 = vsub.f32 %v1468, %v1469
    %v1471 = vand.u32 %v1470, 4294901760
    %1472 = vmatpush1.msra.mxu0 %v1471
    %1473 = vmatprep.subr.mxu0 0.0
    %v1474 = vand.u32 %v1263, 4294901760
    %v1475 = vsub.f32 %v1263, %v1474
    %v1476 = vand.u32 %v1475, 4294901760
    %v1477 = vsub.f32 %v1475, %v1476
    %v1478 = vand.u32 %v1477, 4294901760
    %1479 = vmatpush1.msra.mxu0 %v1478
    %1480 = vmatprep.subr.mxu0 0.0
    %v1481 = vand.u32 %v1262, 4294901760
    %v1482 = vsub.f32 %v1262, %v1481
    %v1483 = vand.u32 %v1482, 4294901760
    %v1484 = vsub.f32 %v1482, %v1483
    %v1485 = vand.u32 %v1484, 4294901760
    %1486 = vmatpush1.msra.mxu0 %v1485
    %1487 = vmatprep.subr.mxu0 0.0
    %v1488 = vand.u32 %v1261, 4294901760
    %v1489 = vsub.f32 %v1261, %v1488
    %v1490 = vand.u32 %v1489, 4294901760
    %v1491 = vsub.f32 %v1489, %v1490
    %v1492 = vand.u32 %v1491, 4294901760
    %1493 = vmatpush1.msra.mxu0 %v1492
    %1494 = vmatprep.subr.mxu0 0.0
    %1495 = vmatpush2.msra.mxu0 0.0
    %1496 = vmatprep.subr.mxu0 0.0
    %1497 = vmatpush2.msra.mxu0 0.0
    %1498 = vmatprep.subr.mxu0 0.0
    %1499 = vmatpush2.msra.mxu0 0.0
    %1500 = vmatprep.subr.mxu0 0.0
    %1501 = vmatpush2.msra.mxu0 0.0
    %1502 = vmatprep.subr.mxu0 0.0
    %1503 = vmatpush2.msra.mxu0 0.0
    %1504 = vmatprep.subr.mxu0 0.0
    %1505 = vmatpush2.msra.mxu0 0.0
    %1506 = vmatprep.subr.mxu0 0.0
    %1507 = vmatpush2.msra.mxu0 0.0
    %1508 = vmatprep.subr.mxu0 0.0
    %1509 = vmatpush2.msra.mxu0 0.0
    %1510 = vmatprep.subr.mxu0 0.0
    %1511 = vmatpush2.msra.mxu0 0.0
    %1512 = vmatprep.subr.mxu0 0.0
    %1513 = vmatpush2.msra.mxu0 0.0
    %1514 = vmatprep.subr.mxu0 0.0
    %1515 = vmatpush2.msra.mxu0 0.0
    %1516 = vmatprep.subr.mxu0 0.0
    %1517 = vmatpush2.msra.mxu0 0.0
    %1518 = vmatprep.subr.mxu0 0.0
    %1519 = vmatpush2.msra.mxu0 0.0
    %1520 = vmatprep.subr.mxu0 0.0
    %1521 = vmatpush2.msra.mxu0 0.0
    %1522 = vmatprep.subr.mxu0 0.0
    %1523 = vmatpush2.msra.mxu0 0.0
    %1524 = vmatprep.subr.mxu0 0.0
    %1525 = vmatpush2.msra.mxu0 0.0
    %1526 = vmatprep.mubr.f32.mxu0 0.0
    %v1527 = vand.u32 %v1274, 4294901760
    %1528 = vmatmul.mubr.f32.gmra.mxu0 %v1527
    %v1529 = vpop.f32.mrf.mxu0
    %v1530 = vadd.f32 %v1369, %v1529
    %v1531 = vpop.f32.mrf.mxu0
    %1532 = vmatprep.mubr.f32.mxu0 0.0
    %v1533 = vand.u32 %v1277, 4294901760
    %1534 = vmatmul.mubr.f32.gmra.mxu0 %v1533
    %v1535 = vpop.f32.mrf.mxu0
    %v1536 = vadd.f32 %v1379, %v1535
    %v1537 = vpop.f32.mrf.mxu0
    %1538 = vmatprep.mubr.f32.mxu0 0.0
    %v1539 = vand.u32 %v1280, 4294901760
    %1540 = vmatmul.mubr.f32.gmra.mxu0 %v1539
    %v1541 = vpop.f32.mrf.mxu0
    %v1542 = vadd.f32 %v1389, %v1541
    %v1543 = vpop.f32.mrf.mxu0
    %1544 = vmatprep.mubr.f32.mxu0 0.0
    %v1545 = vand.u32 %v1283, 4294901760
    %1546 = vmatmul.mubr.f32.gmra.mxu0 %v1545
    %v1547 = vpop.f32.mrf.mxu0
    %v1548 = vadd.f32 %v1399, %v1547
    %v1549 = vpop.f32.mrf.mxu0
    %1550 = vdwg.mxu0
    %1551 = vmatprep.subr.mxu0 0.0
    %1552 = vmatpush1.msra.mxu0 0.0
    %1553 = vmatprep.subr.mxu0 0.0
    %1554 = vmatpush1.msra.mxu0 0.0
    %1555 = vmatprep.subr.mxu0 0.0
    %1556 = vmatpush1.msra.mxu0 0.0
    %1557 = vmatprep.subr.mxu0 0.0
    %1558 = vmatpush1.msra.mxu0 0.0
    %1559 = vmatprep.subr.mxu0 0.0
    %v1560 = vand.u32 %v1272, 4294901760
    %v1561 = vsub.f32 %v1272, %v1560
    %1562 = vmatpush1.msra.mxu0 %v1561
    %1563 = vmatprep.subr.mxu0 0.0
    %v1564 = vand.u32 %v1271, 4294901760
    %v1565 = vsub.f32 %v1271, %v1564
    %1566 = vmatpush1.msra.mxu0 %v1565
    %1567 = vmatprep.subr.mxu0 0.0
    %v1568 = vand.u32 %v1270, 4294901760
    %v1569 = vsub.f32 %v1270, %v1568
    %1570 = vmatpush1.msra.mxu0 %v1569
    %1571 = vmatprep.subr.mxu0 0.0
    %v1572 = vand.u32 %v1269, 4294901760
    %v1573 = vsub.f32 %v1269, %v1572
    %1574 = vmatpush1.msra.mxu0 %v1573
    %1575 = vmatprep.subr.mxu0 0.0
    %v1576 = vand.u32 %v1268, 4294901760
    %v1577 = vsub.f32 %v1268, %v1576
    %1578 = vmatpush1.msra.mxu0 %v1577
    %1579 = vmatprep.subr.mxu0 0.0
    %v1580 = vand.u32 %v1267, 4294901760
    %v1581 = vsub.f32 %v1267, %v1580
    %1582 = vmatpush1.msra.mxu0 %v1581
    %1583 = vmatprep.subr.mxu0 0.0
    %v1584 = vand.u32 %v1266, 4294901760
    %v1585 = vsub.f32 %v1266, %v1584
    %1586 = vmatpush1.msra.mxu0 %v1585
    %1587 = vmatprep.subr.mxu0 0.0
    %v1588 = vand.u32 %v1265, 4294901760
    %v1589 = vsub.f32 %v1265, %v1588
    %1590 = vmatpush1.msra.mxu0 %v1589
    %1591 = vmatprep.subr.mxu0 0.0
    %v1592 = vand.u32 %v1264, 4294901760
    %v1593 = vsub.f32 %v1264, %v1592
    %1594 = vmatpush1.msra.mxu0 %v1593
    %1595 = vmatprep.subr.mxu0 0.0
    %v1596 = vand.u32 %v1263, 4294901760
    %v1597 = vsub.f32 %v1263, %v1596
    %1598 = vmatpush1.msra.mxu0 %v1597
    %1599 = vmatprep.subr.mxu0 0.0
    %v1600 = vand.u32 %v1262, 4294901760
    %v1601 = vsub.f32 %v1262, %v1600
    %1602 = vmatpush1.msra.mxu0 %v1601
    %1603 = vmatprep.subr.mxu0 0.0
    %v1604 = vand.u32 %v1261, 4294901760
    %v1605 = vsub.f32 %v1261, %v1604
    %1606 = vmatpush1.msra.mxu0 %v1605
    %1607 = vmatprep.subr.mxu0 0.0
    %1608 = vmatpush2.msra.mxu0 0.0
    %1609 = vmatprep.subr.mxu0 0.0
    %1610 = vmatpush2.msra.mxu0 0.0
    %1611 = vmatprep.subr.mxu0 0.0
    %1612 = vmatpush2.msra.mxu0 0.0
    %1613 = vmatprep.subr.mxu0 0.0
    %1614 = vmatpush2.msra.mxu0 0.0
    %1615 = vmatprep.subr.mxu0 0.0
    %1616 = vmatpush2.msra.mxu0 0.0
    %1617 = vmatprep.subr.mxu0 0.0
    %1618 = vmatpush2.msra.mxu0 0.0
    %1619 = vmatprep.subr.mxu0 0.0
    %1620 = vmatpush2.msra.mxu0 0.0
    %1621 = vmatprep.subr.mxu0 0.0
    %1622 = vmatpush2.msra.mxu0 0.0
    %1623 = vmatprep.subr.mxu0 0.0
    %1624 = vmatpush2.msra.mxu0 0.0
    %1625 = vmatprep.subr.mxu0 0.0
    %1626 = vmatpush2.msra.mxu0 0.0
    %1627 = vmatprep.subr.mxu0 0.0
    %1628 = vmatpush2.msra.mxu0 0.0
    %1629 = vmatprep.subr.mxu0 0.0
    %1630 = vmatpush2.msra.mxu0 0.0
    %1631 = vmatprep.subr.mxu0 0.0
    %1632 = vmatpush2.msra.mxu0 0.0
    %1633 = vmatprep.subr.mxu0 0.0
    %1634 = vmatpush2.msra.mxu0 0.0
    %1635 = vmatprep.subr.mxu0 0.0
    %1636 = vmatpush2.msra.mxu0 0.0
    %1637 = vmatprep.subr.mxu0 0.0
    %1638 = vmatpush2.msra.mxu0 0.0
    %1639 = vmatprep.mubr.f32.mxu0 0.0
    %v1640 = vand.u32 %v1274, 4294901760
    %v1641 = vsub.f32 %v1274, %v1640
    %1642 = vmatmul.mubr.f32.gmra.mxu0 %v1641
    %v1643 = vpop.f32.mrf.mxu0
    %v1644 = vadd.f32 %v1530, %v1643
    %v1645 = vpop.f32.mrf.mxu0
    %1646 = vmatprep.mubr.f32.mxu0 0.0
    %v1647 = vand.u32 %v1277, 4294901760
    %v1648 = vsub.f32 %v1277, %v1647
    %1649 = vmatmul.mubr.f32.gmra.mxu0 %v1648
    %v1650 = vpop.f32.mrf.mxu0
    %v1651 = vadd.f32 %v1536, %v1650
    %v1652 = vpop.f32.mrf.mxu0
    %1653 = vmatprep.mubr.f32.mxu0 0.0
    %v1654 = vand.u32 %v1280, 4294901760
    %v1655 = vsub.f32 %v1280, %v1654
    %1656 = vmatmul.mubr.f32.gmra.mxu0 %v1655
    %v1657 = vpop.f32.mrf.mxu0
    %v1658 = vadd.f32 %v1542, %v1657
    %v1659 = vpop.f32.mrf.mxu0
    %1660 = vmatprep.mubr.f32.mxu0 0.0
    %v1661 = vand.u32 %v1283, 4294901760
    %v1662 = vsub.f32 %v1283, %v1661
    %1663 = vmatmul.mubr.f32.gmra.mxu0 %v1662
    %v1664 = vpop.f32.mrf.mxu0
    %v1665 = vadd.f32 %v1548, %v1664
    %v1666 = vpop.f32.mrf.mxu0
    %1667 = vdwg.mxu0
    %1668 = vmatprep.subr.mxu0 0.0
    %1669 = vmatpush1.msra.mxu0 0.0
    %1670 = vmatprep.subr.mxu0 0.0
    %1671 = vmatpush1.msra.mxu0 0.0
    %1672 = vmatprep.subr.mxu0 0.0
    %1673 = vmatpush1.msra.mxu0 0.0
    %1674 = vmatprep.subr.mxu0 0.0
    %1675 = vmatpush1.msra.mxu0 0.0
    %1676 = vmatprep.subr.mxu0 0.0
    %v1677 = vand.u32 %v1272, 4294901760
    %1678 = vmatpush1.msra.mxu0 %v1677
    %1679 = vmatprep.subr.mxu0 0.0
    %v1680 = vand.u32 %v1271, 4294901760
    %1681 = vmatpush1.msra.mxu0 %v1680
    %1682 = vmatprep.subr.mxu0 0.0
    %v1683 = vand.u32 %v1270, 4294901760
    %1684 = vmatpush1.msra.mxu0 %v1683
    %1685 = vmatprep.subr.mxu0 0.0
    %v1686 = vand.u32 %v1269, 4294901760
    %1687 = vmatpush1.msra.mxu0 %v1686
    %1688 = vmatprep.subr.mxu0 0.0
    %v1689 = vand.u32 %v1268, 4294901760
    %1690 = vmatpush1.msra.mxu0 %v1689
    %1691 = vmatprep.subr.mxu0 0.0
    %v1692 = vand.u32 %v1267, 4294901760
    %1693 = vmatpush1.msra.mxu0 %v1692
    %1694 = vmatprep.subr.mxu0 0.0
    %v1695 = vand.u32 %v1266, 4294901760
    %1696 = vmatpush1.msra.mxu0 %v1695
    %1697 = vmatprep.subr.mxu0 0.0
    %v1698 = vand.u32 %v1265, 4294901760
    %1699 = vmatpush1.msra.mxu0 %v1698
    %1700 = vmatprep.subr.mxu0 0.0
    %v1701 = vand.u32 %v1264, 4294901760
    %1702 = vmatpush1.msra.mxu0 %v1701
    %1703 = vmatprep.subr.mxu0 0.0
    %v1704 = vand.u32 %v1263, 4294901760
    %1705 = vmatpush1.msra.mxu0 %v1704
    %1706 = vmatprep.subr.mxu0 0.0
    %v1707 = vand.u32 %v1262, 4294901760
    %1708 = vmatpush1.msra.mxu0 %v1707
    %1709 = vmatprep.subr.mxu0 0.0
    %v1710 = vand.u32 %v1261, 4294901760
    %1711 = vmatpush1.msra.mxu0 %v1710
    %1712 = vmatprep.subr.mxu0 0.0
    %1713 = vmatpush2.msra.mxu0 0.0
    %1714 = vmatprep.subr.mxu0 0.0
    %1715 = vmatpush2.msra.mxu0 0.0
    %1716 = vmatprep.subr.mxu0 0.0
    %1717 = vmatpush2.msra.mxu0 0.0
    %1718 = vmatprep.subr.mxu0 0.0
    %1719 = vmatpush2.msra.mxu0 0.0
    %1720 = vmatprep.subr.mxu0 0.0
    %1721 = vmatpush2.msra.mxu0 0.0
    %1722 = vmatprep.subr.mxu0 0.0
    %1723 = vmatpush2.msra.mxu0 0.0
    %1724 = vmatprep.subr.mxu0 0.0
    %1725 = vmatpush2.msra.mxu0 0.0
    %1726 = vmatprep.subr.mxu0 0.0
    %1727 = vmatpush2.msra.mxu0 0.0
    %1728 = vmatprep.subr.mxu0 0.0
    %1729 = vmatpush2.msra.mxu0 0.0
    %1730 = vmatprep.subr.mxu0 0.0
    %1731 = vmatpush2.msra.mxu0 0.0
    %1732 = vmatprep.subr.mxu0 0.0
    %1733 = vmatpush2.msra.mxu0 0.0
    %1734 = vmatprep.subr.mxu0 0.0
    %1735 = vmatpush2.msra.mxu0 0.0
    %1736 = vmatprep.subr.mxu0 0.0
    %1737 = vmatpush2.msra.mxu0 0.0
    %1738 = vmatprep.subr.mxu0 0.0
    %1739 = vmatpush2.msra.mxu0 0.0
    %1740 = vmatprep.subr.mxu0 0.0
    %1741 = vmatpush2.msra.mxu0 0.0
    %1742 = vmatprep.subr.mxu0 0.0
    %1743 = vmatpush2.msra.mxu0 0.0
    %1744 = vmatprep.mubr.f32.mxu0 0.0
    %v1745 = vand.u32 %v1274, 4294901760
    %v1746 = vsub.f32 %v1274, %v1745
    %v1747 = vand.u32 %v1746, 4294901760
    %1748 = vmatmul.mubr.f32.gmra.mxu0 %v1747
    %v1749 = vpop.f32.mrf.mxu0
    %v1750 = vadd.f32 %v1644, %v1749
    %v1751 = vpop.f32.mrf.mxu0
    %1752 = vmatprep.mubr.f32.mxu0 0.0
    %v1753 = vand.u32 %v1277, 4294901760
    %v1754 = vsub.f32 %v1277, %v1753
    %v1755 = vand.u32 %v1754, 4294901760
    %1756 = vmatmul.mubr.f32.gmra.mxu0 %v1755
    %v1757 = vpop.f32.mrf.mxu0
    %v1758 = vadd.f32 %v1651, %v1757
    %v1759 = vpop.f32.mrf.mxu0
    %1760 = vmatprep.mubr.f32.mxu0 0.0
    %v1761 = vand.u32 %v1280, 4294901760
    %v1762 = vsub.f32 %v1280, %v1761
    %v1763 = vand.u32 %v1762, 4294901760
    %1764 = vmatmul.mubr.f32.gmra.mxu0 %v1763
    %v1765 = vpop.f32.mrf.mxu0
    %v1766 = vadd.f32 %v1658, %v1765
    %v1767 = vpop.f32.mrf.mxu0
    %1768 = vmatprep.mubr.f32.mxu0 0.0
    %v1769 = vand.u32 %v1283, 4294901760
    %v1770 = vsub.f32 %v1283, %v1769
    %v1771 = vand.u32 %v1770, 4294901760
    %1772 = vmatmul.mubr.f32.gmra.mxu0 %v1771
    %v1773 = vpop.f32.mrf.mxu0
    %v1774 = vadd.f32 %v1665, %v1773
    %v1775 = vpop.f32.mrf.mxu0
    %1776 = vdwg.mxu0
    %1777 = vmatprep.subr.mxu0 0.0
    %1778 = vmatpush1.msra.mxu0 0.0
    %1779 = vmatprep.subr.mxu0 0.0
    %1780 = vmatpush1.msra.mxu0 0.0
    %1781 = vmatprep.subr.mxu0 0.0
    %1782 = vmatpush1.msra.mxu0 0.0
    %1783 = vmatprep.subr.mxu0 0.0
    %1784 = vmatpush1.msra.mxu0 0.0
    %1785 = vmatprep.subr.mxu0 0.0
    %v1786 = vand.u32 %v1272, 4294901760
    %v1787 = vsub.f32 %v1272, %v1786
    %v1788 = vand.u32 %v1787, 4294901760
    %1789 = vmatpush1.msra.mxu0 %v1788
    %1790 = vmatprep.subr.mxu0 0.0
    %v1791 = vand.u32 %v1271, 4294901760
    %v1792 = vsub.f32 %v1271, %v1791
    %v1793 = vand.u32 %v1792, 4294901760
    %1794 = vmatpush1.msra.mxu0 %v1793
    %1795 = vmatprep.subr.mxu0 0.0
    %v1796 = vand.u32 %v1270, 4294901760
    %v1797 = vsub.f32 %v1270, %v1796
    %v1798 = vand.u32 %v1797, 4294901760
    %1799 = vmatpush1.msra.mxu0 %v1798
    %1800 = vmatprep.subr.mxu0 0.0
    %v1801 = vand.u32 %v1269, 4294901760
    %v1802 = vsub.f32 %v1269, %v1801
    %v1803 = vand.u32 %v1802, 4294901760
    %1804 = vmatpush1.msra.mxu0 %v1803
    %1805 = vmatprep.subr.mxu0 0.0
    %v1806 = vand.u32 %v1268, 4294901760
    %v1807 = vsub.f32 %v1268, %v1806
    %v1808 = vand.u32 %v1807, 4294901760
    %1809 = vmatpush1.msra.mxu0 %v1808
    %1810 = vmatprep.subr.mxu0 0.0
    %v1811 = vand.u32 %v1267, 4294901760
    %v1812 = vsub.f32 %v1267, %v1811
    %v1813 = vand.u32 %v1812, 4294901760
    %1814 = vmatpush1.msra.mxu0 %v1813
    %1815 = vmatprep.subr.mxu0 0.0
    %v1816 = vand.u32 %v1266, 4294901760
    %v1817 = vsub.f32 %v1266, %v1816
    %v1818 = vand.u32 %v1817, 4294901760
    %1819 = vmatpush1.msra.mxu0 %v1818
    %1820 = vmatprep.subr.mxu0 0.0
    %v1821 = vand.u32 %v1265, 4294901760
    %v1822 = vsub.f32 %v1265, %v1821
    %v1823 = vand.u32 %v1822, 4294901760
    %1824 = vmatpush1.msra.mxu0 %v1823
    %1825 = vmatprep.subr.mxu0 0.0
    %v1826 = vand.u32 %v1264, 4294901760
    %v1827 = vsub.f32 %v1264, %v1826
    %v1828 = vand.u32 %v1827, 4294901760
    %1829 = vmatpush1.msra.mxu0 %v1828
    %1830 = vmatprep.subr.mxu0 0.0
    %v1831 = vand.u32 %v1263, 4294901760
    %v1832 = vsub.f32 %v1263, %v1831
    %v1833 = vand.u32 %v1832, 4294901760
    %1834 = vmatpush1.msra.mxu0 %v1833
    %1835 = vmatprep.subr.mxu0 0.0
    %v1836 = vand.u32 %v1262, 4294901760
    %v1837 = vsub.f32 %v1262, %v1836
    %v1838 = vand.u32 %v1837, 4294901760
    %1839 = vmatpush1.msra.mxu0 %v1838
    %1840 = vmatprep.subr.mxu0 0.0
    %v1841 = vand.u32 %v1261, 4294901760
    %v1842 = vsub.f32 %v1261, %v1841
    %v1843 = vand.u32 %v1842, 4294901760
    %1844 = vmatpush1.msra.mxu0 %v1843
    %1845 = vmatprep.subr.mxu0 0.0
    %1846 = vmatpush2.msra.mxu0 0.0
    %1847 = vmatprep.subr.mxu0 0.0
    %1848 = vmatpush2.msra.mxu0 0.0
    %1849 = vmatprep.subr.mxu0 0.0
    %1850 = vmatpush2.msra.mxu0 0.0
    %1851 = vmatprep.subr.mxu0 0.0
    %1852 = vmatpush2.msra.mxu0 0.0
    %1853 = vmatprep.subr.mxu0 0.0
    %1854 = vmatpush2.msra.mxu0 0.0
    %1855 = vmatprep.subr.mxu0 0.0
    %1856 = vmatpush2.msra.mxu0 0.0
    %1857 = vmatprep.subr.mxu0 0.0
    %1858 = vmatpush2.msra.mxu0 0.0
    %1859 = vmatprep.subr.mxu0 0.0
    %1860 = vmatpush2.msra.mxu0 0.0
    %1861 = vmatprep.subr.mxu0 0.0
    %1862 = vmatpush2.msra.mxu0 0.0
    %1863 = vmatprep.subr.mxu0 0.0
    %1864 = vmatpush2.msra.mxu0 0.0
    %1865 = vmatprep.subr.mxu0 0.0
    %1866 = vmatpush2.msra.mxu0 0.0
    %1867 = vmatprep.subr.mxu0 0.0
    %1868 = vmatpush2.msra.mxu0 0.0
    %1869 = vmatprep.subr.mxu0 0.0
    %1870 = vmatpush2.msra.mxu0 0.0
    %1871 = vmatprep.subr.mxu0 0.0
    %1872 = vmatpush2.msra.mxu0 0.0
    %1873 = vmatprep.subr.mxu0 0.0
    %1874 = vmatpush2.msra.mxu0 0.0
    %1875 = vmatprep.subr.mxu0 0.0
    %1876 = vmatpush2.msra.mxu0 0.0
    %1877 = vmatprep.mubr.f32.mxu0 0.0
    %v1878 = vand.u32 %v1274, 4294901760
    %1879 = vmatmul.mubr.f32.gmra.mxu0 %v1878
    %v1880 = vpop.f32.mrf.mxu0
    %v1881 = vadd.f32 %v1750, %v1880
    %v1882 = vpop.f32.mrf.mxu0
    %1883 = vmatprep.mubr.f32.mxu0 0.0
    %v1884 = vand.u32 %v1277, 4294901760
    %1885 = vmatmul.mubr.f32.gmra.mxu0 %v1884
    %v1886 = vpop.f32.mrf.mxu0
    %v1887 = vadd.f32 %v1758, %v1886
    %v1888 = vpop.f32.mrf.mxu0
    %1889 = vmatprep.mubr.f32.mxu0 0.0
    %v1890 = vand.u32 %v1280, 4294901760
    %1891 = vmatmul.mubr.f32.gmra.mxu0 %v1890
    %v1892 = vpop.f32.mrf.mxu0
    %v1893 = vadd.f32 %v1766, %v1892
    %v1894 = vpop.f32.mrf.mxu0
    %1895 = vmatprep.mubr.f32.mxu0 0.0
    %v1896 = vand.u32 %v1283, 4294901760
    %1897 = vmatmul.mubr.f32.gmra.mxu0 %v1896
    %v1898 = vpop.f32.mrf.mxu0
    %v1899 = vadd.f32 %v1774, %v1898
    %v1900 = vpop.f32.mrf.mxu0
    %1901 = vdwg.mxu0
    %1902 = vmatprep.subr.mxu0 0.0
    %1903 = vmatpush1.msra.mxu0 0.0
    %1904 = vmatprep.subr.mxu0 0.0
    %1905 = vmatpush1.msra.mxu0 0.0
    %1906 = vmatprep.subr.mxu0 0.0
    %1907 = vmatpush1.msra.mxu0 0.0
    %1908 = vmatprep.subr.mxu0 0.0
    %1909 = vmatpush1.msra.mxu0 0.0
    %1910 = vmatprep.subr.mxu0 0.0
    %v1911 = vand.u32 %v1272, 4294901760
    %1912 = vmatpush1.msra.mxu0 %v1911
    %1913 = vmatprep.subr.mxu0 0.0
    %v1914 = vand.u32 %v1271, 4294901760
    %1915 = vmatpush1.msra.mxu0 %v1914
    %1916 = vmatprep.subr.mxu0 0.0
    %v1917 = vand.u32 %v1270, 4294901760
    %1918 = vmatpush1.msra.mxu0 %v1917
    %1919 = vmatprep.subr.mxu0 0.0
    %v1920 = vand.u32 %v1269, 4294901760
    %1921 = vmatpush1.msra.mxu0 %v1920
    %1922 = vmatprep.subr.mxu0 0.0
    %v1923 = vand.u32 %v1268, 4294901760
    %1924 = vmatpush1.msra.mxu0 %v1923
    %1925 = vmatprep.subr.mxu0 0.0
    %v1926 = vand.u32 %v1267, 4294901760
    %1927 = vmatpush1.msra.mxu0 %v1926
    %1928 = vmatprep.subr.mxu0 0.0
    %v1929 = vand.u32 %v1266, 4294901760
    %1930 = vmatpush1.msra.mxu0 %v1929
    %1931 = vmatprep.subr.mxu0 0.0
    %v1932 = vand.u32 %v1265, 4294901760
    %1933 = vmatpush1.msra.mxu0 %v1932
    %1934 = vmatprep.subr.mxu0 0.0
    %v1935 = vand.u32 %v1264, 4294901760
    %1936 = vmatpush1.msra.mxu0 %v1935
    %1937 = vmatprep.subr.mxu0 0.0
    %v1938 = vand.u32 %v1263, 4294901760
    %1939 = vmatpush1.msra.mxu0 %v1938
    %1940 = vmatprep.subr.mxu0 0.0
    %v1941 = vand.u32 %v1262, 4294901760
    %1942 = vmatpush1.msra.mxu0 %v1941
    %1943 = vmatprep.subr.mxu0 0.0
    %v1944 = vand.u32 %v1261, 4294901760
    %1945 = vmatpush1.msra.mxu0 %v1944
    %1946 = vmatprep.subr.mxu0 0.0
    %1947 = vmatpush2.msra.mxu0 0.0
    %1948 = vmatprep.subr.mxu0 0.0
    %1949 = vmatpush2.msra.mxu0 0.0
    %1950 = vmatprep.subr.mxu0 0.0
    %1951 = vmatpush2.msra.mxu0 0.0
    %1952 = vmatprep.subr.mxu0 0.0
    %1953 = vmatpush2.msra.mxu0 0.0
    %1954 = vmatprep.subr.mxu0 0.0
    %1955 = vmatpush2.msra.mxu0 0.0
    %1956 = vmatprep.subr.mxu0 0.0
    %1957 = vmatpush2.msra.mxu0 0.0
    %1958 = vmatprep.subr.mxu0 0.0
    %1959 = vmatpush2.msra.mxu0 0.0
    %1960 = vmatprep.subr.mxu0 0.0
    %1961 = vmatpush2.msra.mxu0 0.0
    %1962 = vmatprep.subr.mxu0 0.0
    %1963 = vmatpush2.msra.mxu0 0.0
    %1964 = vmatprep.subr.mxu0 0.0
    %1965 = vmatpush2.msra.mxu0 0.0
    %1966 = vmatprep.subr.mxu0 0.0
    %1967 = vmatpush2.msra.mxu0 0.0
    %1968 = vmatprep.subr.mxu0 0.0
    %1969 = vmatpush2.msra.mxu0 0.0
    %1970 = vmatprep.subr.mxu0 0.0
    %1971 = vmatpush2.msra.mxu0 0.0
    %1972 = vmatprep.subr.mxu0 0.0
    %1973 = vmatpush2.msra.mxu0 0.0
    %1974 = vmatprep.subr.mxu0 0.0
    %1975 = vmatpush2.msra.mxu0 0.0
    %1976 = vmatprep.subr.mxu0 0.0
    %1977 = vmatpush2.msra.mxu0 0.0
    %1978 = vmatprep.mubr.f32.mxu0 0.0
    %v1979 = vand.u32 %v1274, 4294901760
    %1980 = vmatmul.mubr.f32.gmra.mxu0 %v1979
    %v1981 = vpop.f32.mrf.mxu0
    %v1982 = vadd.f32 %v1881, %v1981
    %v1983 = vpop.f32.mrf.mxu0
    %1984 = vmatprep.mubr.f32.mxu0 0.0
    %v1985 = vand.u32 %v1277, 4294901760
    %1986 = vmatmul.mubr.f32.gmra.mxu0 %v1985
    %v1987 = vpop.f32.mrf.mxu0
    %v1988 = vadd.f32 %v1887, %v1987
    %v1989 = vpop.f32.mrf.mxu0
    %1990 = vmatprep.mubr.f32.mxu0 0.0
    %v1991 = vand.u32 %v1280, 4294901760
    %1992 = vmatmul.mubr.f32.gmra.mxu0 %v1991
    %v1993 = vpop.f32.mrf.mxu0
    %v1994 = vadd.f32 %v1893, %v1993
    %v1995 = vpop.f32.mrf.mxu0
    %1996 = vmatprep.mubr.f32.mxu0 0.0
    %v1997 = vand.u32 %v1283, 4294901760
    %1998 = vmatmul.mubr.f32.gmra.mxu0 %v1997
    %v1999 = vpop.f32.mrf.mxu0
    %v2000 = vadd.f32 %v1899, %v1999
    %v2001 = vpop.f32.mrf.mxu0
    %2002 = vdwg.mxu0
    %v2003 = vmul.f32 %v1982, 0.35355338
    %v2004 = vmul.f32 %v1988, 0.35355338
    %v2005 = vmul.f32 %v1994, 0.35355338
    %v2006 = vmul.f32 %v2000, 0.35355338
    %vm2007 = vcmask 31744
    %v2008 = vsel %vm2007, %v2003, -inf
    %2009 = vmax.xlane.f32.xlu0 %v2008
    %v2010 = vpop.xlane.xlu0 %2009
    %v2011 = vsel %vm2007, %v2004, -inf
    %2012 = vmax.xlane.f32.xlu0 %v2011
    %v2013 = vpop.xlane.xlu0 %2012
    %v2014 = vsel %vm2007, %v2005, -inf
    %2015 = vmax.xlane.f32.xlu0 %v2014
    %v2016 = vpop.xlane.xlu0 %2015
    %v2017 = vsel %vm2007, %v2006, -inf
    %2018 = vmax.xlane.f32.xlu0 %v2017
    %v2019 = vpop.xlane.xlu0 %2018
    %v2020 = vsub.f32 %v2003, %v2010
    %v2021 = vsub.f32 %v2004, %v2013
    %v2022 = vsub.f32 %v2005, %v2016
    %v2023 = vsub.f32 %v2006, %v2019
    %v2024 = vmul.f32 %v2020, 1.442695
    %v2025 = vpow.pop %v2024
    %v2026 = vmul.f32 %v2021, 1.442695
    %v2027 = vpow.pop %v2026
    %v2028 = vmul.f32 %v2022, 1.442695
    %v2029 = vpow.pop %v2028
    %v2030 = vmul.f32 %v2023, 1.442695
    %v2031 = vpow.pop %v2030
    %v2032 = vsel %vm2007, %v2025, 0.0
    %2033 = vadd.xlane.f32.xlu0 %v2032
    %v2034 = vpop.xlane.xlu0 %2033
    %v2035 = vsel %vm2007, %v2027, 0.0
    %2036 = vadd.xlane.f32.xlu0 %v2035
    %v2037 = vpop.xlane.xlu0 %2036
    %v2038 = vsel %vm2007, %v2029, 0.0
    %2039 = vadd.xlane.f32.xlu0 %v2038
    %v2040 = vpop.xlane.xlu0 %2039
    %v2041 = vsel %vm2007, %v2031, 0.0
    %2042 = vadd.xlane.f32.xlu0 %v2041
    %v2043 = vpop.xlane.xlu0 %2042
    %v2044 = vrcp.pop %v2034
    %v2045 = vmul.f32 %v2025, %v2044
    %v2046 = vrcp.pop %v2037
    %v2047 = vmul.f32 %v2027, %v2046
    %v2048 = vrcp.pop %v2040
    %v2049 = vmul.f32 %v2029, %v2048
    %v2050 = vrcp.pop %v2043
    %v2051 = vmul.f32 %v2031, %v2050
    %v2052 = vld [vmem:[%s6] sm:$0xf]
    %v2054 = vsel %vm2007, %v2045, 0
    %v2057 = vsel %vm2007, %v2047, 0
    %v2060 = vsel %vm2007, %v2049, 0
    %v2063 = vsel %vm2007, %v2051, 0
    %vm2065 = vcmask 1043456
    %v2067 = vsel %vm2065, %v2052, 0
    %2069 = vmatprep.subr.mxu0 0.0
    %2070 = vmatpush1.msra.mxu0 0.0
    %2071 = vmatprep.subr.mxu0 0.0
    %2072 = vmatpush1.msra.mxu0 0.0
    %2073 = vmatprep.subr.mxu0 0.0
    %2074 = vmatpush1.msra.mxu0 0.0
    %2075 = vmatprep.subr.mxu0 0.0
    %2076 = vmatpush1.msra.mxu0 0.0
    %2077 = vmatprep.subr.mxu0 0.0
    %2078 = vmatpush1.msra.mxu0 0.0
    %2079 = vmatprep.subr.mxu0 0.0
    %2080 = vmatpush1.msra.mxu0 0.0
    %2081 = vmatprep.subr.mxu0 0.0
    %2082 = vmatpush1.msra.mxu0 0.0
    %2083 = vmatprep.subr.mxu0 0.0
    %2084 = vmatpush1.msra.mxu0 0.0
    %2085 = vmatprep.subr.mxu0 0.0
    %2086 = vmatpush1.msra.mxu0 0.0
    %2087 = vmatprep.subr.mxu0 0.0
    %2088 = vmatpush1.msra.mxu0 0.0
    %2089 = vmatprep.subr.mxu0 0.0
    %2090 = vmatpush1.msra.mxu0 0.0
    %2091 = vmatprep.subr.mxu0 0.0
    %2092 = vmatpush1.msra.mxu0 0.0
    %2093 = vmatprep.subr.mxu0 0.0
    %2094 = vmatpush1.msra.mxu0 0.0
    %2095 = vmatprep.subr.mxu0 0.0
    %2096 = vmatpush1.msra.mxu0 0.0
    %2097 = vmatprep.subr.mxu0 0.0
    %2098 = vmatpush1.msra.mxu0 0.0
    %2099 = vmatprep.subr.mxu0 0.0
    %v2100 = vand.u32 %v2067, 4294901760
    %2101 = vmatpush1.msra.mxu0 %v2100
    %2102 = vmatprep.subr.mxu0 0.0
    %2103 = vmatpush2.msra.mxu0 0.0
    %2104 = vmatprep.subr.mxu0 0.0
    %2105 = vmatpush2.msra.mxu0 0.0
    %2106 = vmatprep.subr.mxu0 0.0
    %2107 = vmatpush2.msra.mxu0 0.0
    %2108 = vmatprep.subr.mxu0 0.0
    %2109 = vmatpush2.msra.mxu0 0.0
    %2110 = vmatprep.subr.mxu0 0.0
    %2111 = vmatpush2.msra.mxu0 0.0
    %2112 = vmatprep.subr.mxu0 0.0
    %2113 = vmatpush2.msra.mxu0 0.0
    %2114 = vmatprep.subr.mxu0 0.0
    %2115 = vmatpush2.msra.mxu0 0.0
    %2116 = vmatprep.subr.mxu0 0.0
    %2117 = vmatpush2.msra.mxu0 0.0
    %2118 = vmatprep.subr.mxu0 0.0
    %2119 = vmatpush2.msra.mxu0 0.0
    %2120 = vmatprep.subr.mxu0 0.0
    %2121 = vmatpush2.msra.mxu0 0.0
    %2122 = vmatprep.subr.mxu0 0.0
    %2123 = vmatpush2.msra.mxu0 0.0
    %2124 = vmatprep.subr.mxu0 0.0
    %2125 = vmatpush2.msra.mxu0 0.0
    %2126 = vmatprep.subr.mxu0 0.0
    %2127 = vmatpush2.msra.mxu0 0.0
    %2128 = vmatprep.subr.mxu0 0.0
    %2129 = vmatpush2.msra.mxu0 0.0
    %2130 = vmatprep.subr.mxu0 0.0
    %2131 = vmatpush2.msra.mxu0 0.0
    %2132 = vmatprep.subr.mxu0 0.0
    %2133 = vmatpush2.msra.mxu0 0.0
    %2134 = vmatprep.mubr.f32.mxu0 0.0
    %v2135 = vand.u32 %v2054, 4294901760
    %v2136 = vsub.f32 %v2054, %v2135
    %v2137 = vand.u32 %v2136, 4294901760
    %v2138 = vsub.f32 %v2136, %v2137
    %v2139 = vand.u32 %v2138, 4294901760
    %2140 = vmatmul.mubr.f32.gmra.mxu0 %v2139
    %v2141 = vpop.f32.mrf.mxu0
    %v2142 = vadd.f32 0.0, %v2141
    %v2143 = vpop.f32.mrf.mxu0
    %2144 = vmatprep.mubr.f32.mxu0 0.0
    %v2145 = vand.u32 %v2057, 4294901760
    %v2146 = vsub.f32 %v2057, %v2145
    %v2147 = vand.u32 %v2146, 4294901760
    %v2148 = vsub.f32 %v2146, %v2147
    %v2149 = vand.u32 %v2148, 4294901760
    %2150 = vmatmul.mubr.f32.gmra.mxu0 %v2149
    %v2151 = vpop.f32.mrf.mxu0
    %v2152 = vadd.f32 0.0, %v2151
    %v2153 = vpop.f32.mrf.mxu0
    %2154 = vmatprep.mubr.f32.mxu0 0.0
    %v2155 = vand.u32 %v2060, 4294901760
    %v2156 = vsub.f32 %v2060, %v2155
    %v2157 = vand.u32 %v2156, 4294901760
    %v2158 = vsub.f32 %v2156, %v2157
    %v2159 = vand.u32 %v2158, 4294901760
    %2160 = vmatmul.mubr.f32.gmra.mxu0 %v2159
    %v2161 = vpop.f32.mrf.mxu0
    %v2162 = vadd.f32 0.0, %v2161
    %v2163 = vpop.f32.mrf.mxu0
    %2164 = vmatprep.mubr.f32.mxu0 0.0
    %v2165 = vand.u32 %v2063, 4294901760
    %v2166 = vsub.f32 %v2063, %v2165
    %v2167 = vand.u32 %v2166, 4294901760
    %v2168 = vsub.f32 %v2166, %v2167
    %v2169 = vand.u32 %v2168, 4294901760
    %2170 = vmatmul.mubr.f32.gmra.mxu0 %v2169
    %v2171 = vpop.f32.mrf.mxu0
    %v2172 = vadd.f32 0.0, %v2171
    %v2173 = vpop.f32.mrf.mxu0
    %2174 = vdwg.mxu0
    %2175 = vmatprep.subr.mxu0 0.0
    %2176 = vmatpush1.msra.mxu0 0.0
    %2177 = vmatprep.subr.mxu0 0.0
    %2178 = vmatpush1.msra.mxu0 0.0
    %2179 = vmatprep.subr.mxu0 0.0
    %2180 = vmatpush1.msra.mxu0 0.0
    %2181 = vmatprep.subr.mxu0 0.0
    %2182 = vmatpush1.msra.mxu0 0.0
    %2183 = vmatprep.subr.mxu0 0.0
    %2184 = vmatpush1.msra.mxu0 0.0
    %2185 = vmatprep.subr.mxu0 0.0
    %2186 = vmatpush1.msra.mxu0 0.0
    %2187 = vmatprep.subr.mxu0 0.0
    %2188 = vmatpush1.msra.mxu0 0.0
    %2189 = vmatprep.subr.mxu0 0.0
    %2190 = vmatpush1.msra.mxu0 0.0
    %2191 = vmatprep.subr.mxu0 0.0
    %2192 = vmatpush1.msra.mxu0 0.0
    %2193 = vmatprep.subr.mxu0 0.0
    %2194 = vmatpush1.msra.mxu0 0.0
    %2195 = vmatprep.subr.mxu0 0.0
    %2196 = vmatpush1.msra.mxu0 0.0
    %2197 = vmatprep.subr.mxu0 0.0
    %2198 = vmatpush1.msra.mxu0 0.0
    %2199 = vmatprep.subr.mxu0 0.0
    %2200 = vmatpush1.msra.mxu0 0.0
    %2201 = vmatprep.subr.mxu0 0.0
    %2202 = vmatpush1.msra.mxu0 0.0
    %2203 = vmatprep.subr.mxu0 0.0
    %2204 = vmatpush1.msra.mxu0 0.0
    %2205 = vmatprep.subr.mxu0 0.0
    %v2206 = vand.u32 %v2067, 4294901760
    %v2207 = vsub.f32 %v2067, %v2206
    %v2208 = vand.u32 %v2207, 4294901760
    %v2209 = vsub.f32 %v2207, %v2208
    %v2210 = vand.u32 %v2209, 4294901760
    %2211 = vmatpush1.msra.mxu0 %v2210
    %2212 = vmatprep.subr.mxu0 0.0
    %2213 = vmatpush2.msra.mxu0 0.0
    %2214 = vmatprep.subr.mxu0 0.0
    %2215 = vmatpush2.msra.mxu0 0.0
    %2216 = vmatprep.subr.mxu0 0.0
    %2217 = vmatpush2.msra.mxu0 0.0
    %2218 = vmatprep.subr.mxu0 0.0
    %2219 = vmatpush2.msra.mxu0 0.0
    %2220 = vmatprep.subr.mxu0 0.0
    %2221 = vmatpush2.msra.mxu0 0.0
    %2222 = vmatprep.subr.mxu0 0.0
    %2223 = vmatpush2.msra.mxu0 0.0
    %2224 = vmatprep.subr.mxu0 0.0
    %2225 = vmatpush2.msra.mxu0 0.0
    %2226 = vmatprep.subr.mxu0 0.0
    %2227 = vmatpush2.msra.mxu0 0.0
    %2228 = vmatprep.subr.mxu0 0.0
    %2229 = vmatpush2.msra.mxu0 0.0
    %2230 = vmatprep.subr.mxu0 0.0
    %2231 = vmatpush2.msra.mxu0 0.0
    %2232 = vmatprep.subr.mxu0 0.0
    %2233 = vmatpush2.msra.mxu0 0.0
    %2234 = vmatprep.subr.mxu0 0.0
    %2235 = vmatpush2.msra.mxu0 0.0
    %2236 = vmatprep.subr.mxu0 0.0
    %2237 = vmatpush2.msra.mxu0 0.0
    %2238 = vmatprep.subr.mxu0 0.0
    %2239 = vmatpush2.msra.mxu0 0.0
    %2240 = vmatprep.subr.mxu0 0.0
    %2241 = vmatpush2.msra.mxu0 0.0
    %2242 = vmatprep.subr.mxu0 0.0
    %2243 = vmatpush2.msra.mxu0 0.0
    %2244 = vmatprep.mubr.f32.mxu0 0.0
    %v2245 = vand.u32 %v2054, 4294901760
    %2246 = vmatmul.mubr.f32.gmra.mxu0 %v2245
    %v2247 = vpop.f32.mrf.mxu0
    %v2248 = vadd.f32 %v2142, %v2247
    %v2249 = vpop.f32.mrf.mxu0
    %2250 = vmatprep.mubr.f32.mxu0 0.0
    %v2251 = vand.u32 %v2057, 4294901760
    %2252 = vmatmul.mubr.f32.gmra.mxu0 %v2251
    %v2253 = vpop.f32.mrf.mxu0
    %v2254 = vadd.f32 %v2152, %v2253
    %v2255 = vpop.f32.mrf.mxu0
    %2256 = vmatprep.mubr.f32.mxu0 0.0
    %v2257 = vand.u32 %v2060, 4294901760
    %2258 = vmatmul.mubr.f32.gmra.mxu0 %v2257
    %v2259 = vpop.f32.mrf.mxu0
    %v2260 = vadd.f32 %v2162, %v2259
    %v2261 = vpop.f32.mrf.mxu0
    %2262 = vmatprep.mubr.f32.mxu0 0.0
    %v2263 = vand.u32 %v2063, 4294901760
    %2264 = vmatmul.mubr.f32.gmra.mxu0 %v2263
    %v2265 = vpop.f32.mrf.mxu0
    %v2266 = vadd.f32 %v2172, %v2265
    %v2267 = vpop.f32.mrf.mxu0
    %2268 = vdwg.mxu0
    %2269 = vmatprep.subr.mxu0 0.0
    %2270 = vmatpush1.msra.mxu0 0.0
    %2271 = vmatprep.subr.mxu0 0.0
    %2272 = vmatpush1.msra.mxu0 0.0
    %2273 = vmatprep.subr.mxu0 0.0
    %2274 = vmatpush1.msra.mxu0 0.0
    %2275 = vmatprep.subr.mxu0 0.0
    %2276 = vmatpush1.msra.mxu0 0.0
    %2277 = vmatprep.subr.mxu0 0.0
    %2278 = vmatpush1.msra.mxu0 0.0
    %2279 = vmatprep.subr.mxu0 0.0
    %2280 = vmatpush1.msra.mxu0 0.0
    %2281 = vmatprep.subr.mxu0 0.0
    %2282 = vmatpush1.msra.mxu0 0.0
    %2283 = vmatprep.subr.mxu0 0.0
    %2284 = vmatpush1.msra.mxu0 0.0
    %2285 = vmatprep.subr.mxu0 0.0
    %2286 = vmatpush1.msra.mxu0 0.0
    %2287 = vmatprep.subr.mxu0 0.0
    %2288 = vmatpush1.msra.mxu0 0.0
    %2289 = vmatprep.subr.mxu0 0.0
    %2290 = vmatpush1.msra.mxu0 0.0
    %2291 = vmatprep.subr.mxu0 0.0
    %2292 = vmatpush1.msra.mxu0 0.0
    %2293 = vmatprep.subr.mxu0 0.0
    %2294 = vmatpush1.msra.mxu0 0.0
    %2295 = vmatprep.subr.mxu0 0.0
    %2296 = vmatpush1.msra.mxu0 0.0
    %2297 = vmatprep.subr.mxu0 0.0
    %2298 = vmatpush1.msra.mxu0 0.0
    %2299 = vmatprep.subr.mxu0 0.0
    %v2300 = vand.u32 %v2067, 4294901760
    %v2301 = vsub.f32 %v2067, %v2300
    %2302 = vmatpush1.msra.mxu0 %v2301
    %2303 = vmatprep.subr.mxu0 0.0
    %2304 = vmatpush2.msra.mxu0 0.0
    %2305 = vmatprep.subr.mxu0 0.0
    %2306 = vmatpush2.msra.mxu0 0.0
    %2307 = vmatprep.subr.mxu0 0.0
    %2308 = vmatpush2.msra.mxu0 0.0
    %2309 = vmatprep.subr.mxu0 0.0
    %2310 = vmatpush2.msra.mxu0 0.0
    %2311 = vmatprep.subr.mxu0 0.0
    %2312 = vmatpush2.msra.mxu0 0.0
    %2313 = vmatprep.subr.mxu0 0.0
    %2314 = vmatpush2.msra.mxu0 0.0
    %2315 = vmatprep.subr.mxu0 0.0
    %2316 = vmatpush2.msra.mxu0 0.0
    %2317 = vmatprep.subr.mxu0 0.0
    %2318 = vmatpush2.msra.mxu0 0.0
    %2319 = vmatprep.subr.mxu0 0.0
    %2320 = vmatpush2.msra.mxu0 0.0
    %2321 = vmatprep.subr.mxu0 0.0
    %2322 = vmatpush2.msra.mxu0 0.0
    %2323 = vmatprep.subr.mxu0 0.0
    %2324 = vmatpush2.msra.mxu0 0.0
    %2325 = vmatprep.subr.mxu0 0.0
    %2326 = vmatpush2.msra.mxu0 0.0
    %2327 = vmatprep.subr.mxu0 0.0
    %2328 = vmatpush2.msra.mxu0 0.0
    %2329 = vmatprep.subr.mxu0 0.0
    %2330 = vmatpush2.msra.mxu0 0.0
    %2331 = vmatprep.subr.mxu0 0.0
    %2332 = vmatpush2.msra.mxu0 0.0
    %2333 = vmatprep.subr.mxu0 0.0
    %2334 = vmatpush2.msra.mxu0 0.0
    %2335 = vmatprep.mubr.f32.mxu0 0.0
    %v2336 = vand.u32 %v2054, 4294901760
    %v2337 = vsub.f32 %v2054, %v2336
    %2338 = vmatmul.mubr.f32.gmra.mxu0 %v2337
    %v2339 = vpop.f32.mrf.mxu0
    %v2340 = vadd.f32 %v2248, %v2339
    %v2341 = vpop.f32.mrf.mxu0
    %2342 = vmatprep.mubr.f32.mxu0 0.0
    %v2343 = vand.u32 %v2057, 4294901760
    %v2344 = vsub.f32 %v2057, %v2343
    %2345 = vmatmul.mubr.f32.gmra.mxu0 %v2344
    %v2346 = vpop.f32.mrf.mxu0
    %v2347 = vadd.f32 %v2254, %v2346
    %v2348 = vpop.f32.mrf.mxu0
    %2349 = vmatprep.mubr.f32.mxu0 0.0
    %v2350 = vand.u32 %v2060, 4294901760
    %v2351 = vsub.f32 %v2060, %v2350
    %2352 = vmatmul.mubr.f32.gmra.mxu0 %v2351
    %v2353 = vpop.f32.mrf.mxu0
    %v2354 = vadd.f32 %v2260, %v2353
    %v2355 = vpop.f32.mrf.mxu0
    %2356 = vmatprep.mubr.f32.mxu0 0.0
    %v2357 = vand.u32 %v2063, 4294901760
    %v2358 = vsub.f32 %v2063, %v2357
    %2359 = vmatmul.mubr.f32.gmra.mxu0 %v2358
    %v2360 = vpop.f32.mrf.mxu0
    %v2361 = vadd.f32 %v2266, %v2360
    %v2362 = vpop.f32.mrf.mxu0
    %2363 = vdwg.mxu0
    %2364 = vmatprep.subr.mxu0 0.0
    %2365 = vmatpush1.msra.mxu0 0.0
    %2366 = vmatprep.subr.mxu0 0.0
    %2367 = vmatpush1.msra.mxu0 0.0
    %2368 = vmatprep.subr.mxu0 0.0
    %2369 = vmatpush1.msra.mxu0 0.0
    %2370 = vmatprep.subr.mxu0 0.0
    %2371 = vmatpush1.msra.mxu0 0.0
    %2372 = vmatprep.subr.mxu0 0.0
    %2373 = vmatpush1.msra.mxu0 0.0
    %2374 = vmatprep.subr.mxu0 0.0
    %2375 = vmatpush1.msra.mxu0 0.0
    %2376 = vmatprep.subr.mxu0 0.0
    %2377 = vmatpush1.msra.mxu0 0.0
    %2378 = vmatprep.subr.mxu0 0.0
    %2379 = vmatpush1.msra.mxu0 0.0
    %2380 = vmatprep.subr.mxu0 0.0
    %2381 = vmatpush1.msra.mxu0 0.0
    %2382 = vmatprep.subr.mxu0 0.0
    %2383 = vmatpush1.msra.mxu0 0.0
    %2384 = vmatprep.subr.mxu0 0.0
    %2385 = vmatpush1.msra.mxu0 0.0
    %2386 = vmatprep.subr.mxu0 0.0
    %2387 = vmatpush1.msra.mxu0 0.0
    %2388 = vmatprep.subr.mxu0 0.0
    %2389 = vmatpush1.msra.mxu0 0.0
    %2390 = vmatprep.subr.mxu0 0.0
    %2391 = vmatpush1.msra.mxu0 0.0
    %2392 = vmatprep.subr.mxu0 0.0
    %2393 = vmatpush1.msra.mxu0 0.0
    %2394 = vmatprep.subr.mxu0 0.0
    %v2395 = vand.u32 %v2067, 4294901760
    %2396 = vmatpush1.msra.mxu0 %v2395
    %2397 = vmatprep.subr.mxu0 0.0
    %2398 = vmatpush2.msra.mxu0 0.0
    %2399 = vmatprep.subr.mxu0 0.0
    %2400 = vmatpush2.msra.mxu0 0.0
    %2401 = vmatprep.subr.mxu0 0.0
    %2402 = vmatpush2.msra.mxu0 0.0
    %2403 = vmatprep.subr.mxu0 0.0
    %2404 = vmatpush2.msra.mxu0 0.0
    %2405 = vmatprep.subr.mxu0 0.0
    %2406 = vmatpush2.msra.mxu0 0.0
    %2407 = vmatprep.subr.mxu0 0.0
    %2408 = vmatpush2.msra.mxu0 0.0
    %2409 = vmatprep.subr.mxu0 0.0
    %2410 = vmatpush2.msra.mxu0 0.0
    %2411 = vmatprep.subr.mxu0 0.0
    %2412 = vmatpush2.msra.mxu0 0.0
    %2413 = vmatprep.subr.mxu0 0.0
    %2414 = vmatpush2.msra.mxu0 0.0
    %2415 = vmatprep.subr.mxu0 0.0
    %2416 = vmatpush2.msra.mxu0 0.0
    %2417 = vmatprep.subr.mxu0 0.0
    %2418 = vmatpush2.msra.mxu0 0.0
    %2419 = vmatprep.subr.mxu0 0.0
    %2420 = vmatpush2.msra.mxu0 0.0
    %2421 = vmatprep.subr.mxu0 0.0
    %2422 = vmatpush2.msra.mxu0 0.0
    %2423 = vmatprep.subr.mxu0 0.0
    %2424 = vmatpush2.msra.mxu0 0.0
    %2425 = vmatprep.subr.mxu0 0.0
    %2426 = vmatpush2.msra.mxu0 0.0
    %2427 = vmatprep.subr.mxu0 0.0
    %2428 = vmatpush2.msra.mxu0 0.0
    %2429 = vmatprep.mubr.f32.mxu0 0.0
    %v2430 = vand.u32 %v2054, 4294901760
    %v2431 = vsub.f32 %v2054, %v2430
    %v2432 = vand.u32 %v2431, 4294901760
    %2433 = vmatmul.mubr.f32.gmra.mxu0 %v2432
    %v2434 = vpop.f32.mrf.mxu0
    %v2435 = vadd.f32 %v2340, %v2434
    %v2436 = vpop.f32.mrf.mxu0
    %2437 = vmatprep.mubr.f32.mxu0 0.0
    %v2438 = vand.u32 %v2057, 4294901760
    %v2439 = vsub.f32 %v2057, %v2438
    %v2440 = vand.u32 %v2439, 4294901760
    %2441 = vmatmul.mubr.f32.gmra.mxu0 %v2440
    %v2442 = vpop.f32.mrf.mxu0
    %v2443 = vadd.f32 %v2347, %v2442
    %v2444 = vpop.f32.mrf.mxu0
    %2445 = vmatprep.mubr.f32.mxu0 0.0
    %v2446 = vand.u32 %v2060, 4294901760
    %v2447 = vsub.f32 %v2060, %v2446
    %v2448 = vand.u32 %v2447, 4294901760
    %2449 = vmatmul.mubr.f32.gmra.mxu0 %v2448
    %v2450 = vpop.f32.mrf.mxu0
    %v2451 = vadd.f32 %v2354, %v2450
    %v2452 = vpop.f32.mrf.mxu0
    %2453 = vmatprep.mubr.f32.mxu0 0.0
    %v2454 = vand.u32 %v2063, 4294901760
    %v2455 = vsub.f32 %v2063, %v2454
    %v2456 = vand.u32 %v2455, 4294901760
    %2457 = vmatmul.mubr.f32.gmra.mxu0 %v2456
    %v2458 = vpop.f32.mrf.mxu0
    %v2459 = vadd.f32 %v2361, %v2458
    %v2460 = vpop.f32.mrf.mxu0
    %2461 = vdwg.mxu0
    %2462 = vmatprep.subr.mxu0 0.0
    %2463 = vmatpush1.msra.mxu0 0.0
    %2464 = vmatprep.subr.mxu0 0.0
    %2465 = vmatpush1.msra.mxu0 0.0
    %2466 = vmatprep.subr.mxu0 0.0
    %2467 = vmatpush1.msra.mxu0 0.0
    %2468 = vmatprep.subr.mxu0 0.0
    %2469 = vmatpush1.msra.mxu0 0.0
    %2470 = vmatprep.subr.mxu0 0.0
    %2471 = vmatpush1.msra.mxu0 0.0
    %2472 = vmatprep.subr.mxu0 0.0
    %2473 = vmatpush1.msra.mxu0 0.0
    %2474 = vmatprep.subr.mxu0 0.0
    %2475 = vmatpush1.msra.mxu0 0.0
    %2476 = vmatprep.subr.mxu0 0.0
    %2477 = vmatpush1.msra.mxu0 0.0
    %2478 = vmatprep.subr.mxu0 0.0
    %2479 = vmatpush1.msra.mxu0 0.0
    %2480 = vmatprep.subr.mxu0 0.0
    %2481 = vmatpush1.msra.mxu0 0.0
    %2482 = vmatprep.subr.mxu0 0.0
    %2483 = vmatpush1.msra.mxu0 0.0
    %2484 = vmatprep.subr.mxu0 0.0
    %2485 = vmatpush1.msra.mxu0 0.0
    %2486 = vmatprep.subr.mxu0 0.0
    %2487 = vmatpush1.msra.mxu0 0.0
    %2488 = vmatprep.subr.mxu0 0.0
    %2489 = vmatpush1.msra.mxu0 0.0
    %2490 = vmatprep.subr.mxu0 0.0
    %2491 = vmatpush1.msra.mxu0 0.0
    %2492 = vmatprep.subr.mxu0 0.0
    %v2493 = vand.u32 %v2067, 4294901760
    %v2494 = vsub.f32 %v2067, %v2493
    %v2495 = vand.u32 %v2494, 4294901760
    %2496 = vmatpush1.msra.mxu0 %v2495
    %2497 = vmatprep.subr.mxu0 0.0
    %2498 = vmatpush2.msra.mxu0 0.0
    %2499 = vmatprep.subr.mxu0 0.0
    %2500 = vmatpush2.msra.mxu0 0.0
    %2501 = vmatprep.subr.mxu0 0.0
    %2502 = vmatpush2.msra.mxu0 0.0
    %2503 = vmatprep.subr.mxu0 0.0
    %2504 = vmatpush2.msra.mxu0 0.0
    %2505 = vmatprep.subr.mxu0 0.0
    %2506 = vmatpush2.msra.mxu0 0.0
    %2507 = vmatprep.subr.mxu0 0.0
    %2508 = vmatpush2.msra.mxu0 0.0
    %2509 = vmatprep.subr.mxu0 0.0
    %2510 = vmatpush2.msra.mxu0 0.0
    %2511 = vmatprep.subr.mxu0 0.0
    %2512 = vmatpush2.msra.mxu0 0.0
    %2513 = vmatprep.subr.mxu0 0.0
    %2514 = vmatpush2.msra.mxu0 0.0
    %2515 = vmatprep.subr.mxu0 0.0
    %2516 = vmatpush2.msra.mxu0 0.0
    %2517 = vmatprep.subr.mxu0 0.0
    %2518 = vmatpush2.msra.mxu0 0.0
    %2519 = vmatprep.subr.mxu0 0.0
    %2520 = vmatpush2.msra.mxu0 0.0
    %2521 = vmatprep.subr.mxu0 0.0
    %2522 = vmatpush2.msra.mxu0 0.0
    %2523 = vmatprep.subr.mxu0 0.0
    %2524 = vmatpush2.msra.mxu0 0.0
    %2525 = vmatprep.subr.mxu0 0.0
    %2526 = vmatpush2.msra.mxu0 0.0
    %2527 = vmatprep.subr.mxu0 0.0
    %2528 = vmatpush2.msra.mxu0 0.0
    %2529 = vmatprep.mubr.f32.mxu0 0.0
    %v2530 = vand.u32 %v2054, 4294901760
    %2531 = vmatmul.mubr.f32.gmra.mxu0 %v2530
    %v2532 = vpop.f32.mrf.mxu0
    %v2533 = vadd.f32 %v2435, %v2532
    %v2534 = vpop.f32.mrf.mxu0
    %2535 = vmatprep.mubr.f32.mxu0 0.0
    %v2536 = vand.u32 %v2057, 4294901760
    %2537 = vmatmul.mubr.f32.gmra.mxu0 %v2536
    %v2538 = vpop.f32.mrf.mxu0
    %v2539 = vadd.f32 %v2443, %v2538
    %v2540 = vpop.f32.mrf.mxu0
    %2541 = vmatprep.mubr.f32.mxu0 0.0
    %v2542 = vand.u32 %v2060, 4294901760
    %2543 = vmatmul.mubr.f32.gmra.mxu0 %v2542
    %v2544 = vpop.f32.mrf.mxu0
    %v2545 = vadd.f32 %v2451, %v2544
    %v2546 = vpop.f32.mrf.mxu0
    %2547 = vmatprep.mubr.f32.mxu0 0.0
    %v2548 = vand.u32 %v2063, 4294901760
    %2549 = vmatmul.mubr.f32.gmra.mxu0 %v2548
    %v2550 = vpop.f32.mrf.mxu0
    %v2551 = vadd.f32 %v2459, %v2550
    %v2552 = vpop.f32.mrf.mxu0
    %2553 = vdwg.mxu0
    %2554 = vmatprep.subr.mxu0 0.0
    %2555 = vmatpush1.msra.mxu0 0.0
    %2556 = vmatprep.subr.mxu0 0.0
    %2557 = vmatpush1.msra.mxu0 0.0
    %2558 = vmatprep.subr.mxu0 0.0
    %2559 = vmatpush1.msra.mxu0 0.0
    %2560 = vmatprep.subr.mxu0 0.0
    %2561 = vmatpush1.msra.mxu0 0.0
    %2562 = vmatprep.subr.mxu0 0.0
    %2563 = vmatpush1.msra.mxu0 0.0
    %2564 = vmatprep.subr.mxu0 0.0
    %2565 = vmatpush1.msra.mxu0 0.0
    %2566 = vmatprep.subr.mxu0 0.0
    %2567 = vmatpush1.msra.mxu0 0.0
    %2568 = vmatprep.subr.mxu0 0.0
    %2569 = vmatpush1.msra.mxu0 0.0
    %2570 = vmatprep.subr.mxu0 0.0
    %2571 = vmatpush1.msra.mxu0 0.0
    %2572 = vmatprep.subr.mxu0 0.0
    %2573 = vmatpush1.msra.mxu0 0.0
    %2574 = vmatprep.subr.mxu0 0.0
    %2575 = vmatpush1.msra.mxu0 0.0
    %2576 = vmatprep.subr.mxu0 0.0
    %2577 = vmatpush1.msra.mxu0 0.0
    %2578 = vmatprep.subr.mxu0 0.0
    %2579 = vmatpush1.msra.mxu0 0.0
    %2580 = vmatprep.subr.mxu0 0.0
    %2581 = vmatpush1.msra.mxu0 0.0
    %2582 = vmatprep.subr.mxu0 0.0
    %2583 = vmatpush1.msra.mxu0 0.0
    %2584 = vmatprep.subr.mxu0 0.0
    %v2585 = vand.u32 %v2067, 4294901760
    %2586 = vmatpush1.msra.mxu0 %v2585
    %2587 = vmatprep.subr.mxu0 0.0
    %2588 = vmatpush2.msra.mxu0 0.0
    %2589 = vmatprep.subr.mxu0 0.0
    %2590 = vmatpush2.msra.mxu0 0.0
    %2591 = vmatprep.subr.mxu0 0.0
    %2592 = vmatpush2.msra.mxu0 0.0
    %2593 = vmatprep.subr.mxu0 0.0
    %2594 = vmatpush2.msra.mxu0 0.0
    %2595 = vmatprep.subr.mxu0 0.0
    %2596 = vmatpush2.msra.mxu0 0.0
    %2597 = vmatprep.subr.mxu0 0.0
    %2598 = vmatpush2.msra.mxu0 0.0
    %2599 = vmatprep.subr.mxu0 0.0
    %2600 = vmatpush2.msra.mxu0 0.0
    %2601 = vmatprep.subr.mxu0 0.0
    %2602 = vmatpush2.msra.mxu0 0.0
    %2603 = vmatprep.subr.mxu0 0.0
    %2604 = vmatpush2.msra.mxu0 0.0
    %2605 = vmatprep.subr.mxu0 0.0
    %2606 = vmatpush2.msra.mxu0 0.0
    %2607 = vmatprep.subr.mxu0 0.0
    %2608 = vmatpush2.msra.mxu0 0.0
    %2609 = vmatprep.subr.mxu0 0.0
    %2610 = vmatpush2.msra.mxu0 0.0
    %2611 = vmatprep.subr.mxu0 0.0
    %2612 = vmatpush2.msra.mxu0 0.0
    %2613 = vmatprep.subr.mxu0 0.0
    %2614 = vmatpush2.msra.mxu0 0.0
    %2615 = vmatprep.subr.mxu0 0.0
    %2616 = vmatpush2.msra.mxu0 0.0
    %2617 = vmatprep.subr.mxu0 0.0
    %2618 = vmatpush2.msra.mxu0 0.0
    %2619 = vmatprep.mubr.f32.mxu0 0.0
    %v2620 = vand.u32 %v2054, 4294901760
    %2621 = vmatmul.mubr.f32.gmra.mxu0 %v2620
    %v2622 = vpop.f32.mrf.mxu0
    %v2623 = vadd.f32 %v2533, %v2622
    %v2624 = vpop.f32.mrf.mxu0
    %2625 = vmatprep.mubr.f32.mxu0 0.0
    %v2626 = vand.u32 %v2057, 4294901760
    %2627 = vmatmul.mubr.f32.gmra.mxu0 %v2626
    %v2628 = vpop.f32.mrf.mxu0
    %v2629 = vadd.f32 %v2539, %v2628
    %v2630 = vpop.f32.mrf.mxu0
    %2631 = vmatprep.mubr.f32.mxu0 0.0
    %v2632 = vand.u32 %v2060, 4294901760
    %2633 = vmatmul.mubr.f32.gmra.mxu0 %v2632
    %v2634 = vpop.f32.mrf.mxu0
    %v2635 = vadd.f32 %v2545, %v2634
    %v2636 = vpop.f32.mrf.mxu0
    %2637 = vmatprep.mubr.f32.mxu0 0.0
    %v2638 = vand.u32 %v2063, 4294901760
    %2639 = vmatmul.mubr.f32.gmra.mxu0 %v2638
    %v2640 = vpop.f32.mrf.mxu0
    %v2641 = vadd.f32 %v2551, %v2640
    %v2642 = vpop.f32.mrf.mxu0
    %2643 = vdwg.mxu0
    %v2644 = vmul.f32 %v2623, %v503
    %v2645 = vmul.f32 %v2629, %v503
    %v2646 = vmul.f32 %v2635, %v503
    %v2647 = vmul.f32 %v2641, %v503
    %v2648 = vld [vmem:[%s7] sm:$0xff]
    %v2649 = vld [vmem:[%s7 + $0x8] sm:$0xff]
    %v2650 = vld [vmem:[%s7 + $0x10] sm:$0xff]
    %v2651 = vld [vmem:[%s7 + $0x18] sm:$0xff]
    %v2652 = vld [vmem:[%s7 + $0x20] sm:$0xff]
    %v2653 = vld [vmem:[%s7 + $0x28] sm:$0xff]
    %v2654 = vld [vmem:[%s7 + $0x30] sm:$0xff]
    %v2655 = vld [vmem:[%s7 + $0x38] sm:$0xff]
    %v2656 = vld [vmem:[%s7 + $0x40] sm:$0xff]
    %v2657 = vld [vmem:[%s7 + $0x48] sm:$0xff]
    %v2658 = vld [vmem:[%s7 + $0x50] sm:$0xff]
    %v2659 = vld [vmem:[%s7 + $0x58] sm:$0xff]
    %v2660 = vld [vmem:[%s8] sm:$0x1]
    %v2662 = vlaneseq
    %v2663 = vshrl.u32 %v2662, 7
    %v2664 = vsub.s32 0, %v2663
    %v2665 = vrot.slane %v2660, %v2664
    %v2668 = vsel %vm526, %v2644, 0
    %v2671 = vsel %vm526, %v2645, 0
    %v2674 = vsel %vm526, %v2646, 0
    %v2677 = vsel %vm526, %v2647, 0
    %2679 = vmatprep.subr.mxu0 0.0
    %2680 = vmatpush1.msra.mxu0 0.0
    %2681 = vmatprep.subr.mxu0 0.0
    %2682 = vmatpush1.msra.mxu0 0.0
    %2683 = vmatprep.subr.mxu0 0.0
    %2684 = vmatpush1.msra.mxu0 0.0
    %2685 = vmatprep.subr.mxu0 0.0
    %2686 = vmatpush1.msra.mxu0 0.0
    %2687 = vmatprep.subr.mxu0 0.0
    %v2688 = vand.u32 %v2659, 4294901760
    %2689 = vmatpush1.msra.mxu0 %v2688
    %2690 = vmatprep.subr.mxu0 0.0
    %v2691 = vand.u32 %v2658, 4294901760
    %2692 = vmatpush1.msra.mxu0 %v2691
    %2693 = vmatprep.subr.mxu0 0.0
    %v2694 = vand.u32 %v2657, 4294901760
    %2695 = vmatpush1.msra.mxu0 %v2694
    %2696 = vmatprep.subr.mxu0 0.0
    %v2697 = vand.u32 %v2656, 4294901760
    %2698 = vmatpush1.msra.mxu0 %v2697
    %2699 = vmatprep.subr.mxu0 0.0
    %v2700 = vand.u32 %v2655, 4294901760
    %2701 = vmatpush1.msra.mxu0 %v2700
    %2702 = vmatprep.subr.mxu0 0.0
    %v2703 = vand.u32 %v2654, 4294901760
    %2704 = vmatpush1.msra.mxu0 %v2703
    %2705 = vmatprep.subr.mxu0 0.0
    %v2706 = vand.u32 %v2653, 4294901760
    %2707 = vmatpush1.msra.mxu0 %v2706
    %2708 = vmatprep.subr.mxu0 0.0
    %v2709 = vand.u32 %v2652, 4294901760
    %2710 = vmatpush1.msra.mxu0 %v2709
    %2711 = vmatprep.subr.mxu0 0.0
    %v2712 = vand.u32 %v2651, 4294901760
    %2713 = vmatpush1.msra.mxu0 %v2712
    %2714 = vmatprep.subr.mxu0 0.0
    %v2715 = vand.u32 %v2650, 4294901760
    %2716 = vmatpush1.msra.mxu0 %v2715
    %2717 = vmatprep.subr.mxu0 0.0
    %v2718 = vand.u32 %v2649, 4294901760
    %2719 = vmatpush1.msra.mxu0 %v2718
    %2720 = vmatprep.subr.mxu0 0.0
    %v2721 = vand.u32 %v2648, 4294901760
    %2722 = vmatpush1.msra.mxu0 %v2721
    %2723 = vmatprep.subr.mxu0 0.0
    %2724 = vmatpush2.msra.mxu0 0.0
    %2725 = vmatprep.subr.mxu0 0.0
    %2726 = vmatpush2.msra.mxu0 0.0
    %2727 = vmatprep.subr.mxu0 0.0
    %2728 = vmatpush2.msra.mxu0 0.0
    %2729 = vmatprep.subr.mxu0 0.0
    %2730 = vmatpush2.msra.mxu0 0.0
    %2731 = vmatprep.subr.mxu0 0.0
    %2732 = vmatpush2.msra.mxu0 0.0
    %2733 = vmatprep.subr.mxu0 0.0
    %2734 = vmatpush2.msra.mxu0 0.0
    %2735 = vmatprep.subr.mxu0 0.0
    %2736 = vmatpush2.msra.mxu0 0.0
    %2737 = vmatprep.subr.mxu0 0.0
    %2738 = vmatpush2.msra.mxu0 0.0
    %2739 = vmatprep.subr.mxu0 0.0
    %2740 = vmatpush2.msra.mxu0 0.0
    %2741 = vmatprep.subr.mxu0 0.0
    %2742 = vmatpush2.msra.mxu0 0.0
    %2743 = vmatprep.subr.mxu0 0.0
    %2744 = vmatpush2.msra.mxu0 0.0
    %2745 = vmatprep.subr.mxu0 0.0
    %2746 = vmatpush2.msra.mxu0 0.0
    %2747 = vmatprep.subr.mxu0 0.0
    %2748 = vmatpush2.msra.mxu0 0.0
    %2749 = vmatprep.subr.mxu0 0.0
    %2750 = vmatpush2.msra.mxu0 0.0
    %2751 = vmatprep.subr.mxu0 0.0
    %2752 = vmatpush2.msra.mxu0 0.0
    %2753 = vmatprep.subr.mxu0 0.0
    %2754 = vmatpush2.msra.mxu0 0.0
    %2755 = vmatprep.mubr.f32.mxu0 0.0
    %v2756 = vand.u32 %v2668, 4294901760
    %v2757 = vsub.f32 %v2668, %v2756
    %v2758 = vand.u32 %v2757, 4294901760
    %v2759 = vsub.f32 %v2757, %v2758
    %v2760 = vand.u32 %v2759, 4294901760
    %2761 = vmatmul.mubr.f32.gmra.mxu0 %v2760
    %v2762 = vpop.f32.mrf.mxu0
    %v2763 = vadd.f32 %v2665, %v2762
    %v2764 = vpop.f32.mrf.mxu0
    %2765 = vmatprep.mubr.f32.mxu0 0.0
    %v2766 = vand.u32 %v2671, 4294901760
    %v2767 = vsub.f32 %v2671, %v2766
    %v2768 = vand.u32 %v2767, 4294901760
    %v2769 = vsub.f32 %v2767, %v2768
    %v2770 = vand.u32 %v2769, 4294901760
    %2771 = vmatmul.mubr.f32.gmra.mxu0 %v2770
    %v2772 = vpop.f32.mrf.mxu0
    %v2773 = vadd.f32 %v2665, %v2772
    %v2774 = vpop.f32.mrf.mxu0
    %2775 = vmatprep.mubr.f32.mxu0 0.0
    %v2776 = vand.u32 %v2674, 4294901760
    %v2777 = vsub.f32 %v2674, %v2776
    %v2778 = vand.u32 %v2777, 4294901760
    %v2779 = vsub.f32 %v2777, %v2778
    %v2780 = vand.u32 %v2779, 4294901760
    %2781 = vmatmul.mubr.f32.gmra.mxu0 %v2780
    %v2782 = vpop.f32.mrf.mxu0
    %v2783 = vadd.f32 %v2665, %v2782
    %v2784 = vpop.f32.mrf.mxu0
    %2785 = vmatprep.mubr.f32.mxu0 0.0
    %v2786 = vand.u32 %v2677, 4294901760
    %v2787 = vsub.f32 %v2677, %v2786
    %v2788 = vand.u32 %v2787, 4294901760
    %v2789 = vsub.f32 %v2787, %v2788
    %v2790 = vand.u32 %v2789, 4294901760
    %2791 = vmatmul.mubr.f32.gmra.mxu0 %v2790
    %v2792 = vpop.f32.mrf.mxu0
    %v2793 = vadd.f32 %v2665, %v2792
    %v2794 = vpop.f32.mrf.mxu0
    %2795 = vdwg.mxu0
    %2796 = vmatprep.subr.mxu0 0.0
    %2797 = vmatpush1.msra.mxu0 0.0
    %2798 = vmatprep.subr.mxu0 0.0
    %2799 = vmatpush1.msra.mxu0 0.0
    %2800 = vmatprep.subr.mxu0 0.0
    %2801 = vmatpush1.msra.mxu0 0.0
    %2802 = vmatprep.subr.mxu0 0.0
    %2803 = vmatpush1.msra.mxu0 0.0
    %2804 = vmatprep.subr.mxu0 0.0
    %v2805 = vand.u32 %v2659, 4294901760
    %v2806 = vsub.f32 %v2659, %v2805
    %v2807 = vand.u32 %v2806, 4294901760
    %v2808 = vsub.f32 %v2806, %v2807
    %v2809 = vand.u32 %v2808, 4294901760
    %2810 = vmatpush1.msra.mxu0 %v2809
    %2811 = vmatprep.subr.mxu0 0.0
    %v2812 = vand.u32 %v2658, 4294901760
    %v2813 = vsub.f32 %v2658, %v2812
    %v2814 = vand.u32 %v2813, 4294901760
    %v2815 = vsub.f32 %v2813, %v2814
    %v2816 = vand.u32 %v2815, 4294901760
    %2817 = vmatpush1.msra.mxu0 %v2816
    %2818 = vmatprep.subr.mxu0 0.0
    %v2819 = vand.u32 %v2657, 4294901760
    %v2820 = vsub.f32 %v2657, %v2819
    %v2821 = vand.u32 %v2820, 4294901760
    %v2822 = vsub.f32 %v2820, %v2821
    %v2823 = vand.u32 %v2822, 4294901760
    %2824 = vmatpush1.msra.mxu0 %v2823
    %2825 = vmatprep.subr.mxu0 0.0
    %v2826 = vand.u32 %v2656, 4294901760
    %v2827 = vsub.f32 %v2656, %v2826
    %v2828 = vand.u32 %v2827, 4294901760
    %v2829 = vsub.f32 %v2827, %v2828
    %v2830 = vand.u32 %v2829, 4294901760
    %2831 = vmatpush1.msra.mxu0 %v2830
    %2832 = vmatprep.subr.mxu0 0.0
    %v2833 = vand.u32 %v2655, 4294901760
    %v2834 = vsub.f32 %v2655, %v2833
    %v2835 = vand.u32 %v2834, 4294901760
    %v2836 = vsub.f32 %v2834, %v2835
    %v2837 = vand.u32 %v2836, 4294901760
    %2838 = vmatpush1.msra.mxu0 %v2837
    %2839 = vmatprep.subr.mxu0 0.0
    %v2840 = vand.u32 %v2654, 4294901760
    %v2841 = vsub.f32 %v2654, %v2840
    %v2842 = vand.u32 %v2841, 4294901760
    %v2843 = vsub.f32 %v2841, %v2842
    %v2844 = vand.u32 %v2843, 4294901760
    %2845 = vmatpush1.msra.mxu0 %v2844
    %2846 = vmatprep.subr.mxu0 0.0
    %v2847 = vand.u32 %v2653, 4294901760
    %v2848 = vsub.f32 %v2653, %v2847
    %v2849 = vand.u32 %v2848, 4294901760
    %v2850 = vsub.f32 %v2848, %v2849
    %v2851 = vand.u32 %v2850, 4294901760
    %2852 = vmatpush1.msra.mxu0 %v2851
    %2853 = vmatprep.subr.mxu0 0.0
    %v2854 = vand.u32 %v2652, 4294901760
    %v2855 = vsub.f32 %v2652, %v2854
    %v2856 = vand.u32 %v2855, 4294901760
    %v2857 = vsub.f32 %v2855, %v2856
    %v2858 = vand.u32 %v2857, 4294901760
    %2859 = vmatpush1.msra.mxu0 %v2858
    %2860 = vmatprep.subr.mxu0 0.0
    %v2861 = vand.u32 %v2651, 4294901760
    %v2862 = vsub.f32 %v2651, %v2861
    %v2863 = vand.u32 %v2862, 4294901760
    %v2864 = vsub.f32 %v2862, %v2863
    %v2865 = vand.u32 %v2864, 4294901760
    %2866 = vmatpush1.msra.mxu0 %v2865
    %2867 = vmatprep.subr.mxu0 0.0
    %v2868 = vand.u32 %v2650, 4294901760
    %v2869 = vsub.f32 %v2650, %v2868
    %v2870 = vand.u32 %v2869, 4294901760
    %v2871 = vsub.f32 %v2869, %v2870
    %v2872 = vand.u32 %v2871, 4294901760
    %2873 = vmatpush1.msra.mxu0 %v2872
    %2874 = vmatprep.subr.mxu0 0.0
    %v2875 = vand.u32 %v2649, 4294901760
    %v2876 = vsub.f32 %v2649, %v2875
    %v2877 = vand.u32 %v2876, 4294901760
    %v2878 = vsub.f32 %v2876, %v2877
    %v2879 = vand.u32 %v2878, 4294901760
    %2880 = vmatpush1.msra.mxu0 %v2879
    %2881 = vmatprep.subr.mxu0 0.0
    %v2882 = vand.u32 %v2648, 4294901760
    %v2883 = vsub.f32 %v2648, %v2882
    %v2884 = vand.u32 %v2883, 4294901760
    %v2885 = vsub.f32 %v2883, %v2884
    %v2886 = vand.u32 %v2885, 4294901760
    %2887 = vmatpush1.msra.mxu0 %v2886
    %2888 = vmatprep.subr.mxu0 0.0
    %2889 = vmatpush2.msra.mxu0 0.0
    %2890 = vmatprep.subr.mxu0 0.0
    %2891 = vmatpush2.msra.mxu0 0.0
    %2892 = vmatprep.subr.mxu0 0.0
    %2893 = vmatpush2.msra.mxu0 0.0
    %2894 = vmatprep.subr.mxu0 0.0
    %2895 = vmatpush2.msra.mxu0 0.0
    %2896 = vmatprep.subr.mxu0 0.0
    %2897 = vmatpush2.msra.mxu0 0.0
    %2898 = vmatprep.subr.mxu0 0.0
    %2899 = vmatpush2.msra.mxu0 0.0
    %2900 = vmatprep.subr.mxu0 0.0
    %2901 = vmatpush2.msra.mxu0 0.0
    %2902 = vmatprep.subr.mxu0 0.0
    %2903 = vmatpush2.msra.mxu0 0.0
    %2904 = vmatprep.subr.mxu0 0.0
    %2905 = vmatpush2.msra.mxu0 0.0
    %2906 = vmatprep.subr.mxu0 0.0
    %2907 = vmatpush2.msra.mxu0 0.0
    %2908 = vmatprep.subr.mxu0 0.0
    %2909 = vmatpush2.msra.mxu0 0.0
    %2910 = vmatprep.subr.mxu0 0.0
    %2911 = vmatpush2.msra.mxu0 0.0
    %2912 = vmatprep.subr.mxu0 0.0
    %2913 = vmatpush2.msra.mxu0 0.0
    %2914 = vmatprep.subr.mxu0 0.0
    %2915 = vmatpush2.msra.mxu0 0.0
    %2916 = vmatprep.subr.mxu0 0.0
    %2917 = vmatpush2.msra.mxu0 0.0
    %2918 = vmatprep.subr.mxu0 0.0
    %2919 = vmatpush2.msra.mxu0 0.0
    %2920 = vmatprep.mubr.f32.mxu0 0.0
    %v2921 = vand.u32 %v2668, 4294901760
    %2922 = vmatmul.mubr.f32.gmra.mxu0 %v2921
    %v2923 = vpop.f32.mrf.mxu0
    %v2924 = vadd.f32 %v2763, %v2923
    %v2925 = vpop.f32.mrf.mxu0
    %2926 = vmatprep.mubr.f32.mxu0 0.0
    %v2927 = vand.u32 %v2671, 4294901760
    %2928 = vmatmul.mubr.f32.gmra.mxu0 %v2927
    %v2929 = vpop.f32.mrf.mxu0
    %v2930 = vadd.f32 %v2773, %v2929
    %v2931 = vpop.f32.mrf.mxu0
    %2932 = vmatprep.mubr.f32.mxu0 0.0
    %v2933 = vand.u32 %v2674, 4294901760
    %2934 = vmatmul.mubr.f32.gmra.mxu0 %v2933
    %v2935 = vpop.f32.mrf.mxu0
    %v2936 = vadd.f32 %v2783, %v2935
    %v2937 = vpop.f32.mrf.mxu0
    %2938 = vmatprep.mubr.f32.mxu0 0.0
    %v2939 = vand.u32 %v2677, 4294901760
    %2940 = vmatmul.mubr.f32.gmra.mxu0 %v2939
    %v2941 = vpop.f32.mrf.mxu0
    %v2942 = vadd.f32 %v2793, %v2941
    %v2943 = vpop.f32.mrf.mxu0
    %2944 = vdwg.mxu0
    %2945 = vmatprep.subr.mxu0 0.0
    %2946 = vmatpush1.msra.mxu0 0.0
    %2947 = vmatprep.subr.mxu0 0.0
    %2948 = vmatpush1.msra.mxu0 0.0
    %2949 = vmatprep.subr.mxu0 0.0
    %2950 = vmatpush1.msra.mxu0 0.0
    %2951 = vmatprep.subr.mxu0 0.0
    %2952 = vmatpush1.msra.mxu0 0.0
    %2953 = vmatprep.subr.mxu0 0.0
    %v2954 = vand.u32 %v2659, 4294901760
    %v2955 = vsub.f32 %v2659, %v2954
    %2956 = vmatpush1.msra.mxu0 %v2955
    %2957 = vmatprep.subr.mxu0 0.0
    %v2958 = vand.u32 %v2658, 4294901760
    %v2959 = vsub.f32 %v2658, %v2958
    %2960 = vmatpush1.msra.mxu0 %v2959
    %2961 = vmatprep.subr.mxu0 0.0
    %v2962 = vand.u32 %v2657, 4294901760
    %v2963 = vsub.f32 %v2657, %v2962
    %2964 = vmatpush1.msra.mxu0 %v2963
    %2965 = vmatprep.subr.mxu0 0.0
    %v2966 = vand.u32 %v2656, 4294901760
    %v2967 = vsub.f32 %v2656, %v2966
    %2968 = vmatpush1.msra.mxu0 %v2967
    %2969 = vmatprep.subr.mxu0 0.0
    %v2970 = vand.u32 %v2655, 4294901760
    %v2971 = vsub.f32 %v2655, %v2970
    %2972 = vmatpush1.msra.mxu0 %v2971
    %2973 = vmatprep.subr.mxu0 0.0
    %v2974 = vand.u32 %v2654, 4294901760
    %v2975 = vsub.f32 %v2654, %v2974
    %2976 = vmatpush1.msra.mxu0 %v2975
    %2977 = vmatprep.subr.mxu0 0.0
    %v2978 = vand.u32 %v2653, 4294901760
    %v2979 = vsub.f32 %v2653, %v2978
    %2980 = vmatpush1.msra.mxu0 %v2979
    %2981 = vmatprep.subr.mxu0 0.0
    %v2982 = vand.u32 %v2652, 4294901760
    %v2983 = vsub.f32 %v2652, %v2982
    %2984 = vmatpush1.msra.mxu0 %v2983
    %2985 = vmatprep.subr.mxu0 0.0
    %v2986 = vand.u32 %v2651, 4294901760
    %v2987 = vsub.f32 %v2651, %v2986
    %2988 = vmatpush1.msra.mxu0 %v2987
    %2989 = vmatprep.subr.mxu0 0.0
    %v2990 = vand.u32 %v2650, 4294901760
    %v2991 = vsub.f32 %v2650, %v2990
    %2992 = vmatpush1.msra.mxu0 %v2991
    %2993 = vmatprep.subr.mxu0 0.0
    %v2994 = vand.u32 %v2649, 4294901760
    %v2995 = vsub.f32 %v2649, %v2994
    %2996 = vmatpush1.msra.mxu0 %v2995
    %2997 = vmatprep.subr.mxu0 0.0
    %v2998 = vand.u32 %v2648, 4294901760
    %v2999 = vsub.f32 %v2648, %v2998
    %3000 = vmatpush1.msra.mxu0 %v2999
    %3001 = vmatprep.subr.mxu0 0.0
    %3002 = vmatpush2.msra.mxu0 0.0
    %3003 = vmatprep.subr.mxu0 0.0
    %3004 = vmatpush2.msra.mxu0 0.0
    %3005 = vmatprep.subr.mxu0 0.0
    %3006 = vmatpush2.msra.mxu0 0.0
    %3007 = vmatprep.subr.mxu0 0.0
    %3008 = vmatpush2.msra.mxu0 0.0
    %3009 = vmatprep.subr.mxu0 0.0
    %3010 = vmatpush2.msra.mxu0 0.0
    %3011 = vmatprep.subr.mxu0 0.0
    %3012 = vmatpush2.msra.mxu0 0.0
    %3013 = vmatprep.subr.mxu0 0.0
    %3014 = vmatpush2.msra.mxu0 0.0
    %3015 = vmatprep.subr.mxu0 0.0
    %3016 = vmatpush2.msra.mxu0 0.0
    %3017 = vmatprep.subr.mxu0 0.0
    %3018 = vmatpush2.msra.mxu0 0.0
    %3019 = vmatprep.subr.mxu0 0.0
    %3020 = vmatpush2.msra.mxu0 0.0
    %3021 = vmatprep.subr.mxu0 0.0
    %3022 = vmatpush2.msra.mxu0 0.0
    %3023 = vmatprep.subr.mxu0 0.0
    %3024 = vmatpush2.msra.mxu0 0.0
    %3025 = vmatprep.subr.mxu0 0.0
    %3026 = vmatpush2.msra.mxu0 0.0
    %3027 = vmatprep.subr.mxu0 0.0
    %3028 = vmatpush2.msra.mxu0 0.0
    %3029 = vmatprep.subr.mxu0 0.0
    %3030 = vmatpush2.msra.mxu0 0.0
    %3031 = vmatprep.subr.mxu0 0.0
    %3032 = vmatpush2.msra.mxu0 0.0
    %3033 = vmatprep.mubr.f32.mxu0 0.0
    %v3034 = vand.u32 %v2668, 4294901760
    %v3035 = vsub.f32 %v2668, %v3034
    %3036 = vmatmul.mubr.f32.gmra.mxu0 %v3035
    %v3037 = vpop.f32.mrf.mxu0
    %v3038 = vadd.f32 %v2924, %v3037
    %v3039 = vpop.f32.mrf.mxu0
    %3040 = vmatprep.mubr.f32.mxu0 0.0
    %v3041 = vand.u32 %v2671, 4294901760
    %v3042 = vsub.f32 %v2671, %v3041
    %3043 = vmatmul.mubr.f32.gmra.mxu0 %v3042
    %v3044 = vpop.f32.mrf.mxu0
    %v3045 = vadd.f32 %v2930, %v3044
    %v3046 = vpop.f32.mrf.mxu0
    %3047 = vmatprep.mubr.f32.mxu0 0.0
    %v3048 = vand.u32 %v2674, 4294901760
    %v3049 = vsub.f32 %v2674, %v3048
    %3050 = vmatmul.mubr.f32.gmra.mxu0 %v3049
    %v3051 = vpop.f32.mrf.mxu0
    %v3052 = vadd.f32 %v2936, %v3051
    %v3053 = vpop.f32.mrf.mxu0
    %3054 = vmatprep.mubr.f32.mxu0 0.0
    %v3055 = vand.u32 %v2677, 4294901760
    %v3056 = vsub.f32 %v2677, %v3055
    %3057 = vmatmul.mubr.f32.gmra.mxu0 %v3056
    %v3058 = vpop.f32.mrf.mxu0
    %v3059 = vadd.f32 %v2942, %v3058
    %v3060 = vpop.f32.mrf.mxu0
    %3061 = vdwg.mxu0
    %3062 = vmatprep.subr.mxu0 0.0
    %3063 = vmatpush1.msra.mxu0 0.0
    %3064 = vmatprep.subr.mxu0 0.0
    %3065 = vmatpush1.msra.mxu0 0.0
    %3066 = vmatprep.subr.mxu0 0.0
    %3067 = vmatpush1.msra.mxu0 0.0
    %3068 = vmatprep.subr.mxu0 0.0
    %3069 = vmatpush1.msra.mxu0 0.0
    %3070 = vmatprep.subr.mxu0 0.0
    %v3071 = vand.u32 %v2659, 4294901760
    %3072 = vmatpush1.msra.mxu0 %v3071
    %3073 = vmatprep.subr.mxu0 0.0
    %v3074 = vand.u32 %v2658, 4294901760
    %3075 = vmatpush1.msra.mxu0 %v3074
    %3076 = vmatprep.subr.mxu0 0.0
    %v3077 = vand.u32 %v2657, 4294901760
    %3078 = vmatpush1.msra.mxu0 %v3077
    %3079 = vmatprep.subr.mxu0 0.0
    %v3080 = vand.u32 %v2656, 4294901760
    %3081 = vmatpush1.msra.mxu0 %v3080
    %3082 = vmatprep.subr.mxu0 0.0
    %v3083 = vand.u32 %v2655, 4294901760
    %3084 = vmatpush1.msra.mxu0 %v3083
    %3085 = vmatprep.subr.mxu0 0.0
    %v3086 = vand.u32 %v2654, 4294901760
    %3087 = vmatpush1.msra.mxu0 %v3086
    %3088 = vmatprep.subr.mxu0 0.0
    %v3089 = vand.u32 %v2653, 4294901760
    %3090 = vmatpush1.msra.mxu0 %v3089
    %3091 = vmatprep.subr.mxu0 0.0
    %v3092 = vand.u32 %v2652, 4294901760
    %3093 = vmatpush1.msra.mxu0 %v3092
    %3094 = vmatprep.subr.mxu0 0.0
    %v3095 = vand.u32 %v2651, 4294901760
    %3096 = vmatpush1.msra.mxu0 %v3095
    %3097 = vmatprep.subr.mxu0 0.0
    %v3098 = vand.u32 %v2650, 4294901760
    %3099 = vmatpush1.msra.mxu0 %v3098
    %3100 = vmatprep.subr.mxu0 0.0
    %v3101 = vand.u32 %v2649, 4294901760
    %3102 = vmatpush1.msra.mxu0 %v3101
    %3103 = vmatprep.subr.mxu0 0.0
    %v3104 = vand.u32 %v2648, 4294901760
    %3105 = vmatpush1.msra.mxu0 %v3104
    %3106 = vmatprep.subr.mxu0 0.0
    %3107 = vmatpush2.msra.mxu0 0.0
    %3108 = vmatprep.subr.mxu0 0.0
    %3109 = vmatpush2.msra.mxu0 0.0
    %3110 = vmatprep.subr.mxu0 0.0
    %3111 = vmatpush2.msra.mxu0 0.0
    %3112 = vmatprep.subr.mxu0 0.0
    %3113 = vmatpush2.msra.mxu0 0.0
    %3114 = vmatprep.subr.mxu0 0.0
    %3115 = vmatpush2.msra.mxu0 0.0
    %3116 = vmatprep.subr.mxu0 0.0
    %3117 = vmatpush2.msra.mxu0 0.0
    %3118 = vmatprep.subr.mxu0 0.0
    %3119 = vmatpush2.msra.mxu0 0.0
    %3120 = vmatprep.subr.mxu0 0.0
    %3121 = vmatpush2.msra.mxu0 0.0
    %3122 = vmatprep.subr.mxu0 0.0
    %3123 = vmatpush2.msra.mxu0 0.0
    %3124 = vmatprep.subr.mxu0 0.0
    %3125 = vmatpush2.msra.mxu0 0.0
    %3126 = vmatprep.subr.mxu0 0.0
    %3127 = vmatpush2.msra.mxu0 0.0
    %3128 = vmatprep.subr.mxu0 0.0
    %3129 = vmatpush2.msra.mxu0 0.0
    %3130 = vmatprep.subr.mxu0 0.0
    %3131 = vmatpush2.msra.mxu0 0.0
    %3132 = vmatprep.subr.mxu0 0.0
    %3133 = vmatpush2.msra.mxu0 0.0
    %3134 = vmatprep.subr.mxu0 0.0
    %3135 = vmatpush2.msra.mxu0 0.0
    %3136 = vmatprep.subr.mxu0 0.0
    %3137 = vmatpush2.msra.mxu0 0.0
    %3138 = vmatprep.mubr.f32.mxu0 0.0
    %v3139 = vand.u32 %v2668, 4294901760
    %v3140 = vsub.f32 %v2668, %v3139
    %v3141 = vand.u32 %v3140, 4294901760
    %3142 = vmatmul.mubr.f32.gmra.mxu0 %v3141
    %v3143 = vpop.f32.mrf.mxu0
    %v3144 = vadd.f32 %v3038, %v3143
    %v3145 = vpop.f32.mrf.mxu0
    %3146 = vmatprep.mubr.f32.mxu0 0.0
    %v3147 = vand.u32 %v2671, 4294901760
    %v3148 = vsub.f32 %v2671, %v3147
    %v3149 = vand.u32 %v3148, 4294901760
    %3150 = vmatmul.mubr.f32.gmra.mxu0 %v3149
    %v3151 = vpop.f32.mrf.mxu0
    %v3152 = vadd.f32 %v3045, %v3151
    %v3153 = vpop.f32.mrf.mxu0
    %3154 = vmatprep.mubr.f32.mxu0 0.0
    %v3155 = vand.u32 %v2674, 4294901760
    %v3156 = vsub.f32 %v2674, %v3155
    %v3157 = vand.u32 %v3156, 4294901760
    %3158 = vmatmul.mubr.f32.gmra.mxu0 %v3157
    %v3159 = vpop.f32.mrf.mxu0
    %v3160 = vadd.f32 %v3052, %v3159
    %v3161 = vpop.f32.mrf.mxu0
    %3162 = vmatprep.mubr.f32.mxu0 0.0
    %v3163 = vand.u32 %v2677, 4294901760
    %v3164 = vsub.f32 %v2677, %v3163
    %v3165 = vand.u32 %v3164, 4294901760
    %3166 = vmatmul.mubr.f32.gmra.mxu0 %v3165
    %v3167 = vpop.f32.mrf.mxu0
    %v3168 = vadd.f32 %v3059, %v3167
    %v3169 = vpop.f32.mrf.mxu0
    %3170 = vdwg.mxu0
    %3171 = vmatprep.subr.mxu0 0.0
    %3172 = vmatpush1.msra.mxu0 0.0
    %3173 = vmatprep.subr.mxu0 0.0
    %3174 = vmatpush1.msra.mxu0 0.0
    %3175 = vmatprep.subr.mxu0 0.0
    %3176 = vmatpush1.msra.mxu0 0.0
    %3177 = vmatprep.subr.mxu0 0.0
    %3178 = vmatpush1.msra.mxu0 0.0
    %3179 = vmatprep.subr.mxu0 0.0
    %v3180 = vand.u32 %v2659, 4294901760
    %v3181 = vsub.f32 %v2659, %v3180
    %v3182 = vand.u32 %v3181, 4294901760
    %3183 = vmatpush1.msra.mxu0 %v3182
    %3184 = vmatprep.subr.mxu0 0.0
    %v3185 = vand.u32 %v2658, 4294901760
    %v3186 = vsub.f32 %v2658, %v3185
    %v3187 = vand.u32 %v3186, 4294901760
    %3188 = vmatpush1.msra.mxu0 %v3187
    %3189 = vmatprep.subr.mxu0 0.0
    %v3190 = vand.u32 %v2657, 4294901760
    %v3191 = vsub.f32 %v2657, %v3190
    %v3192 = vand.u32 %v3191, 4294901760
    %3193 = vmatpush1.msra.mxu0 %v3192
    %3194 = vmatprep.subr.mxu0 0.0
    %v3195 = vand.u32 %v2656, 4294901760
    %v3196 = vsub.f32 %v2656, %v3195
    %v3197 = vand.u32 %v3196, 4294901760
    %3198 = vmatpush1.msra.mxu0 %v3197
    %3199 = vmatprep.subr.mxu0 0.0
    %v3200 = vand.u32 %v2655, 4294901760
    %v3201 = vsub.f32 %v2655, %v3200
    %v3202 = vand.u32 %v3201, 4294901760
    %3203 = vmatpush1.msra.mxu0 %v3202
    %3204 = vmatprep.subr.mxu0 0.0
    %v3205 = vand.u32 %v2654, 4294901760
    %v3206 = vsub.f32 %v2654, %v3205
    %v3207 = vand.u32 %v3206, 4294901760
    %3208 = vmatpush1.msra.mxu0 %v3207
    %3209 = vmatprep.subr.mxu0 0.0
    %v3210 = vand.u32 %v2653, 4294901760
    %v3211 = vsub.f32 %v2653, %v3210
    %v3212 = vand.u32 %v3211, 4294901760
    %3213 = vmatpush1.msra.mxu0 %v3212
    %3214 = vmatprep.subr.mxu0 0.0
    %v3215 = vand.u32 %v2652, 4294901760
    %v3216 = vsub.f32 %v2652, %v3215
    %v3217 = vand.u32 %v3216, 4294901760
    %3218 = vmatpush1.msra.mxu0 %v3217
    %3219 = vmatprep.subr.mxu0 0.0
    %v3220 = vand.u32 %v2651, 4294901760
    %v3221 = vsub.f32 %v2651, %v3220
    %v3222 = vand.u32 %v3221, 4294901760
    %3223 = vmatpush1.msra.mxu0 %v3222
    %3224 = vmatprep.subr.mxu0 0.0
    %v3225 = vand.u32 %v2650, 4294901760
    %v3226 = vsub.f32 %v2650, %v3225
    %v3227 = vand.u32 %v3226, 4294901760
    %3228 = vmatpush1.msra.mxu0 %v3227
    %3229 = vmatprep.subr.mxu0 0.0
    %v3230 = vand.u32 %v2649, 4294901760
    %v3231 = vsub.f32 %v2649, %v3230
    %v3232 = vand.u32 %v3231, 4294901760
    %3233 = vmatpush1.msra.mxu0 %v3232
    %3234 = vmatprep.subr.mxu0 0.0
    %v3235 = vand.u32 %v2648, 4294901760
    %v3236 = vsub.f32 %v2648, %v3235
    %v3237 = vand.u32 %v3236, 4294901760
    %3238 = vmatpush1.msra.mxu0 %v3237
    %3239 = vmatprep.subr.mxu0 0.0
    %3240 = vmatpush2.msra.mxu0 0.0
    %3241 = vmatprep.subr.mxu0 0.0
    %3242 = vmatpush2.msra.mxu0 0.0
    %3243 = vmatprep.subr.mxu0 0.0
    %3244 = vmatpush2.msra.mxu0 0.0
    %3245 = vmatprep.subr.mxu0 0.0
    %3246 = vmatpush2.msra.mxu0 0.0
    %3247 = vmatprep.subr.mxu0 0.0
    %3248 = vmatpush2.msra.mxu0 0.0
    %3249 = vmatprep.subr.mxu0 0.0
    %3250 = vmatpush2.msra.mxu0 0.0
    %3251 = vmatprep.subr.mxu0 0.0
    %3252 = vmatpush2.msra.mxu0 0.0
    %3253 = vmatprep.subr.mxu0 0.0
    %3254 = vmatpush2.msra.mxu0 0.0
    %3255 = vmatprep.subr.mxu0 0.0
    %3256 = vmatpush2.msra.mxu0 0.0
    %3257 = vmatprep.subr.mxu0 0.0
    %3258 = vmatpush2.msra.mxu0 0.0
    %3259 = vmatprep.subr.mxu0 0.0
    %3260 = vmatpush2.msra.mxu0 0.0
    %3261 = vmatprep.subr.mxu0 0.0
    %3262 = vmatpush2.msra.mxu0 0.0
    %3263 = vmatprep.subr.mxu0 0.0
    %3264 = vmatpush2.msra.mxu0 0.0
    %3265 = vmatprep.subr.mxu0 0.0
    %3266 = vmatpush2.msra.mxu0 0.0
    %3267 = vmatprep.subr.mxu0 0.0
    %3268 = vmatpush2.msra.mxu0 0.0
    %3269 = vmatprep.subr.mxu0 0.0
    %3270 = vmatpush2.msra.mxu0 0.0
    %3271 = vmatprep.mubr.f32.mxu0 0.0
    %v3272 = vand.u32 %v2668, 4294901760
    %3273 = vmatmul.mubr.f32.gmra.mxu0 %v3272
    %v3274 = vpop.f32.mrf.mxu0
    %v3275 = vadd.f32 %v3144, %v3274
    %v3276 = vpop.f32.mrf.mxu0
    %3277 = vmatprep.mubr.f32.mxu0 0.0
    %v3278 = vand.u32 %v2671, 4294901760
    %3279 = vmatmul.mubr.f32.gmra.mxu0 %v3278
    %v3280 = vpop.f32.mrf.mxu0
    %v3281 = vadd.f32 %v3152, %v3280
    %v3282 = vpop.f32.mrf.mxu0
    %3283 = vmatprep.mubr.f32.mxu0 0.0
    %v3284 = vand.u32 %v2674, 4294901760
    %3285 = vmatmul.mubr.f32.gmra.mxu0 %v3284
    %v3286 = vpop.f32.mrf.mxu0
    %v3287 = vadd.f32 %v3160, %v3286
    %v3288 = vpop.f32.mrf.mxu0
    %3289 = vmatprep.mubr.f32.mxu0 0.0
    %v3290 = vand.u32 %v2677, 4294901760
    %3291 = vmatmul.mubr.f32.gmra.mxu0 %v3290
    %v3292 = vpop.f32.mrf.mxu0
    %v3293 = vadd.f32 %v3168, %v3292
    %v3294 = vpop.f32.mrf.mxu0
    %3295 = vdwg.mxu0
    %3296 = vmatprep.subr.mxu0 0.0
    %3297 = vmatpush1.msra.mxu0 0.0
    %3298 = vmatprep.subr.mxu0 0.0
    %3299 = vmatpush1.msra.mxu0 0.0
    %3300 = vmatprep.subr.mxu0 0.0
    %3301 = vmatpush1.msra.mxu0 0.0
    %3302 = vmatprep.subr.mxu0 0.0
    %3303 = vmatpush1.msra.mxu0 0.0
    %3304 = vmatprep.subr.mxu0 0.0
    %v3305 = vand.u32 %v2659, 4294901760
    %3306 = vmatpush1.msra.mxu0 %v3305
    %3307 = vmatprep.subr.mxu0 0.0
    %v3308 = vand.u32 %v2658, 4294901760
    %3309 = vmatpush1.msra.mxu0 %v3308
    %3310 = vmatprep.subr.mxu0 0.0
    %v3311 = vand.u32 %v2657, 4294901760
    %3312 = vmatpush1.msra.mxu0 %v3311
    %3313 = vmatprep.subr.mxu0 0.0
    %v3314 = vand.u32 %v2656, 4294901760
    %3315 = vmatpush1.msra.mxu0 %v3314
    %3316 = vmatprep.subr.mxu0 0.0
    %v3317 = vand.u32 %v2655, 4294901760
    %3318 = vmatpush1.msra.mxu0 %v3317
    %3319 = vmatprep.subr.mxu0 0.0
    %v3320 = vand.u32 %v2654, 4294901760
    %3321 = vmatpush1.msra.mxu0 %v3320
    %3322 = vmatprep.subr.mxu0 0.0
    %v3323 = vand.u32 %v2653, 4294901760
    %3324 = vmatpush1.msra.mxu0 %v3323
    %3325 = vmatprep.subr.mxu0 0.0
    %v3326 = vand.u32 %v2652, 4294901760
    %3327 = vmatpush1.msra.mxu0 %v3326
    %3328 = vmatprep.subr.mxu0 0.0
    %v3329 = vand.u32 %v2651, 4294901760
    %3330 = vmatpush1.msra.mxu0 %v3329
    %3331 = vmatprep.subr.mxu0 0.0
    %v3332 = vand.u32 %v2650, 4294901760
    %3333 = vmatpush1.msra.mxu0 %v3332
    %3334 = vmatprep.subr.mxu0 0.0
    %v3335 = vand.u32 %v2649, 4294901760
    %3336 = vmatpush1.msra.mxu0 %v3335
    %3337 = vmatprep.subr.mxu0 0.0
    %v3338 = vand.u32 %v2648, 4294901760
    %3339 = vmatpush1.msra.mxu0 %v3338
    %3340 = vmatprep.subr.mxu0 0.0
    %3341 = vmatpush2.msra.mxu0 0.0
    %3342 = vmatprep.subr.mxu0 0.0
    %3343 = vmatpush2.msra.mxu0 0.0
    %3344 = vmatprep.subr.mxu0 0.0
    %3345 = vmatpush2.msra.mxu0 0.0
    %3346 = vmatprep.subr.mxu0 0.0
    %3347 = vmatpush2.msra.mxu0 0.0
    %3348 = vmatprep.subr.mxu0 0.0
    %3349 = vmatpush2.msra.mxu0 0.0
    %3350 = vmatprep.subr.mxu0 0.0
    %3351 = vmatpush2.msra.mxu0 0.0
    %3352 = vmatprep.subr.mxu0 0.0
    %3353 = vmatpush2.msra.mxu0 0.0
    %3354 = vmatprep.subr.mxu0 0.0
    %3355 = vmatpush2.msra.mxu0 0.0
    %3356 = vmatprep.subr.mxu0 0.0
    %3357 = vmatpush2.msra.mxu0 0.0
    %3358 = vmatprep.subr.mxu0 0.0
    %3359 = vmatpush2.msra.mxu0 0.0
    %3360 = vmatprep.subr.mxu0 0.0
    %3361 = vmatpush2.msra.mxu0 0.0
    %3362 = vmatprep.subr.mxu0 0.0
    %3363 = vmatpush2.msra.mxu0 0.0
    %3364 = vmatprep.subr.mxu0 0.0
    %3365 = vmatpush2.msra.mxu0 0.0
    %3366 = vmatprep.subr.mxu0 0.0
    %3367 = vmatpush2.msra.mxu0 0.0
    %3368 = vmatprep.subr.mxu0 0.0
    %3369 = vmatpush2.msra.mxu0 0.0
    %3370 = vmatprep.subr.mxu0 0.0
    %3371 = vmatpush2.msra.mxu0 0.0
    %3372 = vmatprep.mubr.f32.mxu0 0.0
    %v3373 = vand.u32 %v2668, 4294901760
    %3374 = vmatmul.mubr.f32.gmra.mxu0 %v3373
    %v3375 = vpop.f32.mrf.mxu0
    %v3376 = vadd.f32 %v3275, %v3375
    %v3377 = vpop.f32.mrf.mxu0
    %3378 = vmatprep.mubr.f32.mxu0 0.0
    %v3379 = vand.u32 %v2671, 4294901760
    %3380 = vmatmul.mubr.f32.gmra.mxu0 %v3379
    %v3381 = vpop.f32.mrf.mxu0
    %v3382 = vadd.f32 %v3281, %v3381
    %v3383 = vpop.f32.mrf.mxu0
    %3384 = vmatprep.mubr.f32.mxu0 0.0
    %v3385 = vand.u32 %v2674, 4294901760
    %3386 = vmatmul.mubr.f32.gmra.mxu0 %v3385
    %v3387 = vpop.f32.mrf.mxu0
    %v3388 = vadd.f32 %v3287, %v3387
    %v3389 = vpop.f32.mrf.mxu0
    %3390 = vmatprep.mubr.f32.mxu0 0.0
    %v3391 = vand.u32 %v2677, 4294901760
    %3392 = vmatmul.mubr.f32.gmra.mxu0 %v3391
    %v3393 = vpop.f32.mrf.mxu0
    %v3394 = vadd.f32 %v3293, %v3393
    %v3395 = vpop.f32.mrf.mxu0
    %3396 = vdwg.mxu0
    %v3397 = vlaneseq
    %v3398 = vshrl.u32 %v3397, 7
    %v3399 = vadd.s32 %v3398, 8
    %v3400 = vadd.s32 %v3398, 16
    %v3401 = vadd.s32 %v3398, 24
    %vm3406 = vcmp.ge.s32.totalorder %v3376, 0
    %vm3407 = vcmp.ge.s32.totalorder %v3382, 0
    %vm3408 = vcmp.ge.s32.totalorder %v3388, 0
    %vm3409 = vcmp.ge.s32.totalorder %v3394, 0
    %v3410 = vxor.u32 %v3376, 2147483647
    %v3411 = vxor.u32 %v3382, 2147483647
    %v3412 = vxor.u32 %v3388, 2147483647
    %v3413 = vxor.u32 %v3394, 2147483647
    %v3414 = vsel %vm3406, %v3376, %v3410
    %v3415 = vsel %vm3407, %v3382, %v3411
    %v3416 = vsel %vm3408, %v3388, %v3412
    %v3417 = vsel %vm3409, %v3394, %v3413
    %v3418 = vand.u32 %v3414, 4294967264
    %v3419 = vand.u32 %v3415, 4294967264
    %v3420 = vand.u32 %v3416, 4294967264
    %v3421 = vand.u32 %v3417, 4294967264
    %v3422 = vsub.s32 31, %v3398
    %v3423 = vsub.s32 31, %v3399
    %v3424 = vsub.s32 31, %v3400
    %v3425 = vsub.s32 31, %v3401
    %v3426 = vor.u32 %v3418, %v3422
    %v3427 = vor.u32 %v3419, %v3423
    %v3428 = vor.u32 %v3420, %v3424
    %v3429 = vor.u32 %v3421, %v3425
    %vm3430 = vcmask 261120
    %v3431 = vsel %vm3430, %v3426, 2147483648
    %v3432 = vsel %vm3430, %v3427, 2147483648
    %v3433 = vsel %vm3430, %v3428, 2147483648
    %v3434 = vsel %vm3430, %v3429, 2147483648
    %vm3435 = vcmp.gt.s32.totalorder %v3431, %v3432
    %v3436 = vsel %vm3435, %v3431, %v3432
    %vm3437 = vcmp.gt.s32.totalorder %v3433, %v3434
    %v3438 = vsel %vm3437, %v3433, %v3434
    %vm3439 = vcmp.gt.s32.totalorder %v3436, %v3438
    %v3440 = vsel %vm3439, %v3436, %v3438
    %v3441 = vrot.slane %v3440, 4
    %vm3442 = vcmp.gt.s32.totalorder %v3440, %v3441
    %v3443 = vsel %vm3442, %v3440, %v3441
    %v3444 = vrot.slane %v3443, 2
    %vm3445 = vcmp.gt.s32.totalorder %v3443, %v3444
    %v3446 = vsel %vm3445, %v3443, %v3444
    %v3447 = vrot.slane %v3446, 1
    %vm3448 = vcmp.gt.s32.totalorder %v3446, %v3447
    %v3449 = vsel %vm3448, %v3446, %v3447
    %vm3450 = vcmp.eq.s32.totalorder %v3426, %v3449
    %vm3451 = vcmp.eq.s32.totalorder %v3427, %v3449
    %vm3452 = vcmp.eq.s32.totalorder %v3428, %v3449
    %vm3453 = vcmp.eq.s32.totalorder %v3429, %v3449
    %v3454 = vsel %vm3450, 2147483648, %v3426
    %v3455 = vsel %vm3451, 2147483648, %v3427
    %v3456 = vsel %vm3452, 2147483648, %v3428
    %v3457 = vsel %vm3453, 2147483648, %v3429
    %v3458 = vsel %vm3430, %v3454, 2147483648
    %v3459 = vsel %vm3430, %v3455, 2147483648
    %v3460 = vsel %vm3430, %v3456, 2147483648
    %v3461 = vsel %vm3430, %v3457, 2147483648
    %vm3462 = vcmp.gt.s32.totalorder %v3458, %v3459
    %v3463 = vsel %vm3462, %v3458, %v3459
    %vm3464 = vcmp.gt.s32.totalorder %v3460, %v3461
    %v3465 = vsel %vm3464, %v3460, %v3461
    %vm3466 = vcmp.gt.s32.totalorder %v3463, %v3465
    %v3467 = vsel %vm3466, %v3463, %v3465
    %v3468 = vrot.slane %v3467, 4
    %vm3469 = vcmp.gt.s32.totalorder %v3467, %v3468
    %v3470 = vsel %vm3469, %v3467, %v3468
    %v3471 = vrot.slane %v3470, 2
    %vm3472 = vcmp.gt.s32.totalorder %v3470, %v3471
    %v3473 = vsel %vm3472, %v3470, %v3471
    %v3474 = vrot.slane %v3473, 1
    %vm3475 = vcmp.gt.s32.totalorder %v3473, %v3474
    %v3476 = vsel %vm3475, %v3473, %v3474
    %vm3477 = vcmp.eq.s32.totalorder %v3454, %v3476
    %vm3478 = vcmp.eq.s32.totalorder %v3455, %v3476
    %vm3479 = vcmp.eq.s32.totalorder %v3456, %v3476
    %vm3480 = vcmp.eq.s32.totalorder %v3457, %v3476
    %v3481 = vsel %vm3477, 2147483648, %v3454
    %v3482 = vsel %vm3478, 2147483648, %v3455
    %v3483 = vsel %vm3479, 2147483648, %v3456
    %v3484 = vsel %vm3480, 2147483648, %v3457
    %v3485 = vsel %vm3430, %v3481, 2147483648
    %v3486 = vsel %vm3430, %v3482, 2147483648
    %v3487 = vsel %vm3430, %v3483, 2147483648
    %v3488 = vsel %vm3430, %v3484, 2147483648
    %vm3489 = vcmp.gt.s32.totalorder %v3485, %v3486
    %v3490 = vsel %vm3489, %v3485, %v3486
    %vm3491 = vcmp.gt.s32.totalorder %v3487, %v3488
    %v3492 = vsel %vm3491, %v3487, %v3488
    %vm3493 = vcmp.gt.s32.totalorder %v3490, %v3492
    %v3494 = vsel %vm3493, %v3490, %v3492
    %v3495 = vrot.slane %v3494, 4
    %vm3496 = vcmp.gt.s32.totalorder %v3494, %v3495
    %v3497 = vsel %vm3496, %v3494, %v3495
    %v3498 = vrot.slane %v3497, 2
    %vm3499 = vcmp.gt.s32.totalorder %v3497, %v3498
    %v3500 = vsel %vm3499, %v3497, %v3498
    %v3501 = vrot.slane %v3500, 1
    %vm3502 = vcmp.gt.s32.totalorder %v3500, %v3501
    %v3503 = vsel %vm3502, %v3500, %v3501
    %vm3504 = vcmp.eq.s32.totalorder %v3481, %v3503
    %vm3505 = vcmp.eq.s32.totalorder %v3482, %v3503
    %vm3506 = vcmp.eq.s32.totalorder %v3483, %v3503
    %vm3507 = vcmp.eq.s32.totalorder %v3484, %v3503
    %v3508 = vsel %vm3504, 2147483648, %v3481
    %v3509 = vsel %vm3505, 2147483648, %v3482
    %v3510 = vsel %vm3506, 2147483648, %v3483
    %v3511 = vsel %vm3507, 2147483648, %v3484
    %v3512 = vsel %vm3430, %v3508, 2147483648
    %v3513 = vsel %vm3430, %v3509, 2147483648
    %v3514 = vsel %vm3430, %v3510, 2147483648
    %v3515 = vsel %vm3430, %v3511, 2147483648
    %vm3516 = vcmp.gt.s32.totalorder %v3512, %v3513
    %v3517 = vsel %vm3516, %v3512, %v3513
    %vm3518 = vcmp.gt.s32.totalorder %v3514, %v3515
    %v3519 = vsel %vm3518, %v3514, %v3515
    %vm3520 = vcmp.gt.s32.totalorder %v3517, %v3519
    %v3521 = vsel %vm3520, %v3517, %v3519
    %v3522 = vrot.slane %v3521, 4
    %vm3523 = vcmp.gt.s32.totalorder %v3521, %v3522
    %v3524 = vsel %vm3523, %v3521, %v3522
    %v3525 = vrot.slane %v3524, 2
    %vm3526 = vcmp.gt.s32.totalorder %v3524, %v3525
    %v3527 = vsel %vm3526, %v3524, %v3525
    %v3528 = vrot.slane %v3527, 1
    %vm3529 = vcmp.gt.s32.totalorder %v3527, %v3528
    %v3530 = vsel %vm3529, %v3527, %v3528
    %3531 = vrot.lane.b32.xlu0 %v3476, 32
    %v3532 = vpop.permute.xlu0 %3531
    %3533 = vrot.lane.b32.xlu0 %v3503, 64
    %v3534 = vpop.permute.xlu0 %3533
    %3535 = vrot.lane.b32.xlu0 %v3530, 96
    %v3536 = vpop.permute.xlu0 %3535
    %v3537 = vsel %vm3430, %v3449, %v3532
    %vm3538 = vcmask 523264
    %v3539 = vsel %vm3538, %v3537, %v3534
    %v3540 = vsel %vm526, %v3539, %v3536
    %v3541 = vand.u32 %v3540, 4294967264
    %vm3542 = vcmp.ge.s32.totalorder %v3541, 0
    %v3543 = vxor.u32 %v3541, 2147483647
    %v3544 = vsel %vm3542, %v3541, %v3543
    %3546 = vst [vmem:[#allocation2] sm:$0x1] %v3544
    // Predicated region
    $region38: #{tpu_custom_call.1} parent=1 // pred_check
      _
    $region39: #{tpu_custom_call.1} parent=1 // pred_check_branch
      %3548 = sbr.rel (0) target = $region41
    $region40: #{tpu_custom_call.1} parent=1 // pred_region
      %s3550 = ssub.s32 16, 16
      %3551 = vsyncadd [#allocation3], %s3550
      %s3553 = sshll.u32 [#allocation2], 4
      %s3554 = int_to_ptr.vmem [resolvable:$true] %s3553
      %3556 = dma.vmem_to_hbm [thread:$0]  %s3554, 16, %s9, [#allocation3]
    $region41: #{tpu_custom_call.1} parent=1 // pred_fallthru
      _
    // Predicated region
    $region42: #{tpu_custom_call.1} parent=1 // pred_check
      _
    $region43: #{tpu_custom_call.1} parent=1 // pred_check_branch
      %3558 = sbr.rel (0) target = $region45
    $region44: #{tpu_custom_call.1} parent=1 // pred_region
      %3559 = dma.done [#allocation3], 16
    $region45: #{tpu_custom_call.1} parent=1 // pred_fallthru
      _
    %3560 = vsyncpa [#allocation3], 1

</llo_original>
